<compile_context>
chip_gen: v7x
topology: tpu7x:2x2x1
jax: 0.10.0
libtpu: 0.0.40
codegen_flags: <defaults>
</compile_context>

<pallas_src>
import jax
import jax.numpy as jnp
from jax import lax
from jax.experimental import pallas as pl
from jax.experimental.pallas import tpu as pltpu


# ----------------------------------------------------------------------------
# Fused per-sample kernel: conv1+pool -> conv2+pool -> fc1 -> fc2 (VMEM only).
# ----------------------------------------------------------------------------
def _fused_cnn_kernel(p1_ref, w1_ref, b1_ref, w2_ref, b2_ref,
                      wfc1_ref, bfc1_ref, wfc2_ref, bfc2_ref,
                      out_ref, s3_ref, acc_ref, flat_ref):
    f32 = jnp.float32
    bf16 = jnp.bfloat16

    # ---- conv1: one (256,16)@(16,32) matmul; the 2x2 pool positions are
    #      folded into the M axis (4 blocks of 64 rows) -> 4-way row-block max.
    y1 = jnp.dot(p1_ref[0], w1_ref[...], preferred_element_type=f32)     # (256,32)
    m1 = jnp.maximum(jnp.maximum(y1[0:64], y1[64:128]),
                     jnp.maximum(y1[128:192], y1[192:256]))
    a1 = jnp.maximum(m1 + b1_ref[...], 0.0)                              # (64,32), rows=(h,w) of 8x8

    # ---- conv2: store three row-shifted copies of a1 (one per kx) into a flat
    #      zero-padded scratch, then 3 accumulating (64,96)@(96,64) matmuls
    #      (one per ky).  Vertical (h) boundaries are handled by the zero rows;
    #      horizontal (w) boundaries by a single hoisted lane mask.
    s3_ref[...] = jnp.zeros(s3_ref.shape, s3_ref.dtype)
    for dx in (-1, 0, 1):
        # a1[j] lands at row (16 - dx + j) of lane block kx = dx + 1.
        s3_ref[16 - dx:80 - dx, 32 * (dx + 1):32 * (dx + 2)] = a1

    lane = lax.broadcasted_iota(jnp.int32, (64, 96), 1)
    wcol = lax.broadcasted_iota(jnp.int32, (64, 96), 0) % 8
    valid = jnp.logical_not(((lane < 32) & (wcol == 0)) |      # kx=0 invalid at w==0
                            ((lane >= 64) & (wcol == 7)))      # kx=2 invalid at w==7

    acc_ref[...] = jnp.zeros(acc_ref.shape, acc_ref.dtype)
    for ky in range(3):
        dy = ky - 1
        trip = s3_ref[16 + 8 * dy:80 + 8 * dy, :]                         # (64,96)
        trip = jnp.where(valid, trip, 0.0).astype(bf16)
        acc_ref[...] += jnp.dot(trip, w2_ref[ky], preferred_element_type=f32)

    # ---- 2x2 max pool of conv2 (pool before bias+ReLU: both are monotone),
    #      written directly as a lane-dense (1,1024) row for fc1.
    for ph in range(4):
        blk = jnp.maximum(acc_ref[16 * ph:16 * ph + 8, :],
                          acc_ref[16 * ph + 8:16 * ph + 16, :])           # (8,64): max over h pair
        for pw in range(4):
            row = jnp.maximum(blk[2 * pw:2 * pw + 1, :],
                              blk[2 * pw + 1:2 * pw + 2, :])              # (1,64): max over w pair
            row = jnp.maximum(row + b2_ref[...], 0.0).astype(bf16)
            s = 4 * ph + pw
            flat_ref[0:1, 64 * s:64 * s + 64] = row

    # ---- fc1 (direct K=1024 matmul) + ReLU, then fc2 (output lane-padded to 128).
    h1 = jnp.dot(flat_ref[...], wfc1_ref[...], preferred_element_type=f32)   # (1,128)
    h1 = jnp.maximum(h1 + bfc1_ref[...], 0.0)
    logits = jnp.dot(h1.astype(bf16), wfc2_ref[...], preferred_element_type=f32)
    out_ref[0] = (logits + bfc2_ref[...]).astype(out_ref.dtype)


# ----------------------------------------------------------------------------
# Wrapper-side layout plumbing (input im2col + static weight permutations only).
# ----------------------------------------------------------------------------
def _conv1_pool_patches(x):
    """x: (B,1,16,16) -> (B, 4*64, 16) bf16 im2col for conv1 (3x3, pad=1) with
    the 4 positions of each 2x2 pool window folded into the row axis
    (pool-position major); the 9 taps are zero-padded to 16 lanes."""
    B = x.shape[0]
    xp = jnp.pad(x[:, 0], ((0, 0), (1, 1), (1, 1)))                  # (B,18,18)
    taps = [xp[:, ky:ky + 16, kx:kx + 16] for ky in range(3) for kx in range(3)]
    t = jnp.stack(taps, axis=-1)                                     # (B,16,16,9)
    t = t.reshape(B, 8, 2, 8, 2, 9)                                  # (b,ph,py,pw,px,tap)
    t = t.transpose(0, 2, 4, 1, 3, 5)                                # (b,py,px,ph,pw,tap)
    t = t.reshape(B, 256, 9)
    t = jnp.pad(t, ((0, 0), (0, 0), (0, 7)))                         # taps 9 -> 16 lanes
    return t.astype(jnp.bfloat16)


def basic_cnn_forward(x, params):
    B, c_in, H, W = x.shape
    assert (c_in, H, W) == (1, 16, 16), "kernel is specialized to 1x16x16 inputs"
    n_classes = params["fc2_b"].shape[0]
    assert n_classes <= 128

    p1 = _conv1_pool_patches(x)                                               # (B,256,16) bf16
    w1 = jnp.pad(params["conv1_w"].reshape(32, 9).T,
                 ((0, 7), (0, 0))).astype(jnp.bfloat16)                       # (16,32)
    b1 = params["conv1_b"].reshape(1, 32).astype(jnp.float32)
    # w2[ky, kx*32 + cin, cout] = conv2_w[cout, cin, ky, kx]
    w2 = params["conv2_w"].transpose(2, 3, 1, 0).reshape(3, 96, 64).astype(jnp.bfloat16)
    b2 = params["conv2_b"].reshape(1, 64).astype(jnp.float32)
    # PyTorch NCHW flatten index = c*16 + s (s = ph*4 + pw).  Kernel's flat
    # feature order is s*64 + c, so permute: wfc1[s*64 + c, f] = fc1_w[f, c*16 + s].
    wfc1 = params["fc1_w"].reshape(128, 64, 16).transpose(2, 1, 0).reshape(1024, 128)
    wfc1 = wfc1.astype(jnp.bfloat16)
    bfc1 = params["fc1_b"].reshape(1, 128).astype(jnp.float32)
    wfc2 = jnp.zeros((128, 128), jnp.float32).at[:, :n_classes].set(params["fc2_w"].T)
    wfc2 = wfc2.astype(jnp.bfloat16)                                          # (128,128) lane-padded
    bfc2 = jnp.zeros((1, 128), jnp.float32).at[0, :n_classes].set(params["fc2_b"])

    flops = B * (2 * 256 * 16 * 32            # conv1
                 + 3 * 2 * 64 * 96 * 64       # conv2 (3 deepened-K taps)
                 + 2 * 1024 * 128             # fc1
                 + 2 * 128 * 128)             # fc2
    bytes_accessed = (p1.size * 2 + w1.size * 2 + w2.size * 2
                      + wfc1.size * 2 + wfc2.size * 2
                      + (b1.size + b2.size + bfc1.size + bfc2.size) * 4
                      + B * 128 * 4)

    out = pl.pallas_call(
        _fused_cnn_kernel,
        out_shape=jax.ShapeDtypeStruct((B, 1, 128), jnp.float32),
        grid=(B,),
        in_specs=[
            pl.BlockSpec((1, 256, 16), lambda b: (b, 0, 0)),   # per-sample patches
            pl.BlockSpec((16, 32), lambda b: (0, 0)),          # conv1 w (resident)
            pl.BlockSpec((1, 32), lambda b: (0, 0)),           # conv1 b
            pl.BlockSpec((3, 96, 64), lambda b: (0, 0, 0)),    # conv2 w
            pl.BlockSpec((1, 64), lambda b: (0, 0)),           # conv2 b
            pl.BlockSpec((1024, 128), lambda b: (0, 0)),       # fc1 w
            pl.BlockSpec((1, 128), lambda b: (0, 0)),          # fc1 b
            pl.BlockSpec((128, 128), lambda b: (0, 0)),        # fc2 w (lane-padded)
            pl.BlockSpec((1, 128), lambda b: (0, 0)),          # fc2 b (lane-padded)
        ],
        out_specs=pl.BlockSpec((1, 1, 128), lambda b: (b, 0, 0)),
        scratch_shapes=[
            pltpu.VMEM((96, 96), jnp.float32),    # shifted conv2 input copies
            pltpu.VMEM((64, 64), jnp.float32),    # conv2 accumulator
            pltpu.VMEM((1, 1024), jnp.bfloat16),  # flattened pooled activation
        ],
        compiler_params=pltpu.CompilerParams(
            dimension_semantics=("parallel",)),
        cost_estimate=pl.CostEstimate(flops=flops, transcendentals=0,
                                      bytes_accessed=bytes_accessed),
    )(p1, w1, b1, w2, b2, wfc1, bfc1, wfc2, bfc2)

    return out[:, 0, :n_classes]


# ----------------------------------------------------------------------------
# Pure-JAX reference (independent path: lax.conv + reduce_window), f32.
# ----------------------------------------------------------------------------
def reference_forward(x, params):
    def conv2d(inp, w, b):
        y = lax.conv_general_dilated(
            inp, w, window_strides=(1, 1), padding=((1, 1), (1, 1)),
            dimension_numbers=("NCHW", "OIHW", "NCHW"))
        return y + b[None, :, None, None]

    def maxpool(inp):
        return lax.reduce_window(inp, -jnp.inf, lax.max,
                                 (1, 1, 2, 2), (1, 1, 2, 2), "VALID")

    y = maxpool(jnp.maximum(conv2d(x, params["conv1_w"], params["conv1_b"]), 0.0))
    y = maxpool(jnp.maximum(conv2d(y, params["conv2_w"], params["conv2_b"]), 0.0))
    y = y.reshape(x.shape[0], -1)
    y = jnp.maximum(y @ params["fc1_w"].T + params["fc1_b"], 0.0)
    return y @ params["fc2_w"].T + params["fc2_b"]


# ----------------------------------------------------------------------------
# Main
# ----------------------------------------------------------------------------
if __name__ == "__main__":
    # BasicCNN(input_shape=(16, 16), n_classes=10, input_channels=1)
    B, C_in, H, W = 2, 1, 16, 16
    n_classes = 10
    flattened_size = 64 * (H // 4) * (W // 4)   # = 1024

    key = jax.random.PRNGKey(0)
    ks = jax.random.split(key, 9)
    params = {
        "conv1_w": jax.random.normal(ks[0], (32, C_in, 3, 3), jnp.float32) * 0.1,
        "conv1_b": jax.random.normal(ks[1], (32,), jnp.float32) * 0.1,
        "conv2_w": jax.random.normal(ks[2], (64, 32, 3, 3), jnp.float32) * 0.05,
        "conv2_b": jax.random.normal(ks[3], (64,), jnp.float32) * 0.1,
        "fc1_w": jax.random.normal(ks[4], (128, flattened_size), jnp.float32) * 0.02,
        "fc1_b": jax.random.normal(ks[5], (128,), jnp.float32) * 0.1,
        "fc2_w": jax.random.normal(ks[6], (n_classes, 128), jnp.float32) * 0.05,
        "fc2_b": jax.random.normal(ks[7], (n_classes,), jnp.float32) * 0.1,
    }
    x = jax.random.normal(ks[8], (B, C_in, H, W), jnp.float32)

    fwd = jax.jit(basic_cnn_forward)
    logits = fwd(x, params)
    jax.block_until_ready(logits)

    ref = reference_forward(x, params)
    assert logits.shape == (B, n_classes)
    err = float(jnp.max(jnp.abs(logits - ref)))
    # bf16 matmul operands with f32 accumulation -> compare at bf16-level tolerance.
    assert jnp.allclose(logits, ref, atol=2e-2, rtol=2e-2), f"max abs err {err}"

    print("KERNEL_OK")
</pallas_src>

<mosaic_0001>
module attributes {stable_mosaic.version = 11 : i64} {
  func.func @_fused_cnn_kernel(%arg0: i32, %arg1: memref<1x256x16xbf16, #tpu.memory_space<vmem>>, %arg2: memref<16x32xbf16, #tpu.memory_space<vmem>>, %arg3: memref<1x32xf32, #tpu.memory_space<vmem>>, %arg4: memref<3x96x64xbf16, #tpu.memory_space<vmem>>, %arg5: memref<1x64xf32, #tpu.memory_space<vmem>>, %arg6: memref<1024x128xbf16, #tpu.memory_space<vmem>>, %arg7: memref<1x128xf32, #tpu.memory_space<vmem>>, %arg8: memref<128x128xbf16, #tpu.memory_space<vmem>>, %arg9: memref<1x128xf32, #tpu.memory_space<vmem>>, %arg10: memref<1x1x128xf32, #tpu.memory_space<vmem>>, %arg11: memref<96x96xf32, #tpu.memory_space<vmem>>, %arg12: memref<64x64xf32, #tpu.memory_space<vmem>>, %arg13: memref<1x1024xbf16, #tpu.memory_space<vmem>>) attributes {dimension_semantics = [#tpu.dimension_semantics<parallel>], iteration_bounds = array<i64: 2>, scalar_prefetch = 0 : i64, scratch_operands = 3 : i64, tpu.core_type = #tpu.core_type<tc>, window_params = [{transform_indices = @transform_0, window_bounds = array<i64: 1, 256, 16>}, {pipeline_mode = #tpu.pipeline_mode<synchronous>, transform_indices = @transform_1, window_bounds = array<i64: 16, 32>}, {pipeline_mode = #tpu.pipeline_mode<synchronous>, transform_indices = @transform_2, window_bounds = array<i64: 1, 32>}, {pipeline_mode = #tpu.pipeline_mode<synchronous>, transform_indices = @transform_3, window_bounds = array<i64: 3, 96, 64>}, {pipeline_mode = #tpu.pipeline_mode<synchronous>, transform_indices = @transform_4, window_bounds = array<i64: 1, 64>}, {pipeline_mode = #tpu.pipeline_mode<synchronous>, transform_indices = @transform_5, window_bounds = array<i64: 1024, 128>}, {pipeline_mode = #tpu.pipeline_mode<synchronous>, transform_indices = @transform_6, window_bounds = array<i64: 1, 128>}, {pipeline_mode = #tpu.pipeline_mode<synchronous>, transform_indices = @transform_7, window_bounds = array<i64: 128, 128>}, {pipeline_mode = #tpu.pipeline_mode<synchronous>, transform_indices = @transform_8, window_bounds = array<i64: 1, 128>}, {transform_indices = @transform_9, window_bounds = array<i64: 1, 1, 128>}]} {
    %c0 = arith.constant 0 : index
    %c0_0 = arith.constant 0 : index
    %c0_1 = arith.constant 0 : index
    %0 = vector.load %arg1[%c0, %c0_0, %c0_1] : memref<1x256x16xbf16, #tpu.memory_space<vmem>>, vector<1x256x16xbf16>
    %1 = vector.shape_cast %0 : vector<1x256x16xbf16> to vector<256x16xbf16>
    %c0_2 = arith.constant 0 : index
    %c0_3 = arith.constant 0 : index
    %2 = vector.load %arg2[%c0_2, %c0_3] : memref<16x32xbf16, #tpu.memory_space<vmem>>, vector<16x32xbf16>
    %cst = arith.constant dense<0.000000e+00> : vector<256x32xf32>
    %3 = tpu.matmul %1, %2, %cst {dimension_numbers = #tpu.dot_dimension_numbers<[1], [0], [0], [1], [0, 0, 1, 1], [], []>} : vector<256x16xbf16>, vector<16x32xbf16>, vector<256x32xf32> -> vector<256x32xf32>
    %4 = vector.extract_strided_slice %3 {offsets = [0, 0], sizes = [64, 32], strides = [1, 1]} : vector<256x32xf32> to vector<64x32xf32>
    %5 = vector.extract_strided_slice %3 {offsets = [64, 0], sizes = [64, 32], strides = [1, 1]} : vector<256x32xf32> to vector<64x32xf32>
    %6 = arith.maximumf %4, %5 : vector<64x32xf32>
    %7 = vector.extract_strided_slice %3 {offsets = [128, 0], sizes = [64, 32], strides = [1, 1]} : vector<256x32xf32> to vector<64x32xf32>
    %8 = vector.extract_strided_slice %3 {offsets = [192, 0], sizes = [64, 32], strides = [1, 1]} : vector<256x32xf32> to vector<64x32xf32>
    %9 = arith.maximumf %7, %8 : vector<64x32xf32>
    %10 = arith.maximumf %6, %9 : vector<64x32xf32>
    %c0_4 = arith.constant 0 : index
    %c0_5 = arith.constant 0 : index
    %11 = vector.load %arg3[%c0_4, %c0_5] : memref<1x32xf32, #tpu.memory_space<vmem>>, vector<1x32xf32>
    %12 = vector.broadcast %11 : vector<1x32xf32> to vector<64x32xf32>
    %13 = arith.addf %10, %12 : vector<64x32xf32>
    %cst_6 = arith.constant 0.000000e+00 : f32
    %14 = vector.broadcast %cst_6 : f32 to vector<64x32xf32>
    %15 = arith.maximumf %13, %14 : vector<64x32xf32>
    %cst_7 = arith.constant 0.000000e+00 : f32
    %16 = vector.broadcast %cst_7 : f32 to vector<96x96xf32>
    %c0_8 = arith.constant 0 : index
    %c0_9 = arith.constant 0 : index
    %17 = vector.load %arg11[%c0_8, %c0_9] : memref<96x96xf32, #tpu.memory_space<vmem>>, vector<96x96xf32>
    tpu.vector_store %arg11[%c0_8, %c0_9], %16 {strides = array<i32>} : memref<96x96xf32, #tpu.memory_space<vmem>>, vector<96x96xf32>,
    %c17 = arith.constant 17 : index
    %c0_10 = arith.constant 0 : index
    %18 = vector.load %arg11[%c17, %c0_10] : memref<96x96xf32, #tpu.memory_space<vmem>>, vector<64x32xf32>
    tpu.vector_store %arg11[%c17, %c0_10], %15 {strides = array<i32>} : memref<96x96xf32, #tpu.memory_space<vmem>>, vector<64x32xf32>,
    %c16 = arith.constant 16 : index
    %c32 = arith.constant 32 : index
    %19 = vector.load %arg11[%c16, %c32] : memref<96x96xf32, #tpu.memory_space<vmem>>, vector<64x32xf32>
    tpu.vector_store %arg11[%c16, %c32], %15 {strides = array<i32>} : memref<96x96xf32, #tpu.memory_space<vmem>>, vector<64x32xf32>,
    %c15 = arith.constant 15 : index
    %c64 = arith.constant 64 : index
    %20 = vector.load %arg11[%c15, %c64] : memref<96x96xf32, #tpu.memory_space<vmem>>, vector<64x32xf32>
    tpu.vector_store %arg11[%c15, %c64], %15 {strides = array<i32>} : memref<96x96xf32, #tpu.memory_space<vmem>>, vector<64x32xf32>,
    %21 = tpu.iota {dimensions = array<i32: 1>} : vector<64x96xi32>
    %22 = tpu.iota {dimensions = array<i32: 0>} : vector<64x96xi32>
    %c8_i32 = arith.constant 8 : i32
    %c0_i32 = arith.constant 0 : i32
    %23 = arith.cmpi eq, %c8_i32, %c0_i32 : i32
    %c1_i32 = arith.constant 1 : i32
    %24 = arith.select %23, %c1_i32, %c8_i32 : i32
    %25 = vector.broadcast %24 : i32 to vector<64x96xi32>
    %26 = arith.remsi %22, %25 : vector<64x96xi32>
    %c0_i32_11 = arith.constant 0 : i32
    %27 = vector.broadcast %c0_i32_11 : i32 to vector<64x96xi32>
    %28 = arith.cmpi ne, %26, %27 : vector<64x96xi32>
    %c0_i32_12 = arith.constant 0 : i32
    %29 = vector.broadcast %c0_i32_12 : i32 to vector<64x96xi32>
    %30 = arith.cmpi slt, %26, %29 : vector<64x96xi32>
    %c0_i32_13 = arith.constant 0 : i32
    %31 = arith.cmpi slt, %24, %c0_i32_13 : i32
    %32 = vector.broadcast %31 : i1 to vector<64x96xi1>
    %33 = vector.broadcast %32 : vector<64x96xi1> to vector<64x96xi1>
    %34 = arith.xori %30, %33 : vector<64x96xi1>
    %35 = arith.andi %34, %28 : vector<64x96xi1>
    %36 = vector.broadcast %24 : i32 to vector<64x96xi32>
    %37 = arith.addi %26, %36 : vector<64x96xi32>
    %38 = arith.select %35, %37, %26 : vector<64x96xi1>, vector<64x96xi32>
    %c32_i32 = arith.constant 32 : i32
    %39 = vector.broadcast %c32_i32 : i32 to vector<64x96xi32>
    %40 = arith.cmpi slt, %21, %39 : vector<64x96xi32>
    %c0_i32_14 = arith.constant 0 : i32
    %41 = vector.broadcast %c0_i32_14 : i32 to vector<64x96xi32>
    %42 = arith.cmpi eq, %38, %41 : vector<64x96xi32>
    %43 = arith.andi %40, %42 : vector<64x96xi1>
    %c64_i32 = arith.constant 64 : i32
    %44 = vector.broadcast %c64_i32 : i32 to vector<64x96xi32>
    %45 = arith.cmpi sge, %21, %44 : vector<64x96xi32>
    %c7_i32 = arith.constant 7 : i32
    %46 = vector.broadcast %c7_i32 : i32 to vector<64x96xi32>
    %47 = arith.cmpi eq, %38, %46 : vector<64x96xi32>
    %48 = arith.andi %45, %47 : vector<64x96xi1>
    %49 = arith.ori %43, %48 : vector<64x96xi1>
    %cst_15 = arith.constant dense<true> : vector<64x96xi1>
    %50 = arith.xori %49, %cst_15 : vector<64x96xi1>
    %cst_16 = arith.constant 0.000000e+00 : f32
    %51 = vector.broadcast %cst_16 : f32 to vector<64x64xf32>
    %c0_17 = arith.constant 0 : index
    %c0_18 = arith.constant 0 : index
    %52 = vector.load %arg12[%c0_17, %c0_18] : memref<64x64xf32, #tpu.memory_space<vmem>>, vector<64x64xf32>
    tpu.vector_store %arg12[%c0_17, %c0_18], %51 {strides = array<i32>} : memref<64x64xf32, #tpu.memory_space<vmem>>, vector<64x64xf32>,
    %c8 = arith.constant 8 : index
    %c0_19 = arith.constant 0 : index
    %53 = vector.load %arg11[%c8, %c0_19] : memref<96x96xf32, #tpu.memory_space<vmem>>, vector<64x96xf32>
    %cst_20 = arith.constant 0.000000e+00 : f32
    %54 = vector.broadcast %cst_20 : f32 to vector<64x96xf32>
    %55 = arith.select %50, %53, %54 : vector<64x96xi1>, vector<64x96xf32>
    %56 = arith.truncf %55 : vector<64x96xf32> to vector<64x96xbf16>
    %c0_21 = arith.constant 0 : index
    %c0_22 = arith.constant 0 : index
    %57 = vector.load %arg12[%c0_21, %c0_22] : memref<64x64xf32, #tpu.memory_space<vmem>>, vector<64x64xf32>
    %c0_23 = arith.constant 0 : index
    %c0_24 = arith.constant 0 : index
    %c0_25 = arith.constant 0 : index
    %58 = vector.load %arg4[%c0_23, %c0_24, %c0_25] : memref<3x96x64xbf16, #tpu.memory_space<vmem>>, vector<1x96x64xbf16>
    %59 = vector.shape_cast %58 : vector<1x96x64xbf16> to vector<96x64xbf16>
    %cst_26 = arith.constant dense<0.000000e+00> : vector<64x64xf32>
    %60 = tpu.matmul %56, %59, %cst_26 {dimension_numbers = #tpu.dot_dimension_numbers<[1], [0], [0], [1], [0, 0, 1, 1], [], []>} : vector<64x96xbf16>, vector<96x64xbf16>, vector<64x64xf32> -> vector<64x64xf32>
    %61 = arith.addf %57, %60 : vector<64x64xf32>
    %c0_27 = arith.constant 0 : index
    %c0_28 = arith.constant 0 : index
    %62 = vector.load %arg12[%c0_27, %c0_28] : memref<64x64xf32, #tpu.memory_space<vmem>>, vector<64x64xf32>
    tpu.vector_store %arg12[%c0_27, %c0_28], %61 {strides = array<i32>} : memref<64x64xf32, #tpu.memory_space<vmem>>, vector<64x64xf32>,
    %c16_29 = arith.constant 16 : index
    %c0_30 = arith.constant 0 : index
    %63 = vector.load %arg11[%c16_29, %c0_30] : memref<96x96xf32, #tpu.memory_space<vmem>>, vector<64x96xf32>
    %cst_31 = arith.constant 0.000000e+00 : f32
    %64 = vector.broadcast %cst_31 : f32 to vector<64x96xf32>
    %65 = arith.select %50, %63, %64 : vector<64x96xi1>, vector<64x96xf32>
    %66 = arith.truncf %65 : vector<64x96xf32> to vector<64x96xbf16>
    %c0_32 = arith.constant 0 : index
    %c0_33 = arith.constant 0 : index
    %67 = vector.load %arg12[%c0_32, %c0_33] : memref<64x64xf32, #tpu.memory_space<vmem>>, vector<64x64xf32>
    %c1 = arith.constant 1 : index
    %c0_34 = arith.constant 0 : index
    %c0_35 = arith.constant 0 : index
    %68 = vector.load %arg4[%c1, %c0_34, %c0_35] : memref<3x96x64xbf16, #tpu.memory_space<vmem>>, vector<1x96x64xbf16>
    %69 = vector.shape_cast %68 : vector<1x96x64xbf16> to vector<96x64xbf16>
    %cst_36 = arith.constant dense<0.000000e+00> : vector<64x64xf32>
    %70 = tpu.matmul %66, %69, %cst_36 {dimension_numbers = #tpu.dot_dimension_numbers<[1], [0], [0], [1], [0, 0, 1, 1], [], []>} : vector<64x96xbf16>, vector<96x64xbf16>, vector<64x64xf32> -> vector<64x64xf32>
    %71 = arith.addf %67, %70 : vector<64x64xf32>
    %c0_37 = arith.constant 0 : index
    %c0_38 = arith.constant 0 : index
    %72 = vector.load %arg12[%c0_37, %c0_38] : memref<64x64xf32, #tpu.memory_space<vmem>>, vector<64x64xf32>
    tpu.vector_store %arg12[%c0_37, %c0_38], %71 {strides = array<i32>} : memref<64x64xf32, #tpu.memory_space<vmem>>, vector<64x64xf32>,
    %c24 = arith.constant 24 : index
    %c0_39 = arith.constant 0 : index
    %73 = vector.load %arg11[%c24, %c0_39] : memref<96x96xf32, #tpu.memory_space<vmem>>, vector<64x96xf32>
    %cst_40 = arith.constant 0.000000e+00 : f32
    %74 = vector.broadcast %cst_40 : f32 to vector<64x96xf32>
    %75 = arith.select %50, %73, %74 : vector<64x96xi1>, vector<64x96xf32>
    %76 = arith.truncf %75 : vector<64x96xf32> to vector<64x96xbf16>
    %c0_41 = arith.constant 0 : index
    %c0_42 = arith.constant 0 : index
    %77 = vector.load %arg12[%c0_41, %c0_42] : memref<64x64xf32, #tpu.memory_space<vmem>>, vector<64x64xf32>
    %c2 = arith.constant 2 : index
    %c0_43 = arith.constant 0 : index
    %c0_44 = arith.constant 0 : index
    %78 = vector.load %arg4[%c2, %c0_43, %c0_44] : memref<3x96x64xbf16, #tpu.memory_space<vmem>>, vector<1x96x64xbf16>
    %79 = vector.shape_cast %78 : vector<1x96x64xbf16> to vector<96x64xbf16>
    %cst_45 = arith.constant dense<0.000000e+00> : vector<64x64xf32>
    %80 = tpu.matmul %76, %79, %cst_45 {dimension_numbers = #tpu.dot_dimension_numbers<[1], [0], [0], [1], [0, 0, 1, 1], [], []>} : vector<64x96xbf16>, vector<96x64xbf16>, vector<64x64xf32> -> vector<64x64xf32>
    %81 = arith.addf %77, %80 : vector<64x64xf32>
    %c0_46 = arith.constant 0 : index
    %c0_47 = arith.constant 0 : index
    %82 = vector.load %arg12[%c0_46, %c0_47] : memref<64x64xf32, #tpu.memory_space<vmem>>, vector<64x64xf32>
    tpu.vector_store %arg12[%c0_46, %c0_47], %81 {strides = array<i32>} : memref<64x64xf32, #tpu.memory_space<vmem>>, vector<64x64xf32>,
    %c0_48 = arith.constant 0 : index
    %c0_49 = arith.constant 0 : index
    %83 = vector.load %arg12[%c0_48, %c0_49] : memref<64x64xf32, #tpu.memory_space<vmem>>, vector<8x64xf32>
    %c8_50 = arith.constant 8 : index
    %c0_51 = arith.constant 0 : index
    %84 = vector.load %arg12[%c8_50, %c0_51] : memref<64x64xf32, #tpu.memory_space<vmem>>, vector<8x64xf32>
    %85 = arith.maximumf %83, %84 : vector<8x64xf32>
    %86 = vector.extract_strided_slice %85 {offsets = [0, 0], sizes = [1, 64], strides = [1, 1]} : vector<8x64xf32> to vector<1x64xf32>
    %87 = vector.extract_strided_slice %85 {offsets = [1, 0], sizes = [1, 64], strides = [1, 1]} : vector<8x64xf32> to vector<1x64xf32>
    %88 = arith.maximumf %86, %87 : vector<1x64xf32>
    %c0_52 = arith.constant 0 : index
    %c0_53 = arith.constant 0 : index
    %89 = vector.load %arg5[%c0_52, %c0_53] : memref<1x64xf32, #tpu.memory_space<vmem>>, vector<1x64xf32>
    %90 = arith.addf %88, %89 : vector<1x64xf32>
    %cst_54 = arith.constant 0.000000e+00 : f32
    %91 = vector.broadcast %cst_54 : f32 to vector<1x64xf32>
    %92 = arith.maximumf %90, %91 : vector<1x64xf32>
    %93 = arith.truncf %92 : vector<1x64xf32> to vector<1x64xbf16>
    %c0_55 = arith.constant 0 : index
    %c0_56 = arith.constant 0 : index
    %94 = vector.load %arg13[%c0_55, %c0_56] : memref<1x1024xbf16, #tpu.memory_space<vmem>>, vector<1x64xbf16>
    tpu.vector_store %arg13[%c0_55, %c0_56], %93 {strides = array<i32>} : memref<1x1024xbf16, #tpu.memory_space<vmem>>, vector<1x64xbf16>,
    %95 = vector.extract_strided_slice %85 {offsets = [2, 0], sizes = [1, 64], strides = [1, 1]} : vector<8x64xf32> to vector<1x64xf32>
    %96 = vector.extract_strided_slice %85 {offsets = [3, 0], sizes = [1, 64], strides = [1, 1]} : vector<8x64xf32> to vector<1x64xf32>
    %97 = arith.maximumf %95, %96 : vector<1x64xf32>
    %c0_57 = arith.constant 0 : index
    %c0_58 = arith.constant 0 : index
    %98 = vector.load %arg5[%c0_57, %c0_58] : memref<1x64xf32, #tpu.memory_space<vmem>>, vector<1x64xf32>
    %99 = arith.addf %97, %98 : vector<1x64xf32>
    %cst_59 = arith.constant 0.000000e+00 : f32
    %100 = vector.broadcast %cst_59 : f32 to vector<1x64xf32>
    %101 = arith.maximumf %99, %100 : vector<1x64xf32>
    %102 = arith.truncf %101 : vector<1x64xf32> to vector<1x64xbf16>
    %c0_60 = arith.constant 0 : index
    %c64_61 = arith.constant 64 : index
    %103 = vector.load %arg13[%c0_60, %c64_61] : memref<1x1024xbf16, #tpu.memory_space<vmem>>, vector<1x64xbf16>
    tpu.vector_store %arg13[%c0_60, %c64_61], %102 {strides = array<i32>} : memref<1x1024xbf16, #tpu.memory_space<vmem>>, vector<1x64xbf16>,
    %104 = vector.extract_strided_slice %85 {offsets = [4, 0], sizes = [1, 64], strides = [1, 1]} : vector<8x64xf32> to vector<1x64xf32>
    %105 = vector.extract_strided_slice %85 {offsets = [5, 0], sizes = [1, 64], strides = [1, 1]} : vector<8x64xf32> to vector<1x64xf32>
    %106 = arith.maximumf %104, %105 : vector<1x64xf32>
    %c0_62 = arith.constant 0 : index
    %c0_63 = arith.constant 0 : index
    %107 = vector.load %arg5[%c0_62, %c0_63] : memref<1x64xf32, #tpu.memory_space<vmem>>, vector<1x64xf32>
    %108 = arith.addf %106, %107 : vector<1x64xf32>
    %cst_64 = arith.constant 0.000000e+00 : f32
    %109 = vector.broadcast %cst_64 : f32 to vector<1x64xf32>
    %110 = arith.maximumf %108, %109 : vector<1x64xf32>
    %111 = arith.truncf %110 : vector<1x64xf32> to vector<1x64xbf16>
    %c0_65 = arith.constant 0 : index
    %c128 = arith.constant 128 : index
    %112 = vector.load %arg13[%c0_65, %c128] : memref<1x1024xbf16, #tpu.memory_space<vmem>>, vector<1x64xbf16>
    tpu.vector_store %arg13[%c0_65, %c128], %111 {strides = array<i32>} : memref<1x1024xbf16, #tpu.memory_space<vmem>>, vector<1x64xbf16>,
    %113 = vector.extract_strided_slice %85 {offsets = [6, 0], sizes = [1, 64], strides = [1, 1]} : vector<8x64xf32> to vector<1x64xf32>
    %114 = vector.extract_strided_slice %85 {offsets = [7, 0], sizes = [1, 64], strides = [1, 1]} : vector<8x64xf32> to vector<1x64xf32>
    %115 = arith.maximumf %113, %114 : vector<1x64xf32>
    %c0_66 = arith.constant 0 : index
    %c0_67 = arith.constant 0 : index
    %116 = vector.load %arg5[%c0_66, %c0_67] : memref<1x64xf32, #tpu.memory_space<vmem>>, vector<1x64xf32>
    %117 = arith.addf %115, %116 : vector<1x64xf32>
    %cst_68 = arith.constant 0.000000e+00 : f32
    %118 = vector.broadcast %cst_68 : f32 to vector<1x64xf32>
    %119 = arith.maximumf %117, %118 : vector<1x64xf32>
    %120 = arith.truncf %119 : vector<1x64xf32> to vector<1x64xbf16>
    %c0_69 = arith.constant 0 : index
    %c192 = arith.constant 192 : index
    %121 = vector.load %arg13[%c0_69, %c192] : memref<1x1024xbf16, #tpu.memory_space<vmem>>, vector<1x64xbf16>
    tpu.vector_store %arg13[%c0_69, %c192], %120 {strides = array<i32>} : memref<1x1024xbf16, #tpu.memory_space<vmem>>, vector<1x64xbf16>,
    %c16_70 = arith.constant 16 : index
    %c0_71 = arith.constant 0 : index
    %122 = vector.load %arg12[%c16_70, %c0_71] : memref<64x64xf32, #tpu.memory_space<vmem>>, vector<8x64xf32>
    %c24_72 = arith.constant 24 : index
    %c0_73 = arith.constant 0 : index
    %123 = vector.load %arg12[%c24_72, %c0_73] : memref<64x64xf32, #tpu.memory_space<vmem>>, vector<8x64xf32>
    %124 = arith.maximumf %122, %123 : vector<8x64xf32>
    %125 = vector.extract_strided_slice %124 {offsets = [0, 0], sizes = [1, 64], strides = [1, 1]} : vector<8x64xf32> to vector<1x64xf32>
    %126 = vector.extract_strided_slice %124 {offsets = [1, 0], sizes = [1, 64], strides = [1, 1]} : vector<8x64xf32> to vector<1x64xf32>
    %127 = arith.maximumf %125, %126 : vector<1x64xf32>
    %c0_74 = arith.constant 0 : index
    %c0_75 = arith.constant 0 : index
    %128 = vector.load %arg5[%c0_74, %c0_75] : memref<1x64xf32, #tpu.memory_space<vmem>>, vector<1x64xf32>
    %129 = arith.addf %127, %128 : vector<1x64xf32>
    %cst_76 = arith.constant 0.000000e+00 : f32
    %130 = vector.broadcast %cst_76 : f32 to vector<1x64xf32>
    %131 = arith.maximumf %129, %130 : vector<1x64xf32>
    %132 = arith.truncf %131 : vector<1x64xf32> to vector<1x64xbf16>
    %c0_77 = arith.constant 0 : index
    %c256 = arith.constant 256 : index
    %133 = vector.load %arg13[%c0_77, %c256] : memref<1x1024xbf16, #tpu.memory_space<vmem>>, vector<1x64xbf16>
    tpu.vector_store %arg13[%c0_77, %c256], %132 {strides = array<i32>} : memref<1x1024xbf16, #tpu.memory_space<vmem>>, vector<1x64xbf16>,
    %134 = vector.extract_strided_slice %124 {offsets = [2, 0], sizes = [1, 64], strides = [1, 1]} : vector<8x64xf32> to vector<1x64xf32>
    %135 = vector.extract_strided_slice %124 {offsets = [3, 0], sizes = [1, 64], strides = [1, 1]} : vector<8x64xf32> to vector<1x64xf32>
    %136 = arith.maximumf %134, %135 : vector<1x64xf32>
    %c0_78 = arith.constant 0 : index
    %c0_79 = arith.constant 0 : index
    %137 = vector.load %arg5[%c0_78, %c0_79] : memref<1x64xf32, #tpu.memory_space<vmem>>, vector<1x64xf32>
    %138 = arith.addf %136, %137 : vector<1x64xf32>
    %cst_80 = arith.constant 0.000000e+00 : f32
    %139 = vector.broadcast %cst_80 : f32 to vector<1x64xf32>
    %140 = arith.maximumf %138, %139 : vector<1x64xf32>
    %141 = arith.truncf %140 : vector<1x64xf32> to vector<1x64xbf16>
    %c0_81 = arith.constant 0 : index
    %c320 = arith.constant 320 : index
    %142 = vector.load %arg13[%c0_81, %c320] : memref<1x1024xbf16, #tpu.memory_space<vmem>>, vector<1x64xbf16>
    tpu.vector_store %arg13[%c0_81, %c320], %141 {strides = array<i32>} : memref<1x1024xbf16, #tpu.memory_space<vmem>>, vector<1x64xbf16>,
    %143 = vector.extract_strided_slice %124 {offsets = [4, 0], sizes = [1, 64], strides = [1, 1]} : vector<8x64xf32> to vector<1x64xf32>
    %144 = vector.extract_strided_slice %124 {offsets = [5, 0], sizes = [1, 64], strides = [1, 1]} : vector<8x64xf32> to vector<1x64xf32>
    %145 = arith.maximumf %143, %144 : vector<1x64xf32>
    %c0_82 = arith.constant 0 : index
    %c0_83 = arith.constant 0 : index
    %146 = vector.load %arg5[%c0_82, %c0_83] : memref<1x64xf32, #tpu.memory_space<vmem>>, vector<1x64xf32>
    %147 = arith.addf %145, %146 : vector<1x64xf32>
    %cst_84 = arith.constant 0.000000e+00 : f32
    %148 = vector.broadcast %cst_84 : f32 to vector<1x64xf32>
    %149 = arith.maximumf %147, %148 : vector<1x64xf32>
    %150 = arith.truncf %149 : vector<1x64xf32> to vector<1x64xbf16>
    %c0_85 = arith.constant 0 : index
    %c384 = arith.constant 384 : index
    %151 = vector.load %arg13[%c0_85, %c384] : memref<1x1024xbf16, #tpu.memory_space<vmem>>, vector<1x64xbf16>
    tpu.vector_store %arg13[%c0_85, %c384], %150 {strides = array<i32>} : memref<1x1024xbf16, #tpu.memory_space<vmem>>, vector<1x64xbf16>,
    %152 = vector.extract_strided_slice %124 {offsets = [6, 0], sizes = [1, 64], strides = [1, 1]} : vector<8x64xf32> to vector<1x64xf32>
    %153 = vector.extract_strided_slice %124 {offsets = [7, 0], sizes = [1, 64], strides = [1, 1]} : vector<8x64xf32> to vector<1x64xf32>
    %154 = arith.maximumf %152, %153 : vector<1x64xf32>
    %c0_86 = arith.constant 0 : index
    %c0_87 = arith.constant 0 : index
    %155 = vector.load %arg5[%c0_86, %c0_87] : memref<1x64xf32, #tpu.memory_space<vmem>>, vector<1x64xf32>
    %156 = arith.addf %154, %155 : vector<1x64xf32>
    %cst_88 = arith.constant 0.000000e+00 : f32
    %157 = vector.broadcast %cst_88 : f32 to vector<1x64xf32>
    %158 = arith.maximumf %156, %157 : vector<1x64xf32>
    %159 = arith.truncf %158 : vector<1x64xf32> to vector<1x64xbf16>
    %c0_89 = arith.constant 0 : index
    %c448 = arith.constant 448 : index
    %160 = vector.load %arg13[%c0_89, %c448] : memref<1x1024xbf16, #tpu.memory_space<vmem>>, vector<1x64xbf16>
    tpu.vector_store %arg13[%c0_89, %c448], %159 {strides = array<i32>} : memref<1x1024xbf16, #tpu.memory_space<vmem>>, vector<1x64xbf16>,
    %c32_90 = arith.constant 32 : index
    %c0_91 = arith.constant 0 : index
    %161 = vector.load %arg12[%c32_90, %c0_91] : memref<64x64xf32, #tpu.memory_space<vmem>>, vector<8x64xf32>
    %c40 = arith.constant 40 : index
    %c0_92 = arith.constant 0 : index
    %162 = vector.load %arg12[%c40, %c0_92] : memref<64x64xf32, #tpu.memory_space<vmem>>, vector<8x64xf32>
    %163 = arith.maximumf %161, %162 : vector<8x64xf32>
    %164 = vector.extract_strided_slice %163 {offsets = [0, 0], sizes = [1, 64], strides = [1, 1]} : vector<8x64xf32> to vector<1x64xf32>
    %165 = vector.extract_strided_slice %163 {offsets = [1, 0], sizes = [1, 64], strides = [1, 1]} : vector<8x64xf32> to vector<1x64xf32>
    %166 = arith.maximumf %164, %165 : vector<1x64xf32>
    %c0_93 = arith.constant 0 : index
    %c0_94 = arith.constant 0 : index
    %167 = vector.load %arg5[%c0_93, %c0_94] : memref<1x64xf32, #tpu.memory_space<vmem>>, vector<1x64xf32>
    %168 = arith.addf %166, %167 : vector<1x64xf32>
    %cst_95 = arith.constant 0.000000e+00 : f32
    %169 = vector.broadcast %cst_95 : f32 to vector<1x64xf32>
    %170 = arith.maximumf %168, %169 : vector<1x64xf32>
    %171 = arith.truncf %170 : vector<1x64xf32> to vector<1x64xbf16>
    %c0_96 = arith.constant 0 : index
    %c512 = arith.constant 512 : index
    %172 = vector.load %arg13[%c0_96, %c512] : memref<1x1024xbf16, #tpu.memory_space<vmem>>, vector<1x64xbf16>
    tpu.vector_store %arg13[%c0_96, %c512], %171 {strides = array<i32>} : memref<1x1024xbf16, #tpu.memory_space<vmem>>, vector<1x64xbf16>,
    %173 = vector.extract_strided_slice %163 {offsets = [2, 0], sizes = [1, 64], strides = [1, 1]} : vector<8x64xf32> to vector<1x64xf32>
    %174 = vector.extract_strided_slice %163 {offsets = [3, 0], sizes = [1, 64], strides = [1, 1]} : vector<8x64xf32> to vector<1x64xf32>
    %175 = arith.maximumf %173, %174 : vector<1x64xf32>
    %c0_97 = arith.constant 0 : index
    %c0_98 = arith.constant 0 : index
    %176 = vector.load %arg5[%c0_97, %c0_98] : memref<1x64xf32, #tpu.memory_space<vmem>>, vector<1x64xf32>
    %177 = arith.addf %175, %176 : vector<1x64xf32>
    %cst_99 = arith.constant 0.000000e+00 : f32
    %178 = vector.broadcast %cst_99 : f32 to vector<1x64xf32>
    %179 = arith.maximumf %177, %178 : vector<1x64xf32>
    %180 = arith.truncf %179 : vector<1x64xf32> to vector<1x64xbf16>
    %c0_100 = arith.constant 0 : index
    %c576 = arith.constant 576 : index
    %181 = vector.load %arg13[%c0_100, %c576] : memref<1x1024xbf16, #tpu.memory_space<vmem>>, vector<1x64xbf16>
    tpu.vector_store %arg13[%c0_100, %c576], %180 {strides = array<i32>} : memref<1x1024xbf16, #tpu.memory_space<vmem>>, vector<1x64xbf16>,
    %182 = vector.extract_strided_slice %163 {offsets = [4, 0], sizes = [1, 64], strides = [1, 1]} : vector<8x64xf32> to vector<1x64xf32>
    %183 = vector.extract_strided_slice %163 {offsets = [5, 0], sizes = [1, 64], strides = [1, 1]} : vector<8x64xf32> to vector<1x64xf32>
    %184 = arith.maximumf %182, %183 : vector<1x64xf32>
    %c0_101 = arith.constant 0 : index
    %c0_102 = arith.constant 0 : index
    %185 = vector.load %arg5[%c0_101, %c0_102] : memref<1x64xf32, #tpu.memory_space<vmem>>, vector<1x64xf32>
    %186 = arith.addf %184, %185 : vector<1x64xf32>
    %cst_103 = arith.constant 0.000000e+00 : f32
    %187 = vector.broadcast %cst_103 : f32 to vector<1x64xf32>
    %188 = arith.maximumf %186, %187 : vector<1x64xf32>
    %189 = arith.truncf %188 : vector<1x64xf32> to vector<1x64xbf16>
    %c0_104 = arith.constant 0 : index
    %c640 = arith.constant 640 : index
    %190 = vector.load %arg13[%c0_104, %c640] : memref<1x1024xbf16, #tpu.memory_space<vmem>>, vector<1x64xbf16>
    tpu.vector_store %arg13[%c0_104, %c640], %189 {strides = array<i32>} : memref<1x1024xbf16, #tpu.memory_space<vmem>>, vector<1x64xbf16>,
    %191 = vector.extract_strided_slice %163 {offsets = [6, 0], sizes = [1, 64], strides = [1, 1]} : vector<8x64xf32> to vector<1x64xf32>
    %192 = vector.extract_strided_slice %163 {offsets = [7, 0], sizes = [1, 64], strides = [1, 1]} : vector<8x64xf32> to vector<1x64xf32>
    %193 = arith.maximumf %191, %192 : vector<1x64xf32>
    %c0_105 = arith.constant 0 : index
    %c0_106 = arith.constant 0 : index
    %194 = vector.load %arg5[%c0_105, %c0_106] : memref<1x64xf32, #tpu.memory_space<vmem>>, vector<1x64xf32>
    %195 = arith.addf %193, %194 : vector<1x64xf32>
    %cst_107 = arith.constant 0.000000e+00 : f32
    %196 = vector.broadcast %cst_107 : f32 to vector<1x64xf32>
    %197 = arith.maximumf %195, %196 : vector<1x64xf32>
    %198 = arith.truncf %197 : vector<1x64xf32> to vector<1x64xbf16>
    %c0_108 = arith.constant 0 : index
    %c704 = arith.constant 704 : index
    %199 = vector.load %arg13[%c0_108, %c704] : memref<1x1024xbf16, #tpu.memory_space<vmem>>, vector<1x64xbf16>
    tpu.vector_store %arg13[%c0_108, %c704], %198 {strides = array<i32>} : memref<1x1024xbf16, #tpu.memory_space<vmem>>, vector<1x64xbf16>,
    %c48 = arith.constant 48 : index
    %c0_109 = arith.constant 0 : index
    %200 = vector.load %arg12[%c48, %c0_109] : memref<64x64xf32, #tpu.memory_space<vmem>>, vector<8x64xf32>
    %c56 = arith.constant 56 : index
    %c0_110 = arith.constant 0 : index
    %201 = vector.load %arg12[%c56, %c0_110] : memref<64x64xf32, #tpu.memory_space<vmem>>, vector<8x64xf32>
    %202 = arith.maximumf %200, %201 : vector<8x64xf32>
    %203 = vector.extract_strided_slice %202 {offsets = [0, 0], sizes = [1, 64], strides = [1, 1]} : vector<8x64xf32> to vector<1x64xf32>
    %204 = vector.extract_strided_slice %202 {offsets = [1, 0], sizes = [1, 64], strides = [1, 1]} : vector<8x64xf32> to vector<1x64xf32>
    %205 = arith.maximumf %203, %204 : vector<1x64xf32>
    %c0_111 = arith.constant 0 : index
    %c0_112 = arith.constant 0 : index
    %206 = vector.load %arg5[%c0_111, %c0_112] : memref<1x64xf32, #tpu.memory_space<vmem>>, vector<1x64xf32>
    %207 = arith.addf %205, %206 : vector<1x64xf32>
    %cst_113 = arith.constant 0.000000e+00 : f32
    %208 = vector.broadcast %cst_113 : f32 to vector<1x64xf32>
    %209 = arith.maximumf %207, %208 : vector<1x64xf32>
    %210 = arith.truncf %209 : vector<1x64xf32> to vector<1x64xbf16>
    %c0_114 = arith.constant 0 : index
    %c768 = arith.constant 768 : index
    %211 = vector.load %arg13[%c0_114, %c768] : memref<1x1024xbf16, #tpu.memory_space<vmem>>, vector<1x64xbf16>
    tpu.vector_store %arg13[%c0_114, %c768], %210 {strides = array<i32>} : memref<1x1024xbf16, #tpu.memory_space<vmem>>, vector<1x64xbf16>,
    %212 = vector.extract_strided_slice %202 {offsets = [2, 0], sizes = [1, 64], strides = [1, 1]} : vector<8x64xf32> to vector<1x64xf32>
    %213 = vector.extract_strided_slice %202 {offsets = [3, 0], sizes = [1, 64], strides = [1, 1]} : vector<8x64xf32> to vector<1x64xf32>
    %214 = arith.maximumf %212, %213 : vector<1x64xf32>
    %c0_115 = arith.constant 0 : index
    %c0_116 = arith.constant 0 : index
    %215 = vector.load %arg5[%c0_115, %c0_116] : memref<1x64xf32, #tpu.memory_space<vmem>>, vector<1x64xf32>
    %216 = arith.addf %214, %215 : vector<1x64xf32>
    %cst_117 = arith.constant 0.000000e+00 : f32
    %217 = vector.broadcast %cst_117 : f32 to vector<1x64xf32>
    %218 = arith.maximumf %216, %217 : vector<1x64xf32>
    %219 = arith.truncf %218 : vector<1x64xf32> to vector<1x64xbf16>
    %c0_118 = arith.constant 0 : index
    %c832 = arith.constant 832 : index
    %220 = vector.load %arg13[%c0_118, %c832] : memref<1x1024xbf16, #tpu.memory_space<vmem>>, vector<1x64xbf16>
    tpu.vector_store %arg13[%c0_118, %c832], %219 {strides = array<i32>} : memref<1x1024xbf16, #tpu.memory_space<vmem>>, vector<1x64xbf16>,
    %221 = vector.extract_strided_slice %202 {offsets = [4, 0], sizes = [1, 64], strides = [1, 1]} : vector<8x64xf32> to vector<1x64xf32>
    %222 = vector.extract_strided_slice %202 {offsets = [5, 0], sizes = [1, 64], strides = [1, 1]} : vector<8x64xf32> to vector<1x64xf32>
    %223 = arith.maximumf %221, %222 : vector<1x64xf32>
    %c0_119 = arith.constant 0 : index
    %c0_120 = arith.constant 0 : index
    %224 = vector.load %arg5[%c0_119, %c0_120] : memref<1x64xf32, #tpu.memory_space<vmem>>, vector<1x64xf32>
    %225 = arith.addf %223, %224 : vector<1x64xf32>
    %cst_121 = arith.constant 0.000000e+00 : f32
    %226 = vector.broadcast %cst_121 : f32 to vector<1x64xf32>
    %227 = arith.maximumf %225, %226 : vector<1x64xf32>
    %228 = arith.truncf %227 : vector<1x64xf32> to vector<1x64xbf16>
    %c0_122 = arith.constant 0 : index
    %c896 = arith.constant 896 : index
    %229 = vector.load %arg13[%c0_122, %c896] : memref<1x1024xbf16, #tpu.memory_space<vmem>>, vector<1x64xbf16>
    tpu.vector_store %arg13[%c0_122, %c896], %228 {strides = array<i32>} : memref<1x1024xbf16, #tpu.memory_space<vmem>>, vector<1x64xbf16>,
    %230 = vector.extract_strided_slice %202 {offsets = [6, 0], sizes = [1, 64], strides = [1, 1]} : vector<8x64xf32> to vector<1x64xf32>
    %231 = vector.extract_strided_slice %202 {offsets = [7, 0], sizes = [1, 64], strides = [1, 1]} : vector<8x64xf32> to vector<1x64xf32>
    %232 = arith.maximumf %230, %231 : vector<1x64xf32>
    %c0_123 = arith.constant 0 : index
    %c0_124 = arith.constant 0 : index
    %233 = vector.load %arg5[%c0_123, %c0_124] : memref<1x64xf32, #tpu.memory_space<vmem>>, vector<1x64xf32>
    %234 = arith.addf %232, %233 : vector<1x64xf32>
    %cst_125 = arith.constant 0.000000e+00 : f32
    %235 = vector.broadcast %cst_125 : f32 to vector<1x64xf32>
    %236 = arith.maximumf %234, %235 : vector<1x64xf32>
    %237 = arith.truncf %236 : vector<1x64xf32> to vector<1x64xbf16>
    %c0_126 = arith.constant 0 : index
    %c960 = arith.constant 960 : index
    %238 = vector.load %arg13[%c0_126, %c960] : memref<1x1024xbf16, #tpu.memory_space<vmem>>, vector<1x64xbf16>
    tpu.vector_store %arg13[%c0_126, %c960], %237 {strides = array<i32>} : memref<1x1024xbf16, #tpu.memory_space<vmem>>, vector<1x64xbf16>,
    %c0_127 = arith.constant 0 : index
    %c0_128 = arith.constant 0 : index
    %239 = vector.load %arg13[%c0_127, %c0_128] : memref<1x1024xbf16, #tpu.memory_space<vmem>>, vector<1x1024xbf16>
    %c0_129 = arith.constant 0 : index
    %c0_130 = arith.constant 0 : index
    %240 = vector.load %arg6[%c0_129, %c0_130] : memref<1024x128xbf16, #tpu.memory_space<vmem>>, vector<1024x128xbf16>
    %cst_131 = arith.constant dense<0.000000e+00> : vector<1x128xf32>
    %241 = tpu.matmul %239, %240, %cst_131 {dimension_numbers = #tpu.dot_dimension_numbers<[1], [0], [0], [1], [0, 0, 1, 1], [], []>} : vector<1x1024xbf16>, vector<1024x128xbf16>, vector<1x128xf32> -> vector<1x128xf32>
    %c0_132 = arith.constant 0 : index
    %c0_133 = arith.constant 0 : index
    %242 = vector.load %arg7[%c0_132, %c0_133] : memref<1x128xf32, #tpu.memory_space<vmem>>, vector<1x128xf32>
    %243 = arith.addf %241, %242 : vector<1x128xf32>
    %cst_134 = arith.constant 0.000000e+00 : f32
    %244 = vector.broadcast %cst_134 : f32 to vector<1x128xf32>
    %245 = arith.maximumf %243, %244 : vector<1x128xf32>
    %246 = arith.truncf %245 : vector<1x128xf32> to vector<1x128xbf16>
    %c0_135 = arith.constant 0 : index
    %c0_136 = arith.constant 0 : index
    %247 = vector.load %arg8[%c0_135, %c0_136] : memref<128x128xbf16, #tpu.memory_space<vmem>>, vector<128x128xbf16>
    %cst_137 = arith.constant dense<0.000000e+00> : vector<1x128xf32>
    %248 = tpu.matmul %246, %247, %cst_137 {dimension_numbers = #tpu.dot_dimension_numbers<[1], [0], [0], [1], [0, 0, 1, 1], [], []>} : vector<1x128xbf16>, vector<128x128xbf16>, vector<1x128xf32> -> vector<1x128xf32>
    %c0_138 = arith.constant 0 : index
    %c0_139 = arith.constant 0 : index
    %249 = vector.load %arg9[%c0_138, %c0_139] : memref<1x128xf32, #tpu.memory_space<vmem>>, vector<1x128xf32>
    %250 = arith.addf %248, %249 : vector<1x128xf32>
    %c0_140 = arith.constant 0 : index
    %c0_141 = arith.constant 0 : index
    %c0_142 = arith.constant 0 : index
    %251 = vector.load %arg10[%c0_140, %c0_141, %c0_142] : memref<1x1x128xf32, #tpu.memory_space<vmem>>, vector<1x1x128xf32>
    %252 = vector.shape_cast %251 : vector<1x1x128xf32> to vector<1x128xf32>
    %253 = vector.shape_cast %250 : vector<1x128xf32> to vector<1x1x128xf32>
    tpu.vector_store %arg10[%c0_140, %c0_141, %c0_142], %253 {strides = array<i32>} : memref<1x1x128xf32, #tpu.memory_space<vmem>>, vector<1x1x128xf32>,
    return
  }
  func.func @transform_0(%arg0: i32) -> (i32, i32, i32) {
    %c0_i32 = arith.constant 0 : i32
    %c0_i32_0 = arith.constant 0 : i32
    %c0_i32_1 = arith.constant 0 : i32
    return %arg0, %c0_i32, %c0_i32_0 : i32, i32, i32
  }
  func.func @transform_1(%arg0: i32) -> (i32, i32) {
    %c0_i32 = arith.constant 0 : i32
    %c0_i32_0 = arith.constant 0 : i32
    %c0_i32_1 = arith.constant 0 : i32
    return %c0_i32, %c0_i32_0 : i32, i32
  }
  func.func @transform_2(%arg0: i32) -> (i32, i32) {
    %c0_i32 = arith.constant 0 : i32
    %c0_i32_0 = arith.constant 0 : i32
    %c0_i32_1 = arith.constant 0 : i32
    return %c0_i32, %c0_i32_0 : i32, i32
  }
  func.func @transform_3(%arg0: i32) -> (i32, i32, i32) {
    %c0_i32 = arith.constant 0 : i32
    %c0_i32_0 = arith.constant 0 : i32
    %c0_i32_1 = arith.constant 0 : i32
    %c0_i32_2 = arith.constant 0 : i32
    return %c0_i32, %c0_i32_0, %c0_i32_1 : i32, i32, i32
  }
  func.func @transform_4(%arg0: i32) -> (i32, i32) {
    %c0_i32 = arith.constant 0 : i32
    %c0_i32_0 = arith.constant 0 : i32
    %c0_i32_1 = arith.constant 0 : i32
    return %c0_i32, %c0_i32_0 : i32, i32
  }
  func.func @transform_5(%arg0: i32) -> (i32, i32) {
    %c0_i32 = arith.constant 0 : i32
    %c0_i32_0 = arith.constant 0 : i32
    %c0_i32_1 = arith.constant 0 : i32
    return %c0_i32, %c0_i32_0 : i32, i32
  }
  func.func @transform_6(%arg0: i32) -> (i32, i32) {
    %c0_i32 = arith.constant 0 : i32
    %c0_i32_0 = arith.constant 0 : i32
    %c0_i32_1 = arith.constant 0 : i32
    return %c0_i32, %c0_i32_0 : i32, i32
  }
  func.func @transform_7(%arg0: i32) -> (i32, i32) {
    %c0_i32 = arith.constant 0 : i32
    %c0_i32_0 = arith.constant 0 : i32
    %c0_i32_1 = arith.constant 0 : i32
    return %c0_i32, %c0_i32_0 : i32, i32
  }
  func.func @transform_8(%arg0: i32) -> (i32, i32) {
    %c0_i32 = arith.constant 0 : i32
    %c0_i32_0 = arith.constant 0 : i32
    %c0_i32_1 = arith.constant 0 : i32
    return %c0_i32, %c0_i32_0 : i32, i32
  }
  func.func @transform_9(%arg0: i32) -> (i32, i32, i32) {
    %c0_i32 = arith.constant 0 : i32
    %c0_i32_0 = arith.constant 0 : i32
    %c0_i32_1 = arith.constant 0 : i32
    return %arg0, %c0_i32, %c0_i32_0 : i32, i32, i32
  }
}

</mosaic_0001>

<llo_original>
// kernel: basic_cnn_forward.1
$region0: #{basic_cnn_forward.1}
  #allocation0 [shape = 'u32[]', space=smem, size = 0x4, offset = 0x4, fixed_abs, tag = 'smem constant byte address 0x4 - core index']
  #allocation1 [shape = 'u32[144,128]{1,0:T(1,128)}', space=vmem, size = 0x12000, scoped, tag = 'internal scratch']
  #allocation2 [shape = 'f32[96,96]{1,0:T(8,128)}', space=vmem, size = 0xc000, scoped, tag = 'scratch operand']
  #allocation3 [shape = 'f32[64,64]{1,0:T(8,128)}', space=vmem, size = 0x8000, scoped, tag = 'scratch operand']
  #allocation4 [shape = 'bf16[1,1024]{1,0:T(2,128)(2,1)}', space=vmem, size = 0x1000, scoped, tag = 'scratch operand']
  %s0 = inlined_call_operand.vmem [shape: bf16[2,256,16], index: 0, kind: input, shape index: {}]
  %s1 = inlined_call_operand.vmem [shape: bf16[16,32], index: 1, kind: input, shape index: {}]
  %s2 = inlined_call_operand.vmem [shape: f32[1,32], index: 2, kind: input, shape index: {}]
  %s3 = inlined_call_operand.vmem [shape: bf16[3,96,64], index: 3, kind: input, shape index: {}]
  %s4 = inlined_call_operand.vmem [shape: f32[1,64], index: 4, kind: input, shape index: {}]
  %s5 = inlined_call_operand.vmem [shape: bf16[1024,128], index: 5, kind: input, shape index: {}]
  %s6 = inlined_call_operand.vmem [shape: f32[1,128], index: 6, kind: input, shape index: {}]
  %s7 = inlined_call_operand.vmem [shape: bf16[128,128], index: 7, kind: input, shape index: {}]
  %s8 = inlined_call_operand.vmem [shape: f32[1,128], index: 8, kind: input, shape index: {}]
  %s9 = inlined_call_operand.hbm [shape: f32[2,1,128], index: 9, kind: output, shape index: {}]
  %s10 = sld [smem:[#allocation0]]
  $region69: #{basic_cnn_forward.1} parent=0
    _
  %s12 = ssub.s32 1, %s10
  %s13 = scalar_select 0, %s12, %s10
  $region1: #{basic_cnn_forward.1} parent=0
    #allocation5 [shape = 'u8[1024]{0}', space=vmem, size = 0x400, scoped, tag = 'output window, operand 0']
    #allocation6 [shape = 's32[2]{0}', space=sflag, size = 0x8, scoped, tag = 'scoped memory for basic_cnn_forward.1']
    %14 = vsyncpa [#allocation6], 0
    %s15 = scalar_lea.sflag [#allocation6], 1
    %16 = vsyncpa %s15, 0
    loop: start=0, step=1, limit=4
    $region2: #{basic_cnn_forward.1} parent=1 // loop_pre_header
      _
    $region3: #{basic_cnn_forward.1} parent=1 // loop_header
      %s18 = sphi 0, %s22
      %p19 = scmp.ge.s32.totalorder %s18, 4
      %s28 = sphi 0, %s30
      %s31 = sphi 0, %s28
      %s32 = sphi 0, %s31
      %s48 = sphi 0, %s32
      %s52 = sphi 0, %s52
      %s54 = sphi 0, %s52
      %s55 = sphi 0, %s54
      %s69 = sphi 0, %s55
      %s73 = sphi 0, %s73
      %s75 = sphi 0, %s73
      %s76 = sphi 0, %s75
      %s90 = sphi 0, %s76
      %s94 = sphi 0, %s94
      %s96 = sphi 0, %s94
      %s97 = sphi 0, %s96
      %s111 = sphi 0, %s97
      %s115 = sphi 0, %s115
      %s117 = sphi 0, %s115
      %s118 = sphi 0, %s117
      %s132 = sphi 0, %s118
      %s136 = sphi 0, %s136
      %s138 = sphi 0, %s136
      %s139 = sphi 0, %s138
      %s153 = sphi 0, %s139
      %s157 = sphi 0, %s157
      %s159 = sphi 0, %s157
      %s160 = sphi 0, %s159
      %s174 = sphi 0, %s160
      %s178 = sphi 0, %s178
      %s180 = sphi 0, %s178
      %s181 = sphi 0, %s180
      %s195 = sphi 0, %s181
      %s199 = sphi 0, %s199
      %s201 = sphi 0, %s199
      %s202 = sphi 0, %s201
      %s216 = sphi 0, %s202
      %s222 = sphi 0, %s224
      %s225 = sphi 0, %s222
      %s226 = sphi 0, %s225
      %s242 = sphi 0, %s226
    $region4: #{basic_cnn_forward.1} parent=1 // loop_header_branch
      %21 = sbr.rel (%p19) target = $region8
    $region5: #{basic_cnn_forward.1} parent=1 // loop_body
      %s23 = ssub.s32 %s18, 1
      %s24 = ssub.s32 %s18, 2
      %s25 = sadd.s32 %s18, 1
      %s26 = ssub.s32 %s18, %s25
      %p27 = scmp.eq.s32.totalorder %s26, 0
      %s29 = sadd.s32 %s28, 1
      %s30 = scalar_select %p27, %s28, %s29
      %p33 = pneg %p27
      %p34 = scmp.eq.s32.totalorder %s18, 1
      %p35 = por %p33, %p34
      %p36 = scmp.ne.s32.totalorder %s28, %s31
      %p37 = scmp.eq.s32.totalorder %s18, 0
      %p38 = por %p36, %p37
      %p39 = scmp.ne.s32.totalorder %s28, %s31
      %p40 = scmp.eq.s32.totalorder %s23, 1
      %p41 = por %p39, %p40
      %p42 = scmp.ne.s32.totalorder %s31, %s32
      %p43 = scmp.eq.s32.totalorder %s23, 0
      %p44 = por %p42, %p43
      %p45 = scmp.ne.s32.totalorder %s31, %s32
      %p46 = scmp.eq.s32.totalorder %s24, 1
      %p47 = por %p45, %p46
      %p49 = scmp.ne.s32.totalorder %s32, %s48
      %p50 = scmp.eq.s32.totalorder %s24, 0
      %p51 = por %p49, %p50
      %s53 = sadd.s32 %s52, 1
      %p56 = scmp.eq.s32.totalorder %s18, 1
      %p57 = scmp.ne.s32.totalorder %s52, %s54
      %p58 = scmp.eq.s32.totalorder %s18, 0
      %p59 = por %p57, %p58
      %p60 = scmp.ne.s32.totalorder %s52, %s54
      %p61 = scmp.eq.s32.totalorder %s23, 1
      %p62 = por %p60, %p61
      %p63 = scmp.ne.s32.totalorder %s54, %s55
      %p64 = scmp.eq.s32.totalorder %s23, 0
      %p65 = por %p63, %p64
      %p66 = scmp.ne.s32.totalorder %s54, %s55
      %p67 = scmp.eq.s32.totalorder %s24, 1
      %p68 = por %p66, %p67
      %p70 = scmp.ne.s32.totalorder %s55, %s69
      %p71 = scmp.eq.s32.totalorder %s24, 0
      %p72 = por %p70, %p71
      %s74 = sadd.s32 %s73, 1
      %p77 = scmp.eq.s32.totalorder %s18, 1
      %p78 = scmp.ne.s32.totalorder %s73, %s75
      %p79 = scmp.eq.s32.totalorder %s18, 0
      %p80 = por %p78, %p79
      %p81 = scmp.ne.s32.totalorder %s73, %s75
      %p82 = scmp.eq.s32.totalorder %s23, 1
      %p83 = por %p81, %p82
      %p84 = scmp.ne.s32.totalorder %s75, %s76
      %p85 = scmp.eq.s32.totalorder %s23, 0
      %p86 = por %p84, %p85
      %p87 = scmp.ne.s32.totalorder %s75, %s76
      %p88 = scmp.eq.s32.totalorder %s24, 1
      %p89 = por %p87, %p88
      %p91 = scmp.ne.s32.totalorder %s76, %s90
      %p92 = scmp.eq.s32.totalorder %s24, 0
      %p93 = por %p91, %p92
      %s95 = sadd.s32 %s94, 1
      %p98 = scmp.eq.s32.totalorder %s18, 1
      %p99 = scmp.ne.s32.totalorder %s94, %s96
      %p100 = scmp.eq.s32.totalorder %s18, 0
      %p101 = por %p99, %p100
      %p102 = scmp.ne.s32.totalorder %s94, %s96
      %p103 = scmp.eq.s32.totalorder %s23, 1
      %p104 = por %p102, %p103
      %p105 = scmp.ne.s32.totalorder %s96, %s97
      %p106 = scmp.eq.s32.totalorder %s23, 0
      %p107 = por %p105, %p106
      %p108 = scmp.ne.s32.totalorder %s96, %s97
      %p109 = scmp.eq.s32.totalorder %s24, 1
      %p110 = por %p108, %p109
      %p112 = scmp.ne.s32.totalorder %s97, %s111
      %p113 = scmp.eq.s32.totalorder %s24, 0
      %p114 = por %p112, %p113
      %s116 = sadd.s32 %s115, 1
      %p119 = scmp.eq.s32.totalorder %s18, 1
      %p120 = scmp.ne.s32.totalorder %s115, %s117
      %p121 = scmp.eq.s32.totalorder %s18, 0
      %p122 = por %p120, %p121
      %p123 = scmp.ne.s32.totalorder %s115, %s117
      %p124 = scmp.eq.s32.totalorder %s23, 1
      %p125 = por %p123, %p124
      %p126 = scmp.ne.s32.totalorder %s117, %s118
      %p127 = scmp.eq.s32.totalorder %s23, 0
      %p128 = por %p126, %p127
      %p129 = scmp.ne.s32.totalorder %s117, %s118
      %p130 = scmp.eq.s32.totalorder %s24, 1
      %p131 = por %p129, %p130
      %p133 = scmp.ne.s32.totalorder %s118, %s132
      %p134 = scmp.eq.s32.totalorder %s24, 0
      %p135 = por %p133, %p134
      %s137 = sadd.s32 %s136, 1
      %p140 = scmp.eq.s32.totalorder %s18, 1
      %p141 = scmp.ne.s32.totalorder %s136, %s138
      %p142 = scmp.eq.s32.totalorder %s18, 0
      %p143 = por %p141, %p142
      %p144 = scmp.ne.s32.totalorder %s136, %s138
      %p145 = scmp.eq.s32.totalorder %s23, 1
      %p146 = por %p144, %p145
      %p147 = scmp.ne.s32.totalorder %s138, %s139
      %p148 = scmp.eq.s32.totalorder %s23, 0
      %p149 = por %p147, %p148
      %p150 = scmp.ne.s32.totalorder %s138, %s139
      %p151 = scmp.eq.s32.totalorder %s24, 1
      %p152 = por %p150, %p151
      %p154 = scmp.ne.s32.totalorder %s139, %s153
      %p155 = scmp.eq.s32.totalorder %s24, 0
      %p156 = por %p154, %p155
      %s158 = sadd.s32 %s157, 1
      %p161 = scmp.eq.s32.totalorder %s18, 1
      %p162 = scmp.ne.s32.totalorder %s157, %s159
      %p163 = scmp.eq.s32.totalorder %s18, 0
      %p164 = por %p162, %p163
      %p165 = scmp.ne.s32.totalorder %s157, %s159
      %p166 = scmp.eq.s32.totalorder %s23, 1
      %p167 = por %p165, %p166
      %p168 = scmp.ne.s32.totalorder %s159, %s160
      %p169 = scmp.eq.s32.totalorder %s23, 0
      %p170 = por %p168, %p169
      %p171 = scmp.ne.s32.totalorder %s159, %s160
      %p172 = scmp.eq.s32.totalorder %s24, 1
      %p173 = por %p171, %p172
      %p175 = scmp.ne.s32.totalorder %s160, %s174
      %p176 = scmp.eq.s32.totalorder %s24, 0
      %p177 = por %p175, %p176
      %s179 = sadd.s32 %s178, 1
      %p182 = scmp.eq.s32.totalorder %s18, 1
      %p183 = scmp.ne.s32.totalorder %s178, %s180
      %p184 = scmp.eq.s32.totalorder %s18, 0
      %p185 = por %p183, %p184
      %p186 = scmp.ne.s32.totalorder %s178, %s180
      %p187 = scmp.eq.s32.totalorder %s23, 1
      %p188 = por %p186, %p187
      %p189 = scmp.ne.s32.totalorder %s180, %s181
      %p190 = scmp.eq.s32.totalorder %s23, 0
      %p191 = por %p189, %p190
      %p192 = scmp.ne.s32.totalorder %s180, %s181
      %p193 = scmp.eq.s32.totalorder %s24, 1
      %p194 = por %p192, %p193
      %p196 = scmp.ne.s32.totalorder %s181, %s195
      %p197 = scmp.eq.s32.totalorder %s24, 0
      %p198 = por %p196, %p197
      %s200 = sadd.s32 %s199, 1
      %p203 = scmp.eq.s32.totalorder %s18, 1
      %p204 = scmp.ne.s32.totalorder %s199, %s201
      %p205 = scmp.eq.s32.totalorder %s18, 0
      %p206 = por %p204, %p205
      %p207 = scmp.ne.s32.totalorder %s199, %s201
      %p208 = scmp.eq.s32.totalorder %s23, 1
      %p209 = por %p207, %p208
      %p210 = scmp.ne.s32.totalorder %s201, %s202
      %p211 = scmp.eq.s32.totalorder %s23, 0
      %p212 = por %p210, %p211
      %p213 = scmp.ne.s32.totalorder %s201, %s202
      %p214 = scmp.eq.s32.totalorder %s24, 1
      %p215 = por %p213, %p214
      %p217 = scmp.ne.s32.totalorder %s202, %s216
      %p218 = scmp.eq.s32.totalorder %s24, 0
      %p219 = por %p217, %p218
      %s220 = ssub.s32 %s18, %s25
      %p221 = scmp.eq.s32.totalorder %s220, 0
      %s223 = sadd.s32 %s222, 1
      %s224 = scalar_select %p221, %s222, %s223
      %p227 = pneg %p221
      %p228 = scmp.eq.s32.totalorder %s18, 1
      %p229 = por %p227, %p228
      %p230 = scmp.ne.s32.totalorder %s222, %s225
      %p231 = scmp.eq.s32.totalorder %s18, 0
      %p232 = por %p230, %p231
      %p233 = scmp.ne.s32.totalorder %s222, %s225
      %p234 = scmp.eq.s32.totalorder %s23, 1
      %p235 = por %p233, %p234
      %p236 = scmp.ne.s32.totalorder %s225, %s226
      %p237 = scmp.eq.s32.totalorder %s23, 0
      %p238 = por %p236, %p237
      %p239 = scmp.ne.s32.totalorder %s225, %s226
      %p240 = scmp.eq.s32.totalorder %s24, 1
      %p241 = por %p239, %p240
      %p243 = scmp.ne.s32.totalorder %s226, %s242
      %p244 = scmp.eq.s32.totalorder %s24, 0
      %p245 = por %p243, %p244
      %p246 = scmp.le.s32.totalorder 1, %s18
      %p247 = scmp.lt.s32.totalorder %s18, 3
      %p248 = pnand %p246, %p247
      %p249 = pneg %p248
      // Predicated region
      $region9: #{basic_cnn_forward.1} parent=5 // pred_check
        _
      $region10: #{basic_cnn_forward.1} parent=5 // pred_check_branch
        %251 = sbr.rel (%p248) target = $region12
      $region11: #{basic_cnn_forward.1} parent=5 // pred_region
        %s252 = ssub.s32 %s18, 1
        // Predicated region
        $region13: #{basic_cnn_forward.1} parent=11 // pred_check
          %p253 = pneg %p65
        $region14: #{basic_cnn_forward.1} parent=11 // pred_check_branch
          %255 = sbr.rel (%p253) target = $region16
        $region15: #{basic_cnn_forward.1} parent=11 // pred_region
          _
        $region16: #{basic_cnn_forward.1} parent=11 // pred_fallthru
          _
        // Predicated region
        $region17: #{basic_cnn_forward.1} parent=11 // pred_check
          %p256 = pneg %p86
        $region18: #{basic_cnn_forward.1} parent=11 // pred_check_branch
          %258 = sbr.rel (%p256) target = $region20
        $region19: #{basic_cnn_forward.1} parent=11 // pred_region
          _
        $region20: #{basic_cnn_forward.1} parent=11 // pred_fallthru
          _
        // Predicated region
        $region21: #{basic_cnn_forward.1} parent=11 // pred_check
          %p259 = pneg %p107
        $region22: #{basic_cnn_forward.1} parent=11 // pred_check_branch
          %261 = sbr.rel (%p259) target = $region24
        $region23: #{basic_cnn_forward.1} parent=11 // pred_region
          _
        $region24: #{basic_cnn_forward.1} parent=11 // pred_fallthru
          _
        // Predicated region
        $region25: #{basic_cnn_forward.1} parent=11 // pred_check
          %p262 = pneg %p128
        $region26: #{basic_cnn_forward.1} parent=11 // pred_check_branch
          %264 = sbr.rel (%p262) target = $region28
        $region27: #{basic_cnn_forward.1} parent=11 // pred_region
          _
        $region28: #{basic_cnn_forward.1} parent=11 // pred_fallthru
          _
        // Predicated region
        $region29: #{basic_cnn_forward.1} parent=11 // pred_check
          %p265 = pneg %p149
        $region30: #{basic_cnn_forward.1} parent=11 // pred_check_branch
          %267 = sbr.rel (%p265) target = $region32
        $region31: #{basic_cnn_forward.1} parent=11 // pred_region
          _
        $region32: #{basic_cnn_forward.1} parent=11 // pred_fallthru
          _
        // Predicated region
        $region33: #{basic_cnn_forward.1} parent=11 // pred_check
          %p268 = pneg %p170
        $region34: #{basic_cnn_forward.1} parent=11 // pred_check_branch
          %270 = sbr.rel (%p268) target = $region36
        $region35: #{basic_cnn_forward.1} parent=11 // pred_region
          _
        $region36: #{basic_cnn_forward.1} parent=11 // pred_fallthru
          _
        // Predicated region
        $region37: #{basic_cnn_forward.1} parent=11 // pred_check
          %p271 = pneg %p191
        $region38: #{basic_cnn_forward.1} parent=11 // pred_check_branch
          %273 = sbr.rel (%p271) target = $region40
        $region39: #{basic_cnn_forward.1} parent=11 // pred_region
          _
        $region40: #{basic_cnn_forward.1} parent=11 // pred_fallthru
          _
        // Predicated region
        $region41: #{basic_cnn_forward.1} parent=11 // pred_check
          %p274 = pneg %p212
        $region42: #{basic_cnn_forward.1} parent=11 // pred_check_branch
          %276 = sbr.rel (%p274) target = $region44
        $region43: #{basic_cnn_forward.1} parent=11 // pred_region
          _
        $region44: #{basic_cnn_forward.1} parent=11 // pred_fallthru
          _
      $region12: #{basic_cnn_forward.1} parent=5 // pred_fallthru
        _
      %p277 = scmp.lt.s32.totalorder %s18, 2
      // Predicated region
      $region45: #{basic_cnn_forward.1} parent=5 // pred_check
        %p278 = pneg %p277
      $region46: #{basic_cnn_forward.1} parent=5 // pred_check_branch
        %280 = sbr.rel (%p278) target = $region48
      $region47: #{basic_cnn_forward.1} parent=5 // pred_region
        // Predicated region
        $region49: #{basic_cnn_forward.1} parent=47 // pred_check
          %p281 = pneg %p38
        $region50: #{basic_cnn_forward.1} parent=47 // pred_check_branch
          %283 = sbr.rel (%p281) target = $region52
        $region51: #{basic_cnn_forward.1} parent=47 // pred_region
          %p284 = scmp.lt.s32.totalorder %s18, 1
          %s285 = scalar_select %p284, %s18, 1
          %s286 = smul.addr %s285, 32
          %s287 = smul.addr %s286, 4
          %s288 = scalar_lea.vmem %s0, %s287
        $region52: #{basic_cnn_forward.1} parent=47 // pred_fallthru
          _
      $region48: #{basic_cnn_forward.1} parent=5 // pred_fallthru
        _
      %p289 = scmp.le.s32.totalorder 1, %s18
      %p290 = scmp.lt.s32.totalorder %s18, 3
      %p291 = pnand %p289, %p290
      %p292 = pneg %p291
      // Predicated region
      $region53: #{basic_cnn_forward.1} parent=5 // pred_check
        _
      $region54: #{basic_cnn_forward.1} parent=5 // pred_check_branch
        %294 = sbr.rel (%p291) target = $region56
      $region55: #{basic_cnn_forward.1} parent=5 // pred_region
        %s295 = ssub.s32 %s18, 1
        %p296 = scmp.lt.s32.totalorder %s23, 1
        %s297 = scalar_select %p296, %s23, 1
        %s298 = smul.addr %s297, 32
        %s299 = smul.addr %s298, 4
        %s300 = scalar_lea.vmem %s0, %s299
        %p301 = pneg %p44
        %p302 = pneg %p41
        %p303 = pneg %p65
        %p304 = pneg %p62
        %p305 = pneg %p86
        %p306 = pneg %p83
        %p307 = pneg %p107
        %p308 = pneg %p104
        %p309 = pneg %p128
        %p310 = pneg %p125
        %p311 = pneg %p149
        %p312 = pneg %p146
        %p313 = pneg %p170
        %p314 = pneg %p167
        %p315 = pneg %p191
        %p316 = pneg %p188
        %p317 = pneg %p212
        %p318 = pneg %p209
        %p319 = pneg %p238
        %p320 = pneg %p235
        %s321 = sand.u32 %s225, 1
        %s322 = scalar_lea.sflag [#allocation6], %s321
        %s323 = sand.u32 %s225, 1
        %s324 = scalar_lea.vmem [#allocation5], %s323
        %p325 = scmp.lt.s32.totalorder %s23, 1
        %s326 = scalar_select %p325, %s23, 1
        %s327 = smul.addr %s326, 32
        %s328 = smul.addr %s327, 4
        %s329 = scalar_lea.vmem %s0, %s328
        %v331 = vld [vmem:[%s329] sm:$0xf]
        %v332 = vld [vmem:[%s329 + $0x4] sm:$0xf]
        %v333 = vld [vmem:[%s329 + $0x8] sm:$0xf]
        %v334 = vld [vmem:[%s329 + $0xc] sm:$0xf]
        %v335 = vld [vmem:[%s329 + $0x10] sm:$0xf]
        %v336 = vld [vmem:[%s329 + $0x14] sm:$0xf]
        %v337 = vld [vmem:[%s329 + $0x18] sm:$0xf]
        %v338 = vld [vmem:[%s329 + $0x1c] sm:$0xf]
        %v339 = vld [vmem:[%s329 + $0x20] sm:$0xf]
        %v340 = vld [vmem:[%s329 + $0x24] sm:$0xf]
        %v341 = vld [vmem:[%s329 + $0x28] sm:$0xf]
        %v342 = vld [vmem:[%s329 + $0x2c] sm:$0xf]
        %v343 = vld [vmem:[%s329 + $0x30] sm:$0xf]
        %v344 = vld [vmem:[%s329 + $0x34] sm:$0xf]
        %v345 = vld [vmem:[%s329 + $0x38] sm:$0xf]
        %v346 = vld [vmem:[%s329 + $0x3c] sm:$0xf]
        %v347 = vld [vmem:[%s329 + $0x40] sm:$0xf]
        %v348 = vld [vmem:[%s329 + $0x44] sm:$0xf]
        %v349 = vld [vmem:[%s329 + $0x48] sm:$0xf]
        %v350 = vld [vmem:[%s329 + $0x4c] sm:$0xf]
        %v351 = vld [vmem:[%s329 + $0x50] sm:$0xf]
        %v352 = vld [vmem:[%s329 + $0x54] sm:$0xf]
        %v353 = vld [vmem:[%s329 + $0x58] sm:$0xf]
        %v354 = vld [vmem:[%s329 + $0x5c] sm:$0xf]
        %v355 = vld [vmem:[%s329 + $0x60] sm:$0xf]
        %v356 = vld [vmem:[%s329 + $0x64] sm:$0xf]
        %v357 = vld [vmem:[%s329 + $0x68] sm:$0xf]
        %v358 = vld [vmem:[%s329 + $0x6c] sm:$0xf]
        %v359 = vld [vmem:[%s329 + $0x70] sm:$0xf]
        %v360 = vld [vmem:[%s329 + $0x74] sm:$0xf]
        %v361 = vld [vmem:[%s329 + $0x78] sm:$0xf]
        %v362 = vld [vmem:[%s329 + $0x7c] sm:$0xf]
        %v363 = vld [vmem:[%s1] sm:$0xf]
        %v364 = vld [vmem:[%s1 + $0x4] sm:$0xf]
        %v397 = vunpack.c.l.b16 %v331
        %v398 = vunpack.c.l.b16 %v332
        %v399 = vunpack.c.l.b16 %v333
        %v400 = vunpack.c.l.b16 %v334
        %v401 = vunpack.c.l.b16 %v335
        %v402 = vunpack.c.l.b16 %v336
        %v403 = vunpack.c.l.b16 %v337
        %v404 = vunpack.c.l.b16 %v338
        %v405 = vunpack.c.l.b16 %v339
        %v406 = vunpack.c.l.b16 %v340
        %v407 = vunpack.c.l.b16 %v341
        %v408 = vunpack.c.l.b16 %v342
        %v409 = vunpack.c.l.b16 %v343
        %v410 = vunpack.c.l.b16 %v344
        %v411 = vunpack.c.l.b16 %v345
        %v412 = vunpack.c.l.b16 %v346
        %v413 = vunpack.c.l.b16 %v347
        %v414 = vunpack.c.l.b16 %v348
        %v415 = vunpack.c.l.b16 %v349
        %v416 = vunpack.c.l.b16 %v350
        %v417 = vunpack.c.l.b16 %v351
        %v418 = vunpack.c.l.b16 %v352
        %v419 = vunpack.c.l.b16 %v353
        %v420 = vunpack.c.l.b16 %v354
        %v421 = vunpack.c.l.b16 %v355
        %v422 = vunpack.c.l.b16 %v356
        %v423 = vunpack.c.l.b16 %v357
        %v424 = vunpack.c.l.b16 %v358
        %v425 = vunpack.c.l.b16 %v359
        %v426 = vunpack.c.l.b16 %v360
        %v427 = vunpack.c.l.b16 %v361
        %v428 = vunpack.c.l.b16 %v362
        %v429 = vpack.c.b16 %v398, %v397
        %v430 = vpack.c.b16 %v400, %v399
        %v431 = vpack.c.b16 %v402, %v401
        %v432 = vpack.c.b16 %v404, %v403
        %v433 = vpack.c.b16 %v406, %v405
        %v434 = vpack.c.b16 %v408, %v407
        %v435 = vpack.c.b16 %v410, %v409
        %v436 = vpack.c.b16 %v412, %v411
        %v437 = vpack.c.b16 %v414, %v413
        %v438 = vpack.c.b16 %v416, %v415
        %v439 = vpack.c.b16 %v418, %v417
        %v440 = vpack.c.b16 %v420, %v419
        %v441 = vpack.c.b16 %v422, %v421
        %v442 = vpack.c.b16 %v424, %v423
        %v443 = vpack.c.b16 %v426, %v425
        %v444 = vpack.c.b16 %v428, %v427
        %v447 = vunpack.c.l.b16 %v363
        %v448 = vunpack.c.l.b16 %v364
        %v449 = vpack.c.b16 %v448, %v447
        %vm451 = vcmask 130048
        %v453 = vsel %vm451, %v429, 0
        %v456 = vsel %vm451, %v430, 0
        %v459 = vsel %vm451, %v431, 0
        %v462 = vsel %vm451, %v432, 0
        %v465 = vsel %vm451, %v433, 0
        %v468 = vsel %vm451, %v434, 0
        %v471 = vsel %vm451, %v435, 0
        %v474 = vsel %vm451, %v436, 0
        %v477 = vsel %vm451, %v437, 0
        %v480 = vsel %vm451, %v438, 0
        %v483 = vsel %vm451, %v439, 0
        %v486 = vsel %vm451, %v440, 0
        %v489 = vsel %vm451, %v441, 0
        %v492 = vsel %vm451, %v442, 0
        %v495 = vsel %vm451, %v443, 0
        %v498 = vsel %vm451, %v444, 0
        %500 = vmatprep.subr.bf16.mxu0 0
        %501 = vmatpush1.bf16.msra.mxu0 %v449
        %502 = vmatprep.subr.bf16.mxu0 0
        %503 = vmatpush1.bf16.msra.mxu0 0
        %504 = vmatprep.subr.bf16.mxu0 0
        %505 = vmatpush1.bf16.msra.mxu0 0
        %506 = vmatprep.subr.bf16.mxu0 0
        %507 = vmatpush1.bf16.msra.mxu0 0
        %508 = vmatprep.subr.bf16.mxu0 0
        %509 = vmatpush1.bf16.msra.mxu0 0
        %510 = vmatprep.subr.bf16.mxu0 0
        %511 = vmatpush1.bf16.msra.mxu0 0
        %512 = vmatprep.subr.bf16.mxu0 0
        %513 = vmatpush1.bf16.msra.mxu0 0
        %514 = vmatprep.subr.bf16.mxu0 0
        %515 = vmatpush1.bf16.msra.mxu0 0
        %516 = vmatprep.subr.bf16.mxu0 0
        %517 = vmatpush1.bf16.msra.mxu0 0
        %518 = vmatprep.subr.bf16.mxu0 0
        %519 = vmatpush1.bf16.msra.mxu0 0
        %520 = vmatprep.subr.bf16.mxu0 0
        %521 = vmatpush1.bf16.msra.mxu0 0
        %522 = vmatprep.subr.bf16.mxu0 0
        %523 = vmatpush1.bf16.msra.mxu0 0
        %524 = vmatprep.subr.bf16.mxu0 0
        %525 = vmatpush1.bf16.msra.mxu0 0
        %526 = vmatprep.subr.bf16.mxu0 0
        %527 = vmatpush1.bf16.msra.mxu0 0
        %528 = vmatprep.subr.bf16.mxu0 0
        %529 = vmatpush1.bf16.msra.mxu0 0
        %530 = vmatprep.subr.bf16.mxu0 0
        %531 = vmatpush1.bf16.msra.mxu0 0
        %532 = vmatprep.mubr.bf16.mxu0 0
        %533 = vmatmul.mubr.bf16.gmra.mrb[0].mxu0 %v453
        %v534 = vpop.f32.mrb[0].mxu0
        %v535 = vadd.f32 0.0, %v534
        %v536 = vpop.f32.mrb[0].mxu0
        %v537 = vpop.f32.mrb[0].mxu0
        %v538 = vadd.f32 0.0, %v537
        %v539 = vpop.f32.mrb[0].mxu0
        %540 = vmatprep.mubr.bf16.mxu0 0
        %541 = vmatmul.mubr.bf16.gmra.mrb[0].mxu0 %v456
        %v542 = vpop.f32.mrb[0].mxu0
        %v543 = vadd.f32 0.0, %v542
        %v544 = vpop.f32.mrb[0].mxu0
        %v545 = vpop.f32.mrb[0].mxu0
        %v546 = vadd.f32 0.0, %v545
        %v547 = vpop.f32.mrb[0].mxu0
        %548 = vmatprep.mubr.bf16.mxu0 0
        %549 = vmatmul.mubr.bf16.gmra.mrb[0].mxu0 %v459
        %v550 = vpop.f32.mrb[0].mxu0
        %v551 = vadd.f32 0.0, %v550
        %v552 = vpop.f32.mrb[0].mxu0
        %v553 = vpop.f32.mrb[0].mxu0
        %v554 = vadd.f32 0.0, %v553
        %v555 = vpop.f32.mrb[0].mxu0
        %556 = vmatprep.mubr.bf16.mxu0 0
        %557 = vmatmul.mubr.bf16.gmra.mrb[0].mxu0 %v462
        %v558 = vpop.f32.mrb[0].mxu0
        %v559 = vadd.f32 0.0, %v558
        %v560 = vpop.f32.mrb[0].mxu0
        %v561 = vpop.f32.mrb[0].mxu0
        %v562 = vadd.f32 0.0, %v561
        %v563 = vpop.f32.mrb[0].mxu0
        %564 = vmatprep.mubr.bf16.mxu0 0
        %565 = vmatmul.mubr.bf16.gmra.mrb[0].mxu0 %v465
        %v566 = vpop.f32.mrb[0].mxu0
        %v567 = vadd.f32 0.0, %v566
        %v568 = vpop.f32.mrb[0].mxu0
        %v569 = vpop.f32.mrb[0].mxu0
        %v570 = vadd.f32 0.0, %v569
        %v571 = vpop.f32.mrb[0].mxu0
        %572 = vmatprep.mubr.bf16.mxu0 0
        %573 = vmatmul.mubr.bf16.gmra.mrb[0].mxu0 %v468
        %v574 = vpop.f32.mrb[0].mxu0
        %v575 = vadd.f32 0.0, %v574
        %v576 = vpop.f32.mrb[0].mxu0
        %v577 = vpop.f32.mrb[0].mxu0
        %v578 = vadd.f32 0.0, %v577
        %v579 = vpop.f32.mrb[0].mxu0
        %580 = vmatprep.mubr.bf16.mxu0 0
        %581 = vmatmul.mubr.bf16.gmra.mrb[0].mxu0 %v471
        %v582 = vpop.f32.mrb[0].mxu0
        %v583 = vadd.f32 0.0, %v582
        %v584 = vpop.f32.mrb[0].mxu0
        %v585 = vpop.f32.mrb[0].mxu0
        %v586 = vadd.f32 0.0, %v585
        %v587 = vpop.f32.mrb[0].mxu0
        %588 = vmatprep.mubr.bf16.mxu0 0
        %589 = vmatmul.mubr.bf16.gmra.mrb[0].mxu0 %v474
        %v590 = vpop.f32.mrb[0].mxu0
        %v591 = vadd.f32 0.0, %v590
        %v592 = vpop.f32.mrb[0].mxu0
        %v593 = vpop.f32.mrb[0].mxu0
        %v594 = vadd.f32 0.0, %v593
        %v595 = vpop.f32.mrb[0].mxu0
        %596 = vmatprep.mubr.bf16.mxu0 0
        %597 = vmatmul.mubr.bf16.gmra.mrb[0].mxu0 %v477
        %v598 = vpop.f32.mrb[0].mxu0
        %v599 = vadd.f32 0.0, %v598
        %v600 = vpop.f32.mrb[0].mxu0
        %v601 = vpop.f32.mrb[0].mxu0
        %v602 = vadd.f32 0.0, %v601
        %v603 = vpop.f32.mrb[0].mxu0
        %604 = vmatprep.mubr.bf16.mxu0 0
        %605 = vmatmul.mubr.bf16.gmra.mrb[0].mxu0 %v480
        %v606 = vpop.f32.mrb[0].mxu0
        %v607 = vadd.f32 0.0, %v606
        %v608 = vpop.f32.mrb[0].mxu0
        %v609 = vpop.f32.mrb[0].mxu0
        %v610 = vadd.f32 0.0, %v609
        %v611 = vpop.f32.mrb[0].mxu0
        %612 = vmatprep.mubr.bf16.mxu0 0
        %613 = vmatmul.mubr.bf16.gmra.mrb[0].mxu0 %v483
        %v614 = vpop.f32.mrb[0].mxu0
        %v615 = vadd.f32 0.0, %v614
        %v616 = vpop.f32.mrb[0].mxu0
        %v617 = vpop.f32.mrb[0].mxu0
        %v618 = vadd.f32 0.0, %v617
        %v619 = vpop.f32.mrb[0].mxu0
        %620 = vmatprep.mubr.bf16.mxu0 0
        %621 = vmatmul.mubr.bf16.gmra.mrb[0].mxu0 %v486
        %v622 = vpop.f32.mrb[0].mxu0
        %v623 = vadd.f32 0.0, %v622
        %v624 = vpop.f32.mrb[0].mxu0
        %v625 = vpop.f32.mrb[0].mxu0
        %v626 = vadd.f32 0.0, %v625
        %v627 = vpop.f32.mrb[0].mxu0
        %628 = vmatprep.mubr.bf16.mxu0 0
        %629 = vmatmul.mubr.bf16.gmra.mrb[0].mxu0 %v489
        %v630 = vpop.f32.mrb[0].mxu0
        %v631 = vadd.f32 0.0, %v630
        %v632 = vpop.f32.mrb[0].mxu0
        %v633 = vpop.f32.mrb[0].mxu0
        %v634 = vadd.f32 0.0, %v633
        %v635 = vpop.f32.mrb[0].mxu0
        %636 = vmatprep.mubr.bf16.mxu0 0
        %637 = vmatmul.mubr.bf16.gmra.mrb[0].mxu0 %v492
        %v638 = vpop.f32.mrb[0].mxu0
        %v639 = vadd.f32 0.0, %v638
        %v640 = vpop.f32.mrb[0].mxu0
        %v641 = vpop.f32.mrb[0].mxu0
        %v642 = vadd.f32 0.0, %v641
        %v643 = vpop.f32.mrb[0].mxu0
        %644 = vmatprep.mubr.bf16.mxu0 0
        %645 = vmatmul.mubr.bf16.gmra.mrb[0].mxu0 %v495
        %v646 = vpop.f32.mrb[0].mxu0
        %v647 = vadd.f32 0.0, %v646
        %v648 = vpop.f32.mrb[0].mxu0
        %v649 = vpop.f32.mrb[0].mxu0
        %v650 = vadd.f32 0.0, %v649
        %v651 = vpop.f32.mrb[0].mxu0
        %652 = vmatprep.mubr.bf16.mxu0 0
        %653 = vmatmul.mubr.bf16.gmra.mrb[0].mxu0 %v498
        %v654 = vpop.f32.mrb[0].mxu0
        %v655 = vadd.f32 0.0, %v654
        %v656 = vpop.f32.mrb[0].mxu0
        %v657 = vpop.f32.mrb[0].mxu0
        %v658 = vadd.f32 0.0, %v657
        %v659 = vpop.f32.mrb[0].mxu0
        %660 = vdwg.mxu0
        %v661 = vmax.f32 %v535, %v567
        %v662 = vmax.f32 %v538, %v570
        %v663 = vmax.f32 %v543, %v575
        %v664 = vmax.f32 %v546, %v578
        %v665 = vmax.f32 %v551, %v583
        %v666 = vmax.f32 %v554, %v586
        %v667 = vmax.f32 %v559, %v591
        %v668 = vmax.f32 %v562, %v594
        %v669 = vmax.f32 %v599, %v631
        %v670 = vmax.f32 %v602, %v634
        %v671 = vmax.f32 %v607, %v639
        %v672 = vmax.f32 %v610, %v642
        %v673 = vmax.f32 %v615, %v647
        %v674 = vmax.f32 %v618, %v650
        %v675 = vmax.f32 %v623, %v655
        %v676 = vmax.f32 %v626, %v658
        %v677 = vmax.f32 %v661, %v669
        %v678 = vmax.f32 %v662, %v670
        %v679 = vmax.f32 %v663, %v671
        %v680 = vmax.f32 %v664, %v672
        %v681 = vmax.f32 %v665, %v673
        %v682 = vmax.f32 %v666, %v674
        %v683 = vmax.f32 %v667, %v675
        %v684 = vmax.f32 %v668, %v676
        %v685 = vld [vmem:[%s2] sm:$0x1]
        %v687 = vlaneseq
        %v688 = vshrl.u32 %v687, 7
        %v689 = vsub.s32 0, %v688
        %v690 = vrot.slane %v685, %v689
        %v692 = vadd.f32 %v677, %v690
        %v693 = vadd.f32 %v678, %v690
        %v694 = vadd.f32 %v679, %v690
        %v695 = vadd.f32 %v680, %v690
        %v696 = vadd.f32 %v681, %v690
        %v697 = vadd.f32 %v682, %v690
        %v698 = vadd.f32 %v683, %v690
        %v699 = vadd.f32 %v684, %v690
        %v700 = vmax.f32 %v692, 0.0
        %v701 = vmax.f32 %v693, 0.0
        %v702 = vmax.f32 %v694, 0.0
        %v703 = vmax.f32 %v695, 0.0
        %v704 = vmax.f32 %v696, 0.0
        %v705 = vmax.f32 %v697, 0.0
        %v706 = vmax.f32 %v698, 0.0
        %v707 = vmax.f32 %v699, 0.0
        %vm708 = vcmask 785408
        %709 = vst.msk [vmem:[#allocation2] sm:$0xff] %vm708, 0.0
        %710 = vst.msk [vmem:[#allocation2 + $0x8] sm:$0xff] %vm708, 0.0
        %711 = vst.msk [vmem:[#allocation2 + $0x10] sm:$0xff] %vm708, 0.0
        %712 = vst.msk [vmem:[#allocation2 + $0x18] sm:$0xff] %vm708, 0.0
        %713 = vst.msk [vmem:[#allocation2 + $0x20] sm:$0xff] %vm708, 0.0
        %714 = vst.msk [vmem:[#allocation2 + $0x28] sm:$0xff] %vm708, 0.0
        %715 = vst.msk [vmem:[#allocation2 + $0x30] sm:$0xff] %vm708, 0.0
        %716 = vst.msk [vmem:[#allocation2 + $0x38] sm:$0xff] %vm708, 0.0
        %717 = vst.msk [vmem:[#allocation2 + $0x40] sm:$0xff] %vm708, 0.0
        %718 = vst.msk [vmem:[#allocation2 + $0x48] sm:$0xff] %vm708, 0.0
        %719 = vst.msk [vmem:[#allocation2 + $0x50] sm:$0xff] %vm708, 0.0
        %720 = vst.msk [vmem:[#allocation2 + $0x58] sm:$0xff] %vm708, 0.0
        %vm721 = vcmask 261120
        %722 = vst.msk [vmem:[#allocation2 + $0x11] sm:$0xff] %vm721, %v700
        %723 = vst.msk [vmem:[#allocation2 + $0x19] sm:$0xff] %vm721, %v701
        %724 = vst.msk [vmem:[#allocation2 + $0x21] sm:$0xff] %vm721, %v702
        %725 = vst.msk [vmem:[#allocation2 + $0x29] sm:$0xff] %vm721, %v703
        %726 = vst.msk [vmem:[#allocation2 + $0x31] sm:$0xff] %vm721, %v704
        %727 = vst.msk [vmem:[#allocation2 + $0x39] sm:$0xff] %vm721, %v705
        %728 = vst.msk [vmem:[#allocation2 + $0x41] sm:$0xff] %vm721, %v706
        %729 = vst.msk [vmem:[#allocation2 + $0x49] sm:$0xff] %vm721, %v707
        %738 = vrot.lane.b32.xlu0 %v700, 32
        %v739 = vpop.permute.xlu0 %738
        %740 = vrot.lane.b32.xlu0 %v701, 32
        %v741 = vpop.permute.xlu0 %740
        %742 = vrot.lane.b32.xlu0 %v702, 32
        %v743 = vpop.permute.xlu0 %742
        %744 = vrot.lane.b32.xlu0 %v703, 32
        %v745 = vpop.permute.xlu0 %744
        %746 = vrot.lane.b32.xlu0 %v704, 32
        %v747 = vpop.permute.xlu0 %746
        %748 = vrot.lane.b32.xlu0 %v705, 32
        %v749 = vpop.permute.xlu0 %748
        %750 = vrot.lane.b32.xlu0 %v706, 32
        %v751 = vpop.permute.xlu0 %750
        %752 = vrot.lane.b32.xlu0 %v707, 32
        %v753 = vpop.permute.xlu0 %752
        %vm762 = vcmask 523520
        %763 = vst.msk [vmem:[#allocation2 + $0x10] sm:$0xff] %vm762, %v739
        %764 = vst.msk [vmem:[#allocation2 + $0x18] sm:$0xff] %vm762, %v741
        %765 = vst.msk [vmem:[#allocation2 + $0x20] sm:$0xff] %vm762, %v743
        %766 = vst.msk [vmem:[#allocation2 + $0x28] sm:$0xff] %vm762, %v745
        %767 = vst.msk [vmem:[#allocation2 + $0x30] sm:$0xff] %vm762, %v747
        %768 = vst.msk [vmem:[#allocation2 + $0x38] sm:$0xff] %vm762, %v749
        %769 = vst.msk [vmem:[#allocation2 + $0x40] sm:$0xff] %vm762, %v751
        %770 = vst.msk [vmem:[#allocation2 + $0x48] sm:$0xff] %vm762, %v753
        %771 = vrot.lane.b32.xlu0 %v700, 64
        %v772 = vpop.permute.xlu0 %771
        %773 = vrot.lane.b32.xlu0 %v701, 64
        %v774 = vpop.permute.xlu0 %773
        %775 = vrot.lane.b32.xlu0 %v702, 64
        %v776 = vpop.permute.xlu0 %775
        %777 = vrot.lane.b32.xlu0 %v703, 64
        %v778 = vpop.permute.xlu0 %777
        %779 = vrot.lane.b32.xlu0 %v704, 64
        %v780 = vpop.permute.xlu0 %779
        %781 = vrot.lane.b32.xlu0 %v705, 64
        %v782 = vpop.permute.xlu0 %781
        %783 = vrot.lane.b32.xlu0 %v706, 64
        %v784 = vpop.permute.xlu0 %783
        %785 = vrot.lane.b32.xlu0 %v707, 64
        %v786 = vpop.permute.xlu0 %785
        %vm795 = vcmask 785920
        %796 = vst.msk [vmem:[#allocation2 + $0xf] sm:$0xff] %vm795, %v772
        %797 = vst.msk [vmem:[#allocation2 + $0x17] sm:$0xff] %vm795, %v774
        %798 = vst.msk [vmem:[#allocation2 + $0x1f] sm:$0xff] %vm795, %v776
        %799 = vst.msk [vmem:[#allocation2 + $0x27] sm:$0xff] %vm795, %v778
        %800 = vst.msk [vmem:[#allocation2 + $0x2f] sm:$0xff] %vm795, %v780
        %801 = vst.msk [vmem:[#allocation2 + $0x37] sm:$0xff] %vm795, %v782
        %802 = vst.msk [vmem:[#allocation2 + $0x3f] sm:$0xff] %vm795, %v784
        %803 = vst.msk [vmem:[#allocation2 + $0x47] sm:$0xff] %vm795, %v786
        %v804 = vlaneseq
        %v805 = vand.u32 %v804, 127
        %v806 = vlaneseq
        %v807 = vshrl.u32 %v806, 7
        %v808 = vadd.s32 %v807, 8
        %v809 = vadd.s32 %v807, 16
        %v810 = vadd.s32 %v807, 24
        %v811 = vadd.s32 %v807, 32
        %v812 = vadd.s32 %v807, 40
        %v813 = vadd.s32 %v807, 48
        %v814 = vadd.s32 %v807, 56
        %vm815 = vcmp.lt.s32.totalorder %v807, 0
        %v816 = vsub.s32 0, %v807
        %v817 = vsel %vm815, %v816, %v807
        %v818 = vshrl.u32 %v817, 3
        %v819 = vand.u32 %v817, 7
        %v820 = vsub.s32 0, %v819
        %v821 = vsel %vm815, %v820, %v819
        %vm822 = vcmp.lt.s32.totalorder %v808, 0
        %v823 = vsub.s32 0, %v808
        %v824 = vsel %vm822, %v823, %v808
        %v825 = vshrl.u32 %v824, 3
        %v826 = vand.u32 %v824, 7
        %v827 = vsub.s32 0, %v826
        %v828 = vsel %vm822, %v827, %v826
        %vm829 = vcmp.lt.s32.totalorder %v809, 0
        %v830 = vsub.s32 0, %v809
        %v831 = vsel %vm829, %v830, %v809
        %v832 = vshrl.u32 %v831, 3
        %v833 = vand.u32 %v831, 7
        %v834 = vsub.s32 0, %v833
        %v835 = vsel %vm829, %v834, %v833
        %vm836 = vcmp.lt.s32.totalorder %v810, 0
        %v837 = vsub.s32 0, %v810
        %v838 = vsel %vm836, %v837, %v810
        %v839 = vshrl.u32 %v838, 3
        %v840 = vand.u32 %v838, 7
        %v841 = vsub.s32 0, %v840
        %v842 = vsel %vm836, %v841, %v840
        %vm843 = vcmp.lt.s32.totalorder %v811, 0
        %v844 = vsub.s32 0, %v811
        %v845 = vsel %vm843, %v844, %v811
        %v846 = vshrl.u32 %v845, 3
        %v847 = vand.u32 %v845, 7
        %v848 = vsub.s32 0, %v847
        %v849 = vsel %vm843, %v848, %v847
        %vm850 = vcmp.lt.s32.totalorder %v812, 0
        %v851 = vsub.s32 0, %v812
        %v852 = vsel %vm850, %v851, %v812
        %v853 = vshrl.u32 %v852, 3
        %v854 = vand.u32 %v852, 7
        %v855 = vsub.s32 0, %v854
        %v856 = vsel %vm850, %v855, %v854
        %vm857 = vcmp.lt.s32.totalorder %v813, 0
        %v858 = vsub.s32 0, %v813
        %v859 = vsel %vm857, %v858, %v813
        %v860 = vshrl.u32 %v859, 3
        %v861 = vand.u32 %v859, 7
        %v862 = vsub.s32 0, %v861
        %v863 = vsel %vm857, %v862, %v861
        %vm864 = vcmp.lt.s32.totalorder %v814, 0
        %v865 = vsub.s32 0, %v814
        %v866 = vsel %vm864, %v865, %v814
        %v867 = vshrl.u32 %v866, 3
        %v868 = vand.u32 %v866, 7
        %v869 = vsub.s32 0, %v868
        %v870 = vsel %vm864, %v869, %v868
        %vm871 = vcmp.ne.s32.totalorder %v821, 0
        %vm872 = vcmp.ne.s32.totalorder %v828, 0
        %vm873 = vcmp.ne.s32.totalorder %v835, 0
        %vm874 = vcmp.ne.s32.totalorder %v842, 0
        %vm875 = vcmp.ne.s32.totalorder %v849, 0
        %vm876 = vcmp.ne.s32.totalorder %v856, 0
        %vm877 = vcmp.ne.s32.totalorder %v863, 0
        %vm878 = vcmp.ne.s32.totalorder %v870, 0
        %vm879 = vcmp.lt.s32.totalorder %v821, 0
        %vm880 = vcmp.lt.s32.totalorder %v828, 0
        %vm881 = vcmp.lt.s32.totalorder %v835, 0
        %vm882 = vcmp.lt.s32.totalorder %v842, 0
        %vm883 = vcmp.lt.s32.totalorder %v849, 0
        %vm884 = vcmp.lt.s32.totalorder %v856, 0
        %vm885 = vcmp.lt.s32.totalorder %v863, 0
        %vm886 = vcmp.lt.s32.totalorder %v870, 0
        %vm887 = vmand %vm879, %vm871
        %vm888 = vmand %vm880, %vm872
        %vm889 = vmand %vm881, %vm873
        %vm890 = vmand %vm882, %vm874
        %vm891 = vmand %vm883, %vm875
        %vm892 = vmand %vm884, %vm876
        %vm893 = vmand %vm885, %vm877
        %vm894 = vmand %vm886, %vm878
        %v895 = vadd.s32 %v821, 8
        %v896 = vadd.s32 %v828, 8
        %v897 = vadd.s32 %v835, 8
        %v898 = vadd.s32 %v842, 8
        %v899 = vadd.s32 %v849, 8
        %v900 = vadd.s32 %v856, 8
        %v901 = vadd.s32 %v863, 8
        %v902 = vadd.s32 %v870, 8
        %v903 = vsel %vm887, %v895, %v821
        %v904 = vsel %vm888, %v896, %v828
        %v905 = vsel %vm889, %v897, %v835
        %v906 = vsel %vm890, %v898, %v842
        %v907 = vsel %vm891, %v899, %v849
        %v908 = vsel %vm892, %v900, %v856
        %v909 = vsel %vm893, %v901, %v863
        %v910 = vsel %vm894, %v902, %v870
        %vm911 = vcmp.lt.s32.totalorder %v805, 32
        %vm912 = vcmp.eq.s32.totalorder %v903, 0
        %vm913 = vcmp.eq.s32.totalorder %v904, 0
        %vm914 = vcmp.eq.s32.totalorder %v905, 0
        %vm915 = vcmp.eq.s32.totalorder %v906, 0
        %vm916 = vcmp.eq.s32.totalorder %v907, 0
        %vm917 = vcmp.eq.s32.totalorder %v908, 0
        %vm918 = vcmp.eq.s32.totalorder %v909, 0
        %vm919 = vcmp.eq.s32.totalorder %v910, 0
        %vm920 = vmand %vm911, %vm912
        %vm921 = vmand %vm911, %vm913
        %vm922 = vmand %vm911, %vm914
        %vm923 = vmand %vm911, %vm915
        %vm924 = vmand %vm911, %vm916
        %vm925 = vmand %vm911, %vm917
        %vm926 = vmand %vm911, %vm918
        %vm927 = vmand %vm911, %vm919
        %vm928 = vcmp.ge.s32.totalorder %v805, 64
        %vm929 = vcmp.eq.s32.totalorder %v903, 7
        %vm930 = vcmp.eq.s32.totalorder %v904, 7
        %vm931 = vcmp.eq.s32.totalorder %v905, 7
        %vm932 = vcmp.eq.s32.totalorder %v906, 7
        %vm933 = vcmp.eq.s32.totalorder %v907, 7
        %vm934 = vcmp.eq.s32.totalorder %v908, 7
        %vm935 = vcmp.eq.s32.totalorder %v909, 7
        %vm936 = vcmp.eq.s32.totalorder %v910, 7
        %vm937 = vmand %vm928, %vm929
        %vm938 = vmand %vm928, %vm930
        %vm939 = vmand %vm928, %vm931
        %vm940 = vmand %vm928, %vm932
        %vm941 = vmand %vm928, %vm933
        %vm942 = vmand %vm928, %vm934
        %vm943 = vmand %vm928, %vm935
        %vm944 = vmand %vm928, %vm936
        %vm945 = vmor %vm920, %vm937
        %vm946 = vmor %vm921, %vm938
        %vm947 = vmor %vm922, %vm939
        %vm948 = vmor %vm923, %vm940
        %vm949 = vmor %vm924, %vm941
        %vm950 = vmor %vm925, %vm942
        %vm951 = vmor %vm926, %vm943
        %vm952 = vmor %vm927, %vm944
        %vm953 = vmxor %vm945, 1
        %vm954 = vmxor %vm946, 1
        %vm955 = vmxor %vm947, 1
        %vm956 = vmxor %vm948, 1
        %vm957 = vmxor %vm949, 1
        %vm958 = vmxor %vm950, 1
        %vm959 = vmxor %vm951, 1
        %vm960 = vmxor %vm952, 1
        %vm961 = vcmask 523264
        %962 = vst.msk [vmem:[#allocation3] sm:$0xff] %vm961, 0.0
        %963 = vst.msk [vmem:[#allocation3 + $0x8] sm:$0xff] %vm961, 0.0
        %964 = vst.msk [vmem:[#allocation3 + $0x10] sm:$0xff] %vm961, 0.0
        %965 = vst.msk [vmem:[#allocation3 + $0x18] sm:$0xff] %vm961, 0.0
        %966 = vst.msk [vmem:[#allocation3 + $0x20] sm:$0xff] %vm961, 0.0
        %967 = vst.msk [vmem:[#allocation3 + $0x28] sm:$0xff] %vm961, 0.0
        %968 = vst.msk [vmem:[#allocation3 + $0x30] sm:$0xff] %vm961, 0.0
        %969 = vst.msk [vmem:[#allocation3 + $0x38] sm:$0xff] %vm961, 0.0
        %v970 = vld [vmem:[#allocation2 + $0x8] sm:$0xff]
        %v971 = vld [vmem:[#allocation2 + $0x10] sm:$0xff]
        %v972 = vld [vmem:[#allocation2 + $0x18] sm:$0xff]
        %v973 = vld [vmem:[#allocation2 + $0x20] sm:$0xff]
        %v974 = vld [vmem:[#allocation2 + $0x28] sm:$0xff]
        %v975 = vld [vmem:[#allocation2 + $0x30] sm:$0xff]
        %v976 = vld [vmem:[#allocation2 + $0x38] sm:$0xff]
        %v977 = vld [vmem:[#allocation2 + $0x40] sm:$0xff]
        %v978 = vsel %vm953, %v970, 0.0
        %v979 = vsel %vm954, %v971, 0.0
        %v980 = vsel %vm955, %v972, 0.0
        %v981 = vsel %vm956, %v973, 0.0
        %v982 = vsel %vm957, %v974, 0.0
        %v983 = vsel %vm958, %v975, 0.0
        %v984 = vsel %vm959, %v976, 0.0
        %v985 = vsel %vm960, %v977, 0.0
        %v986 = vpack.c.bf16 %v979, %v978
        %v987 = vpack.c.bf16 %v981, %v980
        %v988 = vpack.c.bf16 %v983, %v982
        %v989 = vpack.c.bf16 %v985, %v984
        %v990 = vld [vmem:[#allocation3] sm:$0xff]
        %v991 = vld [vmem:[#allocation3 + $0x8] sm:$0xff]
        %v992 = vld [vmem:[#allocation3 + $0x10] sm:$0xff]
        %v993 = vld [vmem:[#allocation3 + $0x18] sm:$0xff]
        %v994 = vld [vmem:[#allocation3 + $0x20] sm:$0xff]
        %v995 = vld [vmem:[#allocation3 + $0x28] sm:$0xff]
        %v996 = vld [vmem:[#allocation3 + $0x30] sm:$0xff]
        %v997 = vld [vmem:[#allocation3 + $0x38] sm:$0xff]
        %v998 = vld [vmem:[%s3] sm:$0xf]
        %v999 = vld [vmem:[%s3 + $0x4] sm:$0xf]
        %v1000 = vld [vmem:[%s3 + $0x8] sm:$0xf]
        %v1001 = vld [vmem:[%s3 + $0xc] sm:$0xf]
        %v1002 = vld [vmem:[%s3 + $0x10] sm:$0xf]
        %v1003 = vld [vmem:[%s3 + $0x14] sm:$0xf]
        %v1004 = vld [vmem:[%s3 + $0x18] sm:$0xf]
        %v1005 = vld [vmem:[%s3 + $0x1c] sm:$0xf]
        %v1006 = vld [vmem:[%s3 + $0x20] sm:$0xf]
        %v1007 = vld [vmem:[%s3 + $0x24] sm:$0xf]
        %v1008 = vld [vmem:[%s3 + $0x28] sm:$0xf]
        %v1009 = vld [vmem:[%s3 + $0x2c] sm:$0xf]
        %v1022 = vunpack.c.l.b16 %v998
        %v1023 = vunpack.c.l.b16 %v999
        %v1024 = vunpack.c.l.b16 %v1000
        %v1025 = vunpack.c.l.b16 %v1001
        %v1026 = vunpack.c.l.b16 %v1002
        %v1027 = vunpack.c.l.b16 %v1003
        %v1028 = vunpack.c.l.b16 %v1004
        %v1029 = vunpack.c.l.b16 %v1005
        %v1030 = vunpack.c.l.b16 %v1006
        %v1031 = vunpack.c.l.b16 %v1007
        %v1032 = vunpack.c.l.b16 %v1008
        %v1033 = vunpack.c.l.b16 %v1009
        %v1034 = vpack.c.b16 %v1023, %v1022
        %v1035 = vpack.c.b16 %v1025, %v1024
        %v1036 = vpack.c.b16 %v1027, %v1026
        %v1037 = vpack.c.b16 %v1029, %v1028
        %v1038 = vpack.c.b16 %v1031, %v1030
        %v1039 = vpack.c.b16 %v1033, %v1032
        %v1047 = vsel %vm708, %v986, 0
        %v1050 = vsel %vm708, %v987, 0
        %v1053 = vsel %vm708, %v988, 0
        %v1056 = vsel %vm708, %v989, 0
        %1058 = vmatprep.subr.bf16.mxu0 0
        %1059 = vmatpush1.bf16.msra.mxu0 %v1034
        %1060 = vmatprep.subr.bf16.mxu0 0
        %1061 = vmatpush1.bf16.msra.mxu0 %v1035
        %1062 = vmatprep.subr.bf16.mxu0 0
        %1063 = vmatpush1.bf16.msra.mxu0 %v1036
        %1064 = vmatprep.subr.bf16.mxu0 0
        %1065 = vmatpush1.bf16.msra.mxu0 %v1037
        %1066 = vmatprep.subr.bf16.mxu0 0
        %1067 = vmatpush1.bf16.msra.mxu0 %v1038
        %1068 = vmatprep.subr.bf16.mxu0 0
        %1069 = vmatpush1.bf16.msra.mxu0 %v1039
        %1070 = vmatprep.subr.bf16.mxu0 0
        %1071 = vmatpush1.bf16.msra.mxu0 0
        %1072 = vmatprep.subr.bf16.mxu0 0
        %1073 = vmatpush1.bf16.msra.mxu0 0
        %1074 = vmatprep.subr.bf16.mxu0 0
        %1075 = vmatpush1.bf16.msra.mxu0 0
        %1076 = vmatprep.subr.bf16.mxu0 0
        %1077 = vmatpush1.bf16.msra.mxu0 0
        %1078 = vmatprep.subr.bf16.mxu0 0
        %1079 = vmatpush1.bf16.msra.mxu0 0
        %1080 = vmatprep.subr.bf16.mxu0 0
        %1081 = vmatpush1.bf16.msra.mxu0 0
        %1082 = vmatprep.subr.bf16.mxu0 0
        %1083 = vmatpush1.bf16.msra.mxu0 0
        %1084 = vmatprep.subr.bf16.mxu0 0
        %1085 = vmatpush1.bf16.msra.mxu0 0
        %1086 = vmatprep.subr.bf16.mxu0 0
        %1087 = vmatpush1.bf16.msra.mxu0 0
        %1088 = vmatprep.subr.bf16.mxu0 0
        %1089 = vmatpush1.bf16.msra.mxu0 0
        %1090 = vmatprep.mubr.bf16.mxu0 0
        %1091 = vmatmul.mubr.bf16.gmra.mrb[0].mxu0 %v1047
        %v1092 = vpop.f32.mrb[0].mxu0
        %v1093 = vadd.f32 0.0, %v1092
        %v1094 = vpop.f32.mrb[0].mxu0
        %v1095 = vpop.f32.mrb[0].mxu0
        %v1096 = vadd.f32 0.0, %v1095
        %v1097 = vpop.f32.mrb[0].mxu0
        %1098 = vmatprep.mubr.bf16.mxu0 0
        %1099 = vmatmul.mubr.bf16.gmra.mrb[0].mxu0 %v1050
        %v1100 = vpop.f32.mrb[0].mxu0
        %v1101 = vadd.f32 0.0, %v1100
        %v1102 = vpop.f32.mrb[0].mxu0
        %v1103 = vpop.f32.mrb[0].mxu0
        %v1104 = vadd.f32 0.0, %v1103
        %v1105 = vpop.f32.mrb[0].mxu0
        %1106 = vmatprep.mubr.bf16.mxu0 0
        %1107 = vmatmul.mubr.bf16.gmra.mrb[0].mxu0 %v1053
        %v1108 = vpop.f32.mrb[0].mxu0
        %v1109 = vadd.f32 0.0, %v1108
        %v1110 = vpop.f32.mrb[0].mxu0
        %v1111 = vpop.f32.mrb[0].mxu0
        %v1112 = vadd.f32 0.0, %v1111
        %v1113 = vpop.f32.mrb[0].mxu0
        %1114 = vmatprep.mubr.bf16.mxu0 0
        %1115 = vmatmul.mubr.bf16.gmra.mrb[0].mxu0 %v1056
        %v1116 = vpop.f32.mrb[0].mxu0
        %v1117 = vadd.f32 0.0, %v1116
        %v1118 = vpop.f32.mrb[0].mxu0
        %v1119 = vpop.f32.mrb[0].mxu0
        %v1120 = vadd.f32 0.0, %v1119
        %v1121 = vpop.f32.mrb[0].mxu0
        %1122 = vdwg.mxu0
        %v1123 = vadd.f32 %v990, %v1093
        %v1124 = vadd.f32 %v991, %v1096
        %v1125 = vadd.f32 %v992, %v1101
        %v1126 = vadd.f32 %v993, %v1104
        %v1127 = vadd.f32 %v994, %v1109
        %v1128 = vadd.f32 %v995, %v1112
        %v1129 = vadd.f32 %v996, %v1117
        %v1130 = vadd.f32 %v997, %v1120
        %1131 = vst.msk [vmem:[#allocation3] sm:$0xff] %vm961, %v1123
        %1132 = vst.msk [vmem:[#allocation3 + $0x8] sm:$0xff] %vm961, %v1124
        %1133 = vst.msk [vmem:[#allocation3 + $0x10] sm:$0xff] %vm961, %v1125
        %1134 = vst.msk [vmem:[#allocation3 + $0x18] sm:$0xff] %vm961, %v1126
        %1135 = vst.msk [vmem:[#allocation3 + $0x20] sm:$0xff] %vm961, %v1127
        %1136 = vst.msk [vmem:[#allocation3 + $0x28] sm:$0xff] %vm961, %v1128
        %1137 = vst.msk [vmem:[#allocation3 + $0x30] sm:$0xff] %vm961, %v1129
        %1138 = vst.msk [vmem:[#allocation3 + $0x38] sm:$0xff] %vm961, %v1130
        %v1139 = vld [vmem:[#allocation2 + $0x10] sm:$0xff]
        %v1140 = vld [vmem:[#allocation2 + $0x18] sm:$0xff]
        %v1141 = vld [vmem:[#allocation2 + $0x20] sm:$0xff]
        %v1142 = vld [vmem:[#allocation2 + $0x28] sm:$0xff]
        %v1143 = vld [vmem:[#allocation2 + $0x30] sm:$0xff]
        %v1144 = vld [vmem:[#allocation2 + $0x38] sm:$0xff]
        %v1145 = vld [vmem:[#allocation2 + $0x40] sm:$0xff]
        %v1146 = vld [vmem:[#allocation2 + $0x48] sm:$0xff]
        %v1147 = vsel %vm953, %v1139, 0.0
        %v1148 = vsel %vm954, %v1140, 0.0
        %v1149 = vsel %vm955, %v1141, 0.0
        %v1150 = vsel %vm956, %v1142, 0.0
        %v1151 = vsel %vm957, %v1143, 0.0
        %v1152 = vsel %vm958, %v1144, 0.0
        %v1153 = vsel %vm959, %v1145, 0.0
        %v1154 = vsel %vm960, %v1146, 0.0
        %v1155 = vpack.c.bf16 %v1148, %v1147
        %v1156 = vpack.c.bf16 %v1150, %v1149
        %v1157 = vpack.c.bf16 %v1152, %v1151
        %v1158 = vpack.c.bf16 %v1154, %v1153
        %v1159 = vld [vmem:[#allocation3] sm:$0xff]
        %v1160 = vld [vmem:[#allocation3 + $0x8] sm:$0xff]
        %v1161 = vld [vmem:[#allocation3 + $0x10] sm:$0xff]
        %v1162 = vld [vmem:[#allocation3 + $0x18] sm:$0xff]
        %v1163 = vld [vmem:[#allocation3 + $0x20] sm:$0xff]
        %v1164 = vld [vmem:[#allocation3 + $0x28] sm:$0xff]
        %v1165 = vld [vmem:[#allocation3 + $0x30] sm:$0xff]
        %v1166 = vld [vmem:[#allocation3 + $0x38] sm:$0xff]
        %s1167 = scalar_lea.vmem %s3, 48
        %v1168 = vld [vmem:[%s1167] sm:$0xf]
        %v1169 = vld [vmem:[%s1167 + $0x4] sm:$0xf]
        %v1170 = vld [vmem:[%s1167 + $0x8] sm:$0xf]
        %v1171 = vld [vmem:[%s1167 + $0xc] sm:$0xf]
        %v1172 = vld [vmem:[%s1167 + $0x10] sm:$0xf]
        %v1173 = vld [vmem:[%s1167 + $0x14] sm:$0xf]
        %v1174 = vld [vmem:[%s1167 + $0x18] sm:$0xf]
        %v1175 = vld [vmem:[%s1167 + $0x1c] sm:$0xf]
        %v1176 = vld [vmem:[%s1167 + $0x20] sm:$0xf]
        %v1177 = vld [vmem:[%s1167 + $0x24] sm:$0xf]
        %v1178 = vld [vmem:[%s1167 + $0x28] sm:$0xf]
        %v1179 = vld [vmem:[%s1167 + $0x2c] sm:$0xf]
        %v1192 = vunpack.c.l.b16 %v1168
        %v1193 = vunpack.c.l.b16 %v1169
        %v1194 = vunpack.c.l.b16 %v1170
        %v1195 = vunpack.c.l.b16 %v1171
        %v1196 = vunpack.c.l.b16 %v1172
        %v1197 = vunpack.c.l.b16 %v1173
        %v1198 = vunpack.c.l.b16 %v1174
        %v1199 = vunpack.c.l.b16 %v1175
        %v1200 = vunpack.c.l.b16 %v1176
        %v1201 = vunpack.c.l.b16 %v1177
        %v1202 = vunpack.c.l.b16 %v1178
        %v1203 = vunpack.c.l.b16 %v1179
        %v1204 = vpack.c.b16 %v1193, %v1192
        %v1205 = vpack.c.b16 %v1195, %v1194
        %v1206 = vpack.c.b16 %v1197, %v1196
        %v1207 = vpack.c.b16 %v1199, %v1198
        %v1208 = vpack.c.b16 %v1201, %v1200
        %v1209 = vpack.c.b16 %v1203, %v1202
        %v1217 = vsel %vm708, %v1155, 0
        %v1220 = vsel %vm708, %v1156, 0
        %v1223 = vsel %vm708, %v1157, 0
        %v1226 = vsel %vm708, %v1158, 0
        %1228 = vmatprep.subr.bf16.mxu0 0
        %1229 = vmatpush1.bf16.msra.mxu0 %v1204
        %1230 = vmatprep.subr.bf16.mxu0 0
        %1231 = vmatpush1.bf16.msra.mxu0 %v1205
        %1232 = vmatprep.subr.bf16.mxu0 0
        %1233 = vmatpush1.bf16.msra.mxu0 %v1206
        %1234 = vmatprep.subr.bf16.mxu0 0
        %1235 = vmatpush1.bf16.msra.mxu0 %v1207
        %1236 = vmatprep.subr.bf16.mxu0 0
        %1237 = vmatpush1.bf16.msra.mxu0 %v1208
        %1238 = vmatprep.subr.bf16.mxu0 0
        %1239 = vmatpush1.bf16.msra.mxu0 %v1209
        %1240 = vmatprep.subr.bf16.mxu0 0
        %1241 = vmatpush1.bf16.msra.mxu0 0
        %1242 = vmatprep.subr.bf16.mxu0 0
        %1243 = vmatpush1.bf16.msra.mxu0 0
        %1244 = vmatprep.subr.bf16.mxu0 0
        %1245 = vmatpush1.bf16.msra.mxu0 0
        %1246 = vmatprep.subr.bf16.mxu0 0
        %1247 = vmatpush1.bf16.msra.mxu0 0
        %1248 = vmatprep.subr.bf16.mxu0 0
        %1249 = vmatpush1.bf16.msra.mxu0 0
        %1250 = vmatprep.subr.bf16.mxu0 0
        %1251 = vmatpush1.bf16.msra.mxu0 0
        %1252 = vmatprep.subr.bf16.mxu0 0
        %1253 = vmatpush1.bf16.msra.mxu0 0
        %1254 = vmatprep.subr.bf16.mxu0 0
        %1255 = vmatpush1.bf16.msra.mxu0 0
        %1256 = vmatprep.subr.bf16.mxu0 0
        %1257 = vmatpush1.bf16.msra.mxu0 0
        %1258 = vmatprep.subr.bf16.mxu0 0
        %1259 = vmatpush1.bf16.msra.mxu0 0
        %1260 = vmatprep.mubr.bf16.mxu0 0
        %1261 = vmatmul.mubr.bf16.gmra.mrb[0].mxu0 %v1217
        %v1262 = vpop.f32.mrb[0].mxu0
        %v1263 = vadd.f32 0.0, %v1262
        %v1264 = vpop.f32.mrb[0].mxu0
        %v1265 = vpop.f32.mrb[0].mxu0
        %v1266 = vadd.f32 0.0, %v1265
        %v1267 = vpop.f32.mrb[0].mxu0
        %1268 = vmatprep.mubr.bf16.mxu0 0
        %1269 = vmatmul.mubr.bf16.gmra.mrb[0].mxu0 %v1220
        %v1270 = vpop.f32.mrb[0].mxu0
        %v1271 = vadd.f32 0.0, %v1270
        %v1272 = vpop.f32.mrb[0].mxu0
        %v1273 = vpop.f32.mrb[0].mxu0
        %v1274 = vadd.f32 0.0, %v1273
        %v1275 = vpop.f32.mrb[0].mxu0
        %1276 = vmatprep.mubr.bf16.mxu0 0
        %1277 = vmatmul.mubr.bf16.gmra.mrb[0].mxu0 %v1223
        %v1278 = vpop.f32.mrb[0].mxu0
        %v1279 = vadd.f32 0.0, %v1278
        %v1280 = vpop.f32.mrb[0].mxu0
        %v1281 = vpop.f32.mrb[0].mxu0
        %v1282 = vadd.f32 0.0, %v1281
        %v1283 = vpop.f32.mrb[0].mxu0
        %1284 = vmatprep.mubr.bf16.mxu0 0
        %1285 = vmatmul.mubr.bf16.gmra.mrb[0].mxu0 %v1226
        %v1286 = vpop.f32.mrb[0].mxu0
        %v1287 = vadd.f32 0.0, %v1286
        %v1288 = vpop.f32.mrb[0].mxu0
        %v1289 = vpop.f32.mrb[0].mxu0
        %v1290 = vadd.f32 0.0, %v1289
        %v1291 = vpop.f32.mrb[0].mxu0
        %1292 = vdwg.mxu0
        %v1293 = vadd.f32 %v1159, %v1263
        %v1294 = vadd.f32 %v1160, %v1266
        %v1295 = vadd.f32 %v1161, %v1271
        %v1296 = vadd.f32 %v1162, %v1274
        %v1297 = vadd.f32 %v1163, %v1279
        %v1298 = vadd.f32 %v1164, %v1282
        %v1299 = vadd.f32 %v1165, %v1287
        %v1300 = vadd.f32 %v1166, %v1290
        %1301 = vst.msk [vmem:[#allocation3] sm:$0xff] %vm961, %v1293
        %1302 = vst.msk [vmem:[#allocation3 + $0x8] sm:$0xff] %vm961, %v1294
        %1303 = vst.msk [vmem:[#allocation3 + $0x10] sm:$0xff] %vm961, %v1295
        %1304 = vst.msk [vmem:[#allocation3 + $0x18] sm:$0xff] %vm961, %v1296
        %1305 = vst.msk [vmem:[#allocation3 + $0x20] sm:$0xff] %vm961, %v1297
        %1306 = vst.msk [vmem:[#allocation3 + $0x28] sm:$0xff] %vm961, %v1298
        %1307 = vst.msk [vmem:[#allocation3 + $0x30] sm:$0xff] %vm961, %v1299
        %1308 = vst.msk [vmem:[#allocation3 + $0x38] sm:$0xff] %vm961, %v1300
        %v1309 = vld [vmem:[#allocation2 + $0x18] sm:$0xff]
        %v1310 = vld [vmem:[#allocation2 + $0x20] sm:$0xff]
        %v1311 = vld [vmem:[#allocation2 + $0x28] sm:$0xff]
        %v1312 = vld [vmem:[#allocation2 + $0x30] sm:$0xff]
        %v1313 = vld [vmem:[#allocation2 + $0x38] sm:$0xff]
        %v1314 = vld [vmem:[#allocation2 + $0x40] sm:$0xff]
        %v1315 = vld [vmem:[#allocation2 + $0x48] sm:$0xff]
        %v1316 = vld [vmem:[#allocation2 + $0x50] sm:$0xff]
        %v1317 = vsel %vm953, %v1309, 0.0
        %v1318 = vsel %vm954, %v1310, 0.0
        %v1319 = vsel %vm955, %v1311, 0.0
        %v1320 = vsel %vm956, %v1312, 0.0
        %v1321 = vsel %vm957, %v1313, 0.0
        %v1322 = vsel %vm958, %v1314, 0.0
        %v1323 = vsel %vm959, %v1315, 0.0
        %v1324 = vsel %vm960, %v1316, 0.0
        %v1325 = vpack.c.bf16 %v1318, %v1317
        %v1326 = vpack.c.bf16 %v1320, %v1319
        %v1327 = vpack.c.bf16 %v1322, %v1321
        %v1328 = vpack.c.bf16 %v1324, %v1323
        %v1329 = vld [vmem:[#allocation3] sm:$0xff]
        %v1330 = vld [vmem:[#allocation3 + $0x8] sm:$0xff]
        %v1331 = vld [vmem:[#allocation3 + $0x10] sm:$0xff]
        %v1332 = vld [vmem:[#allocation3 + $0x18] sm:$0xff]
        %v1333 = vld [vmem:[#allocation3 + $0x20] sm:$0xff]
        %v1334 = vld [vmem:[#allocation3 + $0x28] sm:$0xff]
        %v1335 = vld [vmem:[#allocation3 + $0x30] sm:$0xff]
        %v1336 = vld [vmem:[#allocation3 + $0x38] sm:$0xff]
        %s1337 = scalar_lea.vmem %s3, 96
        %v1338 = vld [vmem:[%s1337] sm:$0xf]
        %v1339 = vld [vmem:[%s1337 + $0x4] sm:$0xf]
        %v1340 = vld [vmem:[%s1337 + $0x8] sm:$0xf]
        %v1341 = vld [vmem:[%s1337 + $0xc] sm:$0xf]
        %v1342 = vld [vmem:[%s1337 + $0x10] sm:$0xf]
        %v1343 = vld [vmem:[%s1337 + $0x14] sm:$0xf]
        %v1344 = vld [vmem:[%s1337 + $0x18] sm:$0xf]
        %v1345 = vld [vmem:[%s1337 + $0x1c] sm:$0xf]
        %v1346 = vld [vmem:[%s1337 + $0x20] sm:$0xf]
        %v1347 = vld [vmem:[%s1337 + $0x24] sm:$0xf]
        %v1348 = vld [vmem:[%s1337 + $0x28] sm:$0xf]
        %v1349 = vld [vmem:[%s1337 + $0x2c] sm:$0xf]
        %v1362 = vunpack.c.l.b16 %v1338
        %v1363 = vunpack.c.l.b16 %v1339
        %v1364 = vunpack.c.l.b16 %v1340
        %v1365 = vunpack.c.l.b16 %v1341
        %v1366 = vunpack.c.l.b16 %v1342
        %v1367 = vunpack.c.l.b16 %v1343
        %v1368 = vunpack.c.l.b16 %v1344
        %v1369 = vunpack.c.l.b16 %v1345
        %v1370 = vunpack.c.l.b16 %v1346
        %v1371 = vunpack.c.l.b16 %v1347
        %v1372 = vunpack.c.l.b16 %v1348
        %v1373 = vunpack.c.l.b16 %v1349
        %v1374 = vpack.c.b16 %v1363, %v1362
        %v1375 = vpack.c.b16 %v1365, %v1364
        %v1376 = vpack.c.b16 %v1367, %v1366
        %v1377 = vpack.c.b16 %v1369, %v1368
        %v1378 = vpack.c.b16 %v1371, %v1370
        %v1379 = vpack.c.b16 %v1373, %v1372
        %v1387 = vsel %vm708, %v1325, 0
        %v1390 = vsel %vm708, %v1326, 0
        %v1393 = vsel %vm708, %v1327, 0
        %v1396 = vsel %vm708, %v1328, 0
        %1398 = vmatprep.subr.bf16.mxu0 0
        %1399 = vmatpush1.bf16.msra.mxu0 %v1374
        %1400 = vmatprep.subr.bf16.mxu0 0
        %1401 = vmatpush1.bf16.msra.mxu0 %v1375
        %1402 = vmatprep.subr.bf16.mxu0 0
        %1403 = vmatpush1.bf16.msra.mxu0 %v1376
        %1404 = vmatprep.subr.bf16.mxu0 0
        %1405 = vmatpush1.bf16.msra.mxu0 %v1377
        %1406 = vmatprep.subr.bf16.mxu0 0
        %1407 = vmatpush1.bf16.msra.mxu0 %v1378
        %1408 = vmatprep.subr.bf16.mxu0 0
        %1409 = vmatpush1.bf16.msra.mxu0 %v1379
        %1410 = vmatprep.subr.bf16.mxu0 0
        %1411 = vmatpush1.bf16.msra.mxu0 0
        %1412 = vmatprep.subr.bf16.mxu0 0
        %1413 = vmatpush1.bf16.msra.mxu0 0
        %1414 = vmatprep.subr.bf16.mxu0 0
        %1415 = vmatpush1.bf16.msra.mxu0 0
        %1416 = vmatprep.subr.bf16.mxu0 0
        %1417 = vmatpush1.bf16.msra.mxu0 0
        %1418 = vmatprep.subr.bf16.mxu0 0
        %1419 = vmatpush1.bf16.msra.mxu0 0
        %1420 = vmatprep.subr.bf16.mxu0 0
        %1421 = vmatpush1.bf16.msra.mxu0 0
        %1422 = vmatprep.subr.bf16.mxu0 0
        %1423 = vmatpush1.bf16.msra.mxu0 0
        %1424 = vmatprep.subr.bf16.mxu0 0
        %1425 = vmatpush1.bf16.msra.mxu0 0
        %1426 = vmatprep.subr.bf16.mxu0 0
        %1427 = vmatpush1.bf16.msra.mxu0 0
        %1428 = vmatprep.subr.bf16.mxu0 0
        %1429 = vmatpush1.bf16.msra.mxu0 0
        %1430 = vmatprep.mubr.bf16.mxu0 0
        %1431 = vmatmul.mubr.bf16.gmra.mrb[0].mxu0 %v1387
        %v1432 = vpop.f32.mrb[0].mxu0
        %v1433 = vadd.f32 0.0, %v1432
        %v1434 = vpop.f32.mrb[0].mxu0
        %v1435 = vpop.f32.mrb[0].mxu0
        %v1436 = vadd.f32 0.0, %v1435
        %v1437 = vpop.f32.mrb[0].mxu0
        %1438 = vmatprep.mubr.bf16.mxu0 0
        %1439 = vmatmul.mubr.bf16.gmra.mrb[0].mxu0 %v1390
        %v1440 = vpop.f32.mrb[0].mxu0
        %v1441 = vadd.f32 0.0, %v1440
        %v1442 = vpop.f32.mrb[0].mxu0
        %v1443 = vpop.f32.mrb[0].mxu0
        %v1444 = vadd.f32 0.0, %v1443
        %v1445 = vpop.f32.mrb[0].mxu0
        %1446 = vmatprep.mubr.bf16.mxu0 0
        %1447 = vmatmul.mubr.bf16.gmra.mrb[0].mxu0 %v1393
        %v1448 = vpop.f32.mrb[0].mxu0
        %v1449 = vadd.f32 0.0, %v1448
        %v1450 = vpop.f32.mrb[0].mxu0
        %v1451 = vpop.f32.mrb[0].mxu0
        %v1452 = vadd.f32 0.0, %v1451
        %v1453 = vpop.f32.mrb[0].mxu0
        %1454 = vmatprep.mubr.bf16.mxu0 0
        %1455 = vmatmul.mubr.bf16.gmra.mrb[0].mxu0 %v1396
        %v1456 = vpop.f32.mrb[0].mxu0
        %v1457 = vadd.f32 0.0, %v1456
        %v1458 = vpop.f32.mrb[0].mxu0
        %v1459 = vpop.f32.mrb[0].mxu0
        %v1460 = vadd.f32 0.0, %v1459
        %v1461 = vpop.f32.mrb[0].mxu0
        %1462 = vdwg.mxu0
        %v1463 = vadd.f32 %v1329, %v1433
        %v1464 = vadd.f32 %v1330, %v1436
        %v1465 = vadd.f32 %v1331, %v1441
        %v1466 = vadd.f32 %v1332, %v1444
        %v1467 = vadd.f32 %v1333, %v1449
        %v1468 = vadd.f32 %v1334, %v1452
        %v1469 = vadd.f32 %v1335, %v1457
        %v1470 = vadd.f32 %v1336, %v1460
        %1471 = vst.msk [vmem:[#allocation3] sm:$0xff] %vm961, %v1463
        %1472 = vst.msk [vmem:[#allocation3 + $0x8] sm:$0xff] %vm961, %v1464
        %1473 = vst.msk [vmem:[#allocation3 + $0x10] sm:$0xff] %vm961, %v1465
        %1474 = vst.msk [vmem:[#allocation3 + $0x18] sm:$0xff] %vm961, %v1466
        %1475 = vst.msk [vmem:[#allocation3 + $0x20] sm:$0xff] %vm961, %v1467
        %1476 = vst.msk [vmem:[#allocation3 + $0x28] sm:$0xff] %vm961, %v1468
        %1477 = vst.msk [vmem:[#allocation3 + $0x30] sm:$0xff] %vm961, %v1469
        %1478 = vst.msk [vmem:[#allocation3 + $0x38] sm:$0xff] %vm961, %v1470
        %v1479 = vld [vmem:[#allocation3] sm:$0xff]
        %v1480 = vld [vmem:[#allocation3 + $0x8] sm:$0xff]
        %v1481 = vmax.f32 %v1479, %v1480
        %v1483 = vrot.slane %v1481, 1
        %v1485 = vmax.f32 %v1481, %v1483
        %v1486 = vld [vmem:[%s4] sm:$0x1]
        %v1487 = vadd.f32 %v1485, %v1486
        %v1488 = vmax.f32 %v1487, 0.0
        %v1489 = vpack.c.bf16 %v1488, %v1488
        %vm1490 = vcmask 516096
        %vm1491 = vsmask.f32 256
        %vm1492 = vmand %vm1490, %vm1491
        %v1493 = vld [vmem:[#allocation4] sm:$0x1]
        %v1494 = vsel %vm1492, %v1489, %v1493
        %1495 = vst [vmem:[#allocation4] sm:$0x1] %v1494
        %v1496 = vld [vmem:[%s4] sm:$0x1]
        %v1498 = vlaneseq
        %v1499 = vshrl.u32 %v1498, 7
        %v1500 = vsub.s32 0, %v1499
        %v1501 = vrot.slane %v1496, %v1500
        %v1503 = vadd.f32 %v1485, %v1501
        %v1504 = vmax.f32 %v1503, 0.0
        %v1505 = vpack.c.bf16 %v1504, %v1504
        %v1508 = vunpack.c.l.s4 1966171168
        %v1509 = vunpack.c.0.s8 %v1508
        %v1510 = vlaneseq
        %v1511 = vshrl.u32 %v1510, 7
        %v1512 = vsub.s32 %v1509, %v1511
        %v1513 = vrot.slane %v1505, %v1512
        %v1514 = vcombine.high %v1513, %v1513
        %v1516 = vunpack.c.l.s4 1966171168
        %v1517 = vunpack.c.0.s8 %v1516
        %v1518 = vlaneseq
        %v1519 = vshrl.u32 %v1518, 7
        %v1520 = vsub.s32 %v1517, %v1519
        %v1521 = vrot.slane %v1514, %v1520
        %1522 = vrot.lane.b32.xlu0 %v1521, 64
        %v1523 = vpop.permute.xlu0 %1522
        %vm1525 = vcmask 1040896
        %vm1526 = vmand %vm1525, %vm1491
        %v1527 = vld [vmem:[#allocation4] sm:$0x1]
        %v1528 = vsel %vm1526, %v1523, %v1527
        %1529 = vst [vmem:[#allocation4] sm:$0x1] %v1528
        %v1530 = vld [vmem:[%s4] sm:$0x1]
        %v1532 = vlaneseq
        %v1533 = vshrl.u32 %v1532, 7
        %v1534 = vsub.s32 0, %v1533
        %v1535 = vrot.slane %v1530, %v1534
        %v1537 = vadd.f32 %v1485, %v1535
        %v1538 = vmax.f32 %v1537, 0.0
        %v1539 = vpack.c.bf16 %v1538, %v1538
        %v1542 = vunpack.c.l.s4 1966171168
        %v1543 = vunpack.c.0.s8 %v1542
        %v1544 = vlaneseq
        %v1545 = vshrl.u32 %v1544, 7
        %v1546 = vsub.s32 %v1543, %v1545
        %v1547 = vrot.slane %v1539, %v1546
        %v1549 = vunpack.c.l.s4 1966171168
        %v1550 = vunpack.c.0.s8 %v1549
        %v1551 = vlaneseq
        %v1552 = vshrl.u32 %v1551, 7
        %v1553 = vsub.s32 %v1550, %v1552
        %v1554 = vrot.slane %v1547, %v1553
        %v1555 = vcombine.high %v1554, %v1554
        %v1557 = vld [vmem:[#allocation4 + $0x1] sm:$0x1]
        %v1558 = vsel %vm1492, %v1555, %v1557
        %1559 = vst [vmem:[#allocation4 + $0x1] sm:$0x1] %v1558
        %v1560 = vld [vmem:[%s4] sm:$0x1]
        %v1562 = vlaneseq
        %v1563 = vshrl.u32 %v1562, 7
        %v1564 = vsub.s32 0, %v1563
        %v1565 = vrot.slane %v1560, %v1564
        %v1567 = vadd.f32 %v1485, %v1565
        %v1568 = vmax.f32 %v1567, 0.0
        %v1569 = vpack.c.bf16 %v1568, %v1568
        %v1572 = vunpack.c.l.s4 1966171168
        %v1573 = vunpack.c.0.s8 %v1572
        %v1574 = vlaneseq
        %v1575 = vshrl.u32 %v1574, 7
        %v1576 = vsub.s32 %v1573, %v1575
        %v1577 = vrot.slane %v1569, %v1576
        %v1578 = vcombine.high %v1577, %v1577
        %v1580 = vunpack.c.l.s4 1966171168
        %v1581 = vunpack.c.0.s8 %v1580
        %v1582 = vlaneseq
        %v1583 = vshrl.u32 %v1582, 7
        %v1584 = vsub.s32 %v1581, %v1583
        %v1585 = vrot.slane %v1578, %v1584
        %v1586 = vcombine.high %v1585, %v1585
        %1587 = vrot.lane.b32.xlu0 %v1586, 64
        %v1588 = vpop.permute.xlu0 %1587
        %v1590 = vld [vmem:[#allocation4 + $0x1] sm:$0x1]
        %v1591 = vsel %vm1526, %v1588, %v1590
        %1592 = vst [vmem:[#allocation4 + $0x1] sm:$0x1] %v1591
        %v1593 = vld [vmem:[#allocation3 + $0x10] sm:$0xff]
        %v1594 = vld [vmem:[#allocation3 + $0x18] sm:$0xff]
        %v1595 = vmax.f32 %v1593, %v1594
        %v1597 = vrot.slane %v1595, 1
        %v1599 = vmax.f32 %v1595, %v1597
        %v1600 = vld [vmem:[%s4] sm:$0x1]
        %v1601 = vadd.f32 %v1599, %v1600
        %v1602 = vmax.f32 %v1601, 0.0
        %v1603 = vpack.c.bf16 %v1602, %v1602
        %v1604 = vld [vmem:[#allocation4 + $0x2] sm:$0x1]
        %v1605 = vsel %vm1492, %v1603, %v1604
        %1606 = vst [vmem:[#allocation4 + $0x2] sm:$0x1] %v1605
        %v1607 = vld [vmem:[%s4] sm:$0x1]
        %v1609 = vlaneseq
        %v1610 = vshrl.u32 %v1609, 7
        %v1611 = vsub.s32 0, %v1610
        %v1612 = vrot.slane %v1607, %v1611
        %v1614 = vadd.f32 %v1599, %v1612
        %v1615 = vmax.f32 %v1614, 0.0
        %v1616 = vpack.c.bf16 %v1615, %v1615
        %v1619 = vunpack.c.l.s4 1966171168
        %v1620 = vunpack.c.0.s8 %v1619
        %v1621 = vlaneseq
        %v1622 = vshrl.u32 %v1621, 7
        %v1623 = vsub.s32 %v1620, %v1622
        %v1624 = vrot.slane %v1616, %v1623
        %v1625 = vcombine.high %v1624, %v1624
        %v1627 = vunpack.c.l.s4 1966171168
        %v1628 = vunpack.c.0.s8 %v1627
        %v1629 = vlaneseq
        %v1630 = vshrl.u32 %v1629, 7
        %v1631 = vsub.s32 %v1628, %v1630
        %v1632 = vrot.slane %v1625, %v1631
        %1633 = vrot.lane.b32.xlu0 %v1632, 64
        %v1634 = vpop.permute.xlu0 %1633
        %v1636 = vld [vmem:[#allocation4 + $0x2] sm:$0x1]
        %v1637 = vsel %vm1526, %v1634, %v1636
        %1638 = vst [vmem:[#allocation4 + $0x2] sm:$0x1] %v1637
        %v1639 = vld [vmem:[%s4] sm:$0x1]
        %v1641 = vlaneseq
        %v1642 = vshrl.u32 %v1641, 7
        %v1643 = vsub.s32 0, %v1642
        %v1644 = vrot.slane %v1639, %v1643
        %v1646 = vadd.f32 %v1599, %v1644
        %v1647 = vmax.f32 %v1646, 0.0
        %v1648 = vpack.c.bf16 %v1647, %v1647
        %v1651 = vunpack.c.l.s4 1966171168
        %v1652 = vunpack.c.0.s8 %v1651
        %v1653 = vlaneseq
        %v1654 = vshrl.u32 %v1653, 7
        %v1655 = vsub.s32 %v1652, %v1654
        %v1656 = vrot.slane %v1648, %v1655
        %v1658 = vunpack.c.l.s4 1966171168
        %v1659 = vunpack.c.0.s8 %v1658
        %v1660 = vlaneseq
        %v1661 = vshrl.u32 %v1660, 7
        %v1662 = vsub.s32 %v1659, %v1661
        %v1663 = vrot.slane %v1656, %v1662
        %v1664 = vcombine.high %v1663, %v1663
        %v1666 = vld [vmem:[#allocation4 + $0x3] sm:$0x1]
        %v1667 = vsel %vm1492, %v1664, %v1666
        %1668 = vst [vmem:[#allocation4 + $0x3] sm:$0x1] %v1667
        %v1669 = vld [vmem:[%s4] sm:$0x1]
        %v1671 = vlaneseq
        %v1672 = vshrl.u32 %v1671, 7
        %v1673 = vsub.s32 0, %v1672
        %v1674 = vrot.slane %v1669, %v1673
        %v1676 = vadd.f32 %v1599, %v1674
        %v1677 = vmax.f32 %v1676, 0.0
        %v1678 = vpack.c.bf16 %v1677, %v1677
        %v1681 = vunpack.c.l.s4 1966171168
        %v1682 = vunpack.c.0.s8 %v1681
        %v1683 = vlaneseq
        %v1684 = vshrl.u32 %v1683, 7
        %v1685 = vsub.s32 %v1682, %v1684
        %v1686 = vrot.slane %v1678, %v1685
        %v1687 = vcombine.high %v1686, %v1686
        %v1689 = vunpack.c.l.s4 1966171168
        %v1690 = vunpack.c.0.s8 %v1689
        %v1691 = vlaneseq
        %v1692 = vshrl.u32 %v1691, 7
        %v1693 = vsub.s32 %v1690, %v1692
        %v1694 = vrot.slane %v1687, %v1693
        %v1695 = vcombine.high %v1694, %v1694
        %1696 = vrot.lane.b32.xlu0 %v1695, 64
        %v1697 = vpop.permute.xlu0 %1696
        %v1699 = vld [vmem:[#allocation4 + $0x3] sm:$0x1]
        %v1700 = vsel %vm1526, %v1697, %v1699
        %1701 = vst [vmem:[#allocation4 + $0x3] sm:$0x1] %v1700
        %v1702 = vld [vmem:[#allocation3 + $0x20] sm:$0xff]
        %v1703 = vld [vmem:[#allocation3 + $0x28] sm:$0xff]
        %v1704 = vmax.f32 %v1702, %v1703
        %v1706 = vrot.slane %v1704, 1
        %v1708 = vmax.f32 %v1704, %v1706
        %v1709 = vld [vmem:[%s4] sm:$0x1]
        %v1710 = vadd.f32 %v1708, %v1709
        %v1711 = vmax.f32 %v1710, 0.0
        %v1712 = vpack.c.bf16 %v1711, %v1711
        %v1713 = vld [vmem:[#allocation4 + $0x4] sm:$0x1]
        %v1714 = vsel %vm1492, %v1712, %v1713
        %1715 = vst [vmem:[#allocation4 + $0x4] sm:$0x1] %v1714
        %v1716 = vld [vmem:[%s4] sm:$0x1]
        %v1718 = vlaneseq
        %v1719 = vshrl.u32 %v1718, 7
        %v1720 = vsub.s32 0, %v1719
        %v1721 = vrot.slane %v1716, %v1720
        %v1723 = vadd.f32 %v1708, %v1721
        %v1724 = vmax.f32 %v1723, 0.0
        %v1725 = vpack.c.bf16 %v1724, %v1724
        %v1728 = vunpack.c.l.s4 1966171168
        %v1729 = vunpack.c.0.s8 %v1728
        %v1730 = vlaneseq
        %v1731 = vshrl.u32 %v1730, 7
        %v1732 = vsub.s32 %v1729, %v1731
        %v1733 = vrot.slane %v1725, %v1732
        %v1734 = vcombine.high %v1733, %v1733
        %v1736 = vunpack.c.l.s4 1966171168
        %v1737 = vunpack.c.0.s8 %v1736
        %v1738 = vlaneseq
        %v1739 = vshrl.u32 %v1738, 7
        %v1740 = vsub.s32 %v1737, %v1739
        %v1741 = vrot.slane %v1734, %v1740
        %1742 = vrot.lane.b32.xlu0 %v1741, 64
        %v1743 = vpop.permute.xlu0 %1742
        %v1745 = vld [vmem:[#allocation4 + $0x4] sm:$0x1]
        %v1746 = vsel %vm1526, %v1743, %v1745
        %1747 = vst [vmem:[#allocation4 + $0x4] sm:$0x1] %v1746
        %v1748 = vld [vmem:[%s4] sm:$0x1]
        %v1750 = vlaneseq
        %v1751 = vshrl.u32 %v1750, 7
        %v1752 = vsub.s32 0, %v1751
        %v1753 = vrot.slane %v1748, %v1752
        %v1755 = vadd.f32 %v1708, %v1753
        %v1756 = vmax.f32 %v1755, 0.0
        %v1757 = vpack.c.bf16 %v1756, %v1756
        %v1760 = vunpack.c.l.s4 1966171168
        %v1761 = vunpack.c.0.s8 %v1760
        %v1762 = vlaneseq
        %v1763 = vshrl.u32 %v1762, 7
        %v1764 = vsub.s32 %v1761, %v1763
        %v1765 = vrot.slane %v1757, %v1764
        %v1767 = vunpack.c.l.s4 1966171168
        %v1768 = vunpack.c.0.s8 %v1767
        %v1769 = vlaneseq
        %v1770 = vshrl.u32 %v1769, 7
        %v1771 = vsub.s32 %v1768, %v1770
        %v1772 = vrot.slane %v1765, %v1771
        %v1773 = vcombine.high %v1772, %v1772
        %v1775 = vld [vmem:[#allocation4 + $0x5] sm:$0x1]
        %v1776 = vsel %vm1492, %v1773, %v1775
        %1777 = vst [vmem:[#allocation4 + $0x5] sm:$0x1] %v1776
        %v1778 = vld [vmem:[%s4] sm:$0x1]
        %v1780 = vlaneseq
        %v1781 = vshrl.u32 %v1780, 7
        %v1782 = vsub.s32 0, %v1781
        %v1783 = vrot.slane %v1778, %v1782
        %v1785 = vadd.f32 %v1708, %v1783
        %v1786 = vmax.f32 %v1785, 0.0
        %v1787 = vpack.c.bf16 %v1786, %v1786
        %v1790 = vunpack.c.l.s4 1966171168
        %v1791 = vunpack.c.0.s8 %v1790
        %v1792 = vlaneseq
        %v1793 = vshrl.u32 %v1792, 7
        %v1794 = vsub.s32 %v1791, %v1793
        %v1795 = vrot.slane %v1787, %v1794
        %v1796 = vcombine.high %v1795, %v1795
        %v1798 = vunpack.c.l.s4 1966171168
        %v1799 = vunpack.c.0.s8 %v1798
        %v1800 = vlaneseq
        %v1801 = vshrl.u32 %v1800, 7
        %v1802 = vsub.s32 %v1799, %v1801
        %v1803 = vrot.slane %v1796, %v1802
        %v1804 = vcombine.high %v1803, %v1803
        %1805 = vrot.lane.b32.xlu0 %v1804, 64
        %v1806 = vpop.permute.xlu0 %1805
        %v1808 = vld [vmem:[#allocation4 + $0x5] sm:$0x1]
        %v1809 = vsel %vm1526, %v1806, %v1808
        %1810 = vst [vmem:[#allocation4 + $0x5] sm:$0x1] %v1809
        %v1811 = vld [vmem:[#allocation3 + $0x30] sm:$0xff]
        %v1812 = vld [vmem:[#allocation3 + $0x38] sm:$0xff]
        %v1813 = vmax.f32 %v1811, %v1812
        %v1815 = vrot.slane %v1813, 1
        %v1817 = vmax.f32 %v1813, %v1815
        %v1818 = vld [vmem:[%s4] sm:$0x1]
        %v1819 = vadd.f32 %v1817, %v1818
        %v1820 = vmax.f32 %v1819, 0.0
        %v1821 = vpack.c.bf16 %v1820, %v1820
        %v1822 = vld [vmem:[#allocation4 + $0x6] sm:$0x1]
        %v1823 = vsel %vm1492, %v1821, %v1822
        %1824 = vst [vmem:[#allocation4 + $0x6] sm:$0x1] %v1823
        %v1825 = vld [vmem:[%s4] sm:$0x1]
        %v1827 = vlaneseq
        %v1828 = vshrl.u32 %v1827, 7
        %v1829 = vsub.s32 0, %v1828
        %v1830 = vrot.slane %v1825, %v1829
        %v1832 = vadd.f32 %v1817, %v1830
        %v1833 = vmax.f32 %v1832, 0.0
        %v1834 = vpack.c.bf16 %v1833, %v1833
        %v1837 = vunpack.c.l.s4 1966171168
        %v1838 = vunpack.c.0.s8 %v1837
        %v1839 = vlaneseq
        %v1840 = vshrl.u32 %v1839, 7
        %v1841 = vsub.s32 %v1838, %v1840
        %v1842 = vrot.slane %v1834, %v1841
        %v1843 = vcombine.high %v1842, %v1842
        %v1845 = vunpack.c.l.s4 1966171168
        %v1846 = vunpack.c.0.s8 %v1845
        %v1847 = vlaneseq
        %v1848 = vshrl.u32 %v1847, 7
        %v1849 = vsub.s32 %v1846, %v1848
        %v1850 = vrot.slane %v1843, %v1849
        %1851 = vrot.lane.b32.xlu0 %v1850, 64
        %v1852 = vpop.permute.xlu0 %1851
        %v1854 = vld [vmem:[#allocation4 + $0x6] sm:$0x1]
        %v1855 = vsel %vm1526, %v1852, %v1854
        %1856 = vst [vmem:[#allocation4 + $0x6] sm:$0x1] %v1855
        %v1857 = vld [vmem:[%s4] sm:$0x1]
        %v1859 = vlaneseq
        %v1860 = vshrl.u32 %v1859, 7
        %v1861 = vsub.s32 0, %v1860
        %v1862 = vrot.slane %v1857, %v1861
        %v1864 = vadd.f32 %v1817, %v1862
        %v1865 = vmax.f32 %v1864, 0.0
        %v1866 = vpack.c.bf16 %v1865, %v1865
        %v1869 = vunpack.c.l.s4 1966171168
        %v1870 = vunpack.c.0.s8 %v1869
        %v1871 = vlaneseq
        %v1872 = vshrl.u32 %v1871, 7
        %v1873 = vsub.s32 %v1870, %v1872
        %v1874 = vrot.slane %v1866, %v1873
        %v1876 = vunpack.c.l.s4 1966171168
        %v1877 = vunpack.c.0.s8 %v1876
        %v1878 = vlaneseq
        %v1879 = vshrl.u32 %v1878, 7
        %v1880 = vsub.s32 %v1877, %v1879
        %v1881 = vrot.slane %v1874, %v1880
        %v1882 = vcombine.high %v1881, %v1881
        %v1884 = vld [vmem:[#allocation4 + $0x7] sm:$0x1]
        %v1885 = vsel %vm1492, %v1882, %v1884
        %1886 = vst [vmem:[#allocation4 + $0x7] sm:$0x1] %v1885
        %v1887 = vld [vmem:[%s4] sm:$0x1]
        %v1889 = vlaneseq
        %v1890 = vshrl.u32 %v1889, 7
        %v1891 = vsub.s32 0, %v1890
        %v1892 = vrot.slane %v1887, %v1891
        %v1894 = vadd.f32 %v1817, %v1892
        %v1895 = vmax.f32 %v1894, 0.0
        %v1896 = vpack.c.bf16 %v1895, %v1895
        %v1899 = vunpack.c.l.s4 1966171168
        %v1900 = vunpack.c.0.s8 %v1899
        %v1901 = vlaneseq
        %v1902 = vshrl.u32 %v1901, 7
        %v1903 = vsub.s32 %v1900, %v1902
        %v1904 = vrot.slane %v1896, %v1903
        %v1905 = vcombine.high %v1904, %v1904
        %v1907 = vunpack.c.l.s4 1966171168
        %v1908 = vunpack.c.0.s8 %v1907
        %v1909 = vlaneseq
        %v1910 = vshrl.u32 %v1909, 7
        %v1911 = vsub.s32 %v1908, %v1910
        %v1912 = vrot.slane %v1905, %v1911
        %v1913 = vcombine.high %v1912, %v1912
        %1914 = vrot.lane.b32.xlu0 %v1913, 64
        %v1915 = vpop.permute.xlu0 %1914
        %v1917 = vld [vmem:[#allocation4 + $0x7] sm:$0x1]
        %v1918 = vsel %vm1526, %v1915, %v1917
        %1919 = vst [vmem:[#allocation4 + $0x7] sm:$0x1] %v1918
        %v1920 = vld [vmem:[#allocation4] sm:$0xff]
        %v1921 = vld [vmem:[%s5] sm:$0xf]
        %v1922 = vld [vmem:[%s5 + $0x4] sm:$0xf]
        %v1923 = vld [vmem:[%s5 + $0x8] sm:$0xf]
        %v1924 = vld [vmem:[%s5 + $0xc] sm:$0xf]
        %v1925 = vld [vmem:[%s5 + $0x10] sm:$0xf]
        %v1926 = vld [vmem:[%s5 + $0x14] sm:$0xf]
        %v1927 = vld [vmem:[%s5 + $0x18] sm:$0xf]
        %v1928 = vld [vmem:[%s5 + $0x1c] sm:$0xf]
        %v1929 = vld [vmem:[%s5 + $0x20] sm:$0xf]
        %v1930 = vld [vmem:[%s5 + $0x24] sm:$0xf]
        %v1931 = vld [vmem:[%s5 + $0x28] sm:$0xf]
        %v1932 = vld [vmem:[%s5 + $0x2c] sm:$0xf]
        %v1933 = vld [vmem:[%s5 + $0x30] sm:$0xf]
        %v1934 = vld [vmem:[%s5 + $0x34] sm:$0xf]
        %v1935 = vld [vmem:[%s5 + $0x38] sm:$0xf]
        %v1936 = vld [vmem:[%s5 + $0x3c] sm:$0xf]
        %v1937 = vld [vmem:[%s5 + $0x40] sm:$0xf]
        %v1938 = vld [vmem:[%s5 + $0x44] sm:$0xf]
        %v1939 = vld [vmem:[%s5 + $0x48] sm:$0xf]
        %v1940 = vld [vmem:[%s5 + $0x4c] sm:$0xf]
        %v1941 = vld [vmem:[%s5 + $0x50] sm:$0xf]
        %v1942 = vld [vmem:[%s5 + $0x54] sm:$0xf]
        %v1943 = vld [vmem:[%s5 + $0x58] sm:$0xf]
        %v1944 = vld [vmem:[%s5 + $0x5c] sm:$0xf]
        %v1945 = vld [vmem:[%s5 + $0x60] sm:$0xf]
        %v1946 = vld [vmem:[%s5 + $0x64] sm:$0xf]
        %v1947 = vld [vmem:[%s5 + $0x68] sm:$0xf]
        %v1948 = vld [vmem:[%s5 + $0x6c] sm:$0xf]
        %v1949 = vld [vmem:[%s5 + $0x70] sm:$0xf]
        %v1950 = vld [vmem:[%s5 + $0x74] sm:$0xf]
        %v1951 = vld [vmem:[%s5 + $0x78] sm:$0xf]
        %v1952 = vld [vmem:[%s5 + $0x7c] sm:$0xf]
        %v1953 = vld [vmem:[%s5 + $0x80] sm:$0xf]
        %v1954 = vld [vmem:[%s5 + $0x84] sm:$0xf]
        %v1955 = vld [vmem:[%s5 + $0x88] sm:$0xf]
        %v1956 = vld [vmem:[%s5 + $0x8c] sm:$0xf]
        %v1957 = vld [vmem:[%s5 + $0x90] sm:$0xf]
        %v1958 = vld [vmem:[%s5 + $0x94] sm:$0xf]
        %v1959 = vld [vmem:[%s5 + $0x98] sm:$0xf]
        %v1960 = vld [vmem:[%s5 + $0x9c] sm:$0xf]
        %v1961 = vld [vmem:[%s5 + $0xa0] sm:$0xf]
        %v1962 = vld [vmem:[%s5 + $0xa4] sm:$0xf]
        %v1963 = vld [vmem:[%s5 + $0xa8] sm:$0xf]
        %v1964 = vld [vmem:[%s5 + $0xac] sm:$0xf]
        %v1965 = vld [vmem:[%s5 + $0xb0] sm:$0xf]
        %v1966 = vld [vmem:[%s5 + $0xb4] sm:$0xf]
        %v1967 = vld [vmem:[%s5 + $0xb8] sm:$0xf]
        %v1968 = vld [vmem:[%s5 + $0xbc] sm:$0xf]
        %v1969 = vld [vmem:[%s5 + $0xc0] sm:$0xf]
        %v1970 = vld [vmem:[%s5 + $0xc4] sm:$0xf]
        %v1971 = vld [vmem:[%s5 + $0xc8] sm:$0xf]
        %v1972 = vld [vmem:[%s5 + $0xcc] sm:$0xf]
        %v1973 = vld [vmem:[%s5 + $0xd0] sm:$0xf]
        %v1974 = vld [vmem:[%s5 + $0xd4] sm:$0xf]
        %v1975 = vld [vmem:[%s5 + $0xd8] sm:$0xf]
        %v1976 = vld [vmem:[%s5 + $0xdc] sm:$0xf]
        %v1977 = vld [vmem:[%s5 + $0xe0] sm:$0xf]
        %v1978 = vld [vmem:[%s5 + $0xe4] sm:$0xf]
        %v1979 = vld [vmem:[%s5 + $0xe8] sm:$0xf]
        %v1980 = vld [vmem:[%s5 + $0xec] sm:$0xf]
        %v1981 = vld [vmem:[%s5 + $0xf0] sm:$0xf]
        %v1982 = vld [vmem:[%s5 + $0xf4] sm:$0xf]
        %v1983 = vld [vmem:[%s5 + $0xf8] sm:$0xf]
        %v1984 = vld [vmem:[%s5 + $0xfc] sm:$0xf]
        %v1985 = vld [vmem:[%s5 + $0x100] sm:$0xf]
        %v1986 = vld [vmem:[%s5 + $0x104] sm:$0xf]
        %v1987 = vld [vmem:[%s5 + $0x108] sm:$0xf]
        %v1988 = vld [vmem:[%s5 + $0x10c] sm:$0xf]
        %v1989 = vld [vmem:[%s5 + $0x110] sm:$0xf]
        %v1990 = vld [vmem:[%s5 + $0x114] sm:$0xf]
        %v1991 = vld [vmem:[%s5 + $0x118] sm:$0xf]
        %v1992 = vld [vmem:[%s5 + $0x11c] sm:$0xf]
        %v1993 = vld [vmem:[%s5 + $0x120] sm:$0xf]
        %v1994 = vld [vmem:[%s5 + $0x124] sm:$0xf]
        %v1995 = vld [vmem:[%s5 + $0x128] sm:$0xf]
        %v1996 = vld [vmem:[%s5 + $0x12c] sm:$0xf]
        %v1997 = vld [vmem:[%s5 + $0x130] sm:$0xf]
        %v1998 = vld [vmem:[%s5 + $0x134] sm:$0xf]
        %v1999 = vld [vmem:[%s5 + $0x138] sm:$0xf]
        %v2000 = vld [vmem:[%s5 + $0x13c] sm:$0xf]
        %v2001 = vld [vmem:[%s5 + $0x140] sm:$0xf]
        %v2002 = vld [vmem:[%s5 + $0x144] sm:$0xf]
        %v2003 = vld [vmem:[%s5 + $0x148] sm:$0xf]
        %v2004 = vld [vmem:[%s5 + $0x14c] sm:$0xf]
        %v2005 = vld [vmem:[%s5 + $0x150] sm:$0xf]
        %v2006 = vld [vmem:[%s5 + $0x154] sm:$0xf]
        %v2007 = vld [vmem:[%s5 + $0x158] sm:$0xf]
        %v2008 = vld [vmem:[%s5 + $0x15c] sm:$0xf]
        %v2009 = vld [vmem:[%s5 + $0x160] sm:$0xf]
        %v2010 = vld [vmem:[%s5 + $0x164] sm:$0xf]
        %v2011 = vld [vmem:[%s5 + $0x168] sm:$0xf]
        %v2012 = vld [vmem:[%s5 + $0x16c] sm:$0xf]
        %v2013 = vld [vmem:[%s5 + $0x170] sm:$0xf]
        %v2014 = vld [vmem:[%s5 + $0x174] sm:$0xf]
        %v2015 = vld [vmem:[%s5 + $0x178] sm:$0xf]
        %v2016 = vld [vmem:[%s5 + $0x17c] sm:$0xf]
        %v2017 = vld [vmem:[%s5 + $0x180] sm:$0xf]
        %v2018 = vld [vmem:[%s5 + $0x184] sm:$0xf]
        %v2019 = vld [vmem:[%s5 + $0x188] sm:$0xf]
        %v2020 = vld [vmem:[%s5 + $0x18c] sm:$0xf]
        %v2021 = vld [vmem:[%s5 + $0x190] sm:$0xf]
        %v2022 = vld [vmem:[%s5 + $0x194] sm:$0xf]
        %v2023 = vld [vmem:[%s5 + $0x198] sm:$0xf]
        %v2024 = vld [vmem:[%s5 + $0x19c] sm:$0xf]
        %v2025 = vld [vmem:[%s5 + $0x1a0] sm:$0xf]
        %v2026 = vld [vmem:[%s5 + $0x1a4] sm:$0xf]
        %v2027 = vld [vmem:[%s5 + $0x1a8] sm:$0xf]
        %v2028 = vld [vmem:[%s5 + $0x1ac] sm:$0xf]
        %v2029 = vld [vmem:[%s5 + $0x1b0] sm:$0xf]
        %v2030 = vld [vmem:[%s5 + $0x1b4] sm:$0xf]
        %v2031 = vld [vmem:[%s5 + $0x1b8] sm:$0xf]
        %v2032 = vld [vmem:[%s5 + $0x1bc] sm:$0xf]
        %v2033 = vld [vmem:[%s5 + $0x1c0] sm:$0xf]
        %v2034 = vld [vmem:[%s5 + $0x1c4] sm:$0xf]
        %v2035 = vld [vmem:[%s5 + $0x1c8] sm:$0xf]
        %v2036 = vld [vmem:[%s5 + $0x1cc] sm:$0xf]
        %v2037 = vld [vmem:[%s5 + $0x1d0] sm:$0xf]
        %v2038 = vld [vmem:[%s5 + $0x1d4] sm:$0xf]
        %v2039 = vld [vmem:[%s5 + $0x1d8] sm:$0xf]
        %v2040 = vld [vmem:[%s5 + $0x1dc] sm:$0xf]
        %v2041 = vld [vmem:[%s5 + $0x1e0] sm:$0xf]
        %v2042 = vld [vmem:[%s5 + $0x1e4] sm:$0xf]
        %v2043 = vld [vmem:[%s5 + $0x1e8] sm:$0xf]
        %v2044 = vld [vmem:[%s5 + $0x1ec] sm:$0xf]
        %v2045 = vld [vmem:[%s5 + $0x1f0] sm:$0xf]
        %v2046 = vld [vmem:[%s5 + $0x1f4] sm:$0xf]
        %v2047 = vld [vmem:[%s5 + $0x1f8] sm:$0xf]
        %v2048 = vld [vmem:[%s5 + $0x1fc] sm:$0xf]
        %v2049 = vld [vmem:[%s6] sm:$0x1]
        %v2051 = vcombine.high %v1920, %v1920
        %v2053 = vunpack.c.l.s4 1966171168
        %v2054 = vunpack.c.0.s8 %v2053
        %v2055 = vlaneseq
        %v2056 = vshrl.u32 %v2055, 7
        %v2057 = vsub.s32 %v2054, %v2056
        %v2058 = vrot.slane %v1920, %v2057
        %v2060 = vunpack.c.l.s4 1966171168
        %v2061 = vunpack.c.0.s8 %v2060
        %v2062 = vlaneseq
        %v2063 = vshrl.u32 %v2062, 7
        %v2064 = vsub.s32 %v2061, %v2063
        %v2065 = vrot.slane %v2051, %v2064
        %v2066 = vcombine.high %v2058, %v2058
        %v2067 = vcombine.high %v2065, %v2065
        %v2069 = vunpack.c.l.s4 1966171168
        %v2070 = vunpack.c.0.s8 %v2069
        %v2071 = vlaneseq
        %v2072 = vshrl.u32 %v2071, 7
        %v2073 = vsub.s32 %v2070, %v2072
        %v2074 = vrot.slane %v2058, %v2073
        %v2076 = vunpack.c.l.s4 1966171168
        %v2077 = vunpack.c.0.s8 %v2076
        %v2078 = vlaneseq
        %v2079 = vshrl.u32 %v2078, 7
        %v2080 = vsub.s32 %v2077, %v2079
        %v2081 = vrot.slane %v2065, %v2080
        %v2083 = vunpack.c.l.s4 1966171168
        %v2084 = vunpack.c.0.s8 %v2083
        %v2085 = vlaneseq
        %v2086 = vshrl.u32 %v2085, 7
        %v2087 = vsub.s32 %v2084, %v2086
        %v2088 = vrot.slane %v2066, %v2087
        %v2090 = vunpack.c.l.s4 1966171168
        %v2091 = vunpack.c.0.s8 %v2090
        %v2092 = vlaneseq
        %v2093 = vshrl.u32 %v2092, 7
        %v2094 = vsub.s32 %v2091, %v2093
        %v2095 = vrot.slane %v2067, %v2094
        %v2096 = vcombine.high %v2074, %v2074
        %v2097 = vcombine.high %v2081, %v2081
        %v2098 = vcombine.high %v2088, %v2088
        %v2099 = vcombine.high %v2095, %v2095
        %v2236 = vunpack.c.l.b16 %v1921
        %v2237 = vunpack.c.l.b16 %v1922
        %v2238 = vunpack.c.l.b16 %v1923
        %v2239 = vunpack.c.l.b16 %v1924
        %v2240 = vunpack.c.l.b16 %v1925
        %v2241 = vunpack.c.l.b16 %v1926
        %v2242 = vunpack.c.l.b16 %v1927
        %v2243 = vunpack.c.l.b16 %v1928
        %v2244 = vunpack.c.l.b16 %v1929
        %v2245 = vunpack.c.l.b16 %v1930
        %v2246 = vunpack.c.l.b16 %v1931
        %v2247 = vunpack.c.l.b16 %v1932
        %v2248 = vunpack.c.l.b16 %v1933
        %v2249 = vunpack.c.l.b16 %v1934
        %v2250 = vunpack.c.l.b16 %v1935
        %v2251 = vunpack.c.l.b16 %v1936
        %v2252 = vunpack.c.l.b16 %v1937
        %v2253 = vunpack.c.l.b16 %v1938
        %v2254 = vunpack.c.l.b16 %v1939
        %v2255 = vunpack.c.l.b16 %v1940
        %v2256 = vunpack.c.l.b16 %v1941
        %v2257 = vunpack.c.l.b16 %v1942
        %v2258 = vunpack.c.l.b16 %v1943
        %v2259 = vunpack.c.l.b16 %v1944
        %v2260 = vunpack.c.l.b16 %v1945
        %v2261 = vunpack.c.l.b16 %v1946
        %v2262 = vunpack.c.l.b16 %v1947
        %v2263 = vunpack.c.l.b16 %v1948
        %v2264 = vunpack.c.l.b16 %v1949
        %v2265 = vunpack.c.l.b16 %v1950
        %v2266 = vunpack.c.l.b16 %v1951
        %v2267 = vunpack.c.l.b16 %v1952
        %v2268 = vunpack.c.l.b16 %v1953
        %v2269 = vunpack.c.l.b16 %v1954
        %v2270 = vunpack.c.l.b16 %v1955
        %v2271 = vunpack.c.l.b16 %v1956
        %v2272 = vunpack.c.l.b16 %v1957
        %v2273 = vunpack.c.l.b16 %v1958
        %v2274 = vunpack.c.l.b16 %v1959
        %v2275 = vunpack.c.l.b16 %v1960
        %v2276 = vunpack.c.l.b16 %v1961
        %v2277 = vunpack.c.l.b16 %v1962
        %v2278 = vunpack.c.l.b16 %v1963
        %v2279 = vunpack.c.l.b16 %v1964
        %v2280 = vunpack.c.l.b16 %v1965
        %v2281 = vunpack.c.l.b16 %v1966
        %v2282 = vunpack.c.l.b16 %v1967
        %v2283 = vunpack.c.l.b16 %v1968
        %v2284 = vunpack.c.l.b16 %v1969
        %v2285 = vunpack.c.l.b16 %v1970
        %v2286 = vunpack.c.l.b16 %v1971
        %v2287 = vunpack.c.l.b16 %v1972
        %v2288 = vunpack.c.l.b16 %v1973
        %v2289 = vunpack.c.l.b16 %v1974
        %v2290 = vunpack.c.l.b16 %v1975
        %v2291 = vunpack.c.l.b16 %v1976
        %v2292 = vunpack.c.l.b16 %v1977
        %v2293 = vunpack.c.l.b16 %v1978
        %v2294 = vunpack.c.l.b16 %v1979
        %v2295 = vunpack.c.l.b16 %v1980
        %v2296 = vunpack.c.l.b16 %v1981
        %v2297 = vunpack.c.l.b16 %v1982
        %v2298 = vunpack.c.l.b16 %v1983
        %v2299 = vunpack.c.l.b16 %v1984
        %v2300 = vunpack.c.l.b16 %v1985
        %v2301 = vunpack.c.l.b16 %v1986
        %v2302 = vunpack.c.l.b16 %v1987
        %v2303 = vunpack.c.l.b16 %v1988
        %v2304 = vunpack.c.l.b16 %v1989
        %v2305 = vunpack.c.l.b16 %v1990
        %v2306 = vunpack.c.l.b16 %v1991
        %v2307 = vunpack.c.l.b16 %v1992
        %v2308 = vunpack.c.l.b16 %v1993
        %v2309 = vunpack.c.l.b16 %v1994
        %v2310 = vunpack.c.l.b16 %v1995
        %v2311 = vunpack.c.l.b16 %v1996
        %v2312 = vunpack.c.l.b16 %v1997
        %v2313 = vunpack.c.l.b16 %v1998
        %v2314 = vunpack.c.l.b16 %v1999
        %v2315 = vunpack.c.l.b16 %v2000
        %v2316 = vunpack.c.l.b16 %v2001
        %v2317 = vunpack.c.l.b16 %v2002
        %v2318 = vunpack.c.l.b16 %v2003
        %v2319 = vunpack.c.l.b16 %v2004
        %v2320 = vunpack.c.l.b16 %v2005
        %v2321 = vunpack.c.l.b16 %v2006
        %v2322 = vunpack.c.l.b16 %v2007
        %v2323 = vunpack.c.l.b16 %v2008
        %v2324 = vunpack.c.l.b16 %v2009
        %v2325 = vunpack.c.l.b16 %v2010
        %v2326 = vunpack.c.l.b16 %v2011
        %v2327 = vunpack.c.l.b16 %v2012
        %v2328 = vunpack.c.l.b16 %v2013
        %v2329 = vunpack.c.l.b16 %v2014
        %v2330 = vunpack.c.l.b16 %v2015
        %v2331 = vunpack.c.l.b16 %v2016
        %v2332 = vunpack.c.l.b16 %v2017
        %v2333 = vunpack.c.l.b16 %v2018
        %v2334 = vunpack.c.l.b16 %v2019
        %v2335 = vunpack.c.l.b16 %v2020
        %v2336 = vunpack.c.l.b16 %v2021
        %v2337 = vunpack.c.l.b16 %v2022
        %v2338 = vunpack.c.l.b16 %v2023
        %v2339 = vunpack.c.l.b16 %v2024
        %v2340 = vunpack.c.l.b16 %v2025
        %v2341 = vunpack.c.l.b16 %v2026
        %v2342 = vunpack.c.l.b16 %v2027
        %v2343 = vunpack.c.l.b16 %v2028
        %v2344 = vunpack.c.l.b16 %v2029
        %v2345 = vunpack.c.l.b16 %v2030
        %v2346 = vunpack.c.l.b16 %v2031
        %v2347 = vunpack.c.l.b16 %v2032
        %v2348 = vunpack.c.l.b16 %v2033
        %v2349 = vunpack.c.l.b16 %v2034
        %v2350 = vunpack.c.l.b16 %v2035
        %v2351 = vunpack.c.l.b16 %v2036
        %v2352 = vunpack.c.l.b16 %v2037
        %v2353 = vunpack.c.l.b16 %v2038
        %v2354 = vunpack.c.l.b16 %v2039
        %v2355 = vunpack.c.l.b16 %v2040
        %v2356 = vunpack.c.l.b16 %v2041
        %v2357 = vunpack.c.l.b16 %v2042
        %v2358 = vunpack.c.l.b16 %v2043
        %v2359 = vunpack.c.l.b16 %v2044
        %v2360 = vunpack.c.l.b16 %v2045
        %v2361 = vunpack.c.l.b16 %v2046
        %v2362 = vunpack.c.l.b16 %v2047
        %v2363 = vunpack.c.l.b16 %v2048
        %v2364 = vpack.c.b16 %v2237, %v2236
        %v2365 = vpack.c.b16 %v2239, %v2238
        %v2366 = vpack.c.b16 %v2241, %v2240
        %v2367 = vpack.c.b16 %v2243, %v2242
        %v2368 = vpack.c.b16 %v2245, %v2244
        %v2369 = vpack.c.b16 %v2247, %v2246
        %v2370 = vpack.c.b16 %v2249, %v2248
        %v2371 = vpack.c.b16 %v2251, %v2250
        %v2372 = vpack.c.b16 %v2253, %v2252
        %v2373 = vpack.c.b16 %v2255, %v2254
        %v2374 = vpack.c.b16 %v2257, %v2256
        %v2375 = vpack.c.b16 %v2259, %v2258
        %v2376 = vpack.c.b16 %v2261, %v2260
        %v2377 = vpack.c.b16 %v2263, %v2262
        %v2378 = vpack.c.b16 %v2265, %v2264
        %v2379 = vpack.c.b16 %v2267, %v2266
        %v2380 = vpack.c.b16 %v2269, %v2268
        %v2381 = vpack.c.b16 %v2271, %v2270
        %v2382 = vpack.c.b16 %v2273, %v2272
        %v2383 = vpack.c.b16 %v2275, %v2274
        %v2384 = vpack.c.b16 %v2277, %v2276
        %v2385 = vpack.c.b16 %v2279, %v2278
        %v2386 = vpack.c.b16 %v2281, %v2280
        %v2387 = vpack.c.b16 %v2283, %v2282
        %v2388 = vpack.c.b16 %v2285, %v2284
        %v2389 = vpack.c.b16 %v2287, %v2286
        %v2390 = vpack.c.b16 %v2289, %v2288
        %v2391 = vpack.c.b16 %v2291, %v2290
        %v2392 = vpack.c.b16 %v2293, %v2292
        %v2393 = vpack.c.b16 %v2295, %v2294
        %v2394 = vpack.c.b16 %v2297, %v2296
        %v2395 = vpack.c.b16 %v2299, %v2298
        %v2396 = vpack.c.b16 %v2301, %v2300
        %v2397 = vpack.c.b16 %v2303, %v2302
        %v2398 = vpack.c.b16 %v2305, %v2304
        %v2399 = vpack.c.b16 %v2307, %v2306
        %v2400 = vpack.c.b16 %v2309, %v2308
        %v2401 = vpack.c.b16 %v2311, %v2310
        %v2402 = vpack.c.b16 %v2313, %v2312
        %v2403 = vpack.c.b16 %v2315, %v2314
        %v2404 = vpack.c.b16 %v2317, %v2316
        %v2405 = vpack.c.b16 %v2319, %v2318
        %v2406 = vpack.c.b16 %v2321, %v2320
        %v2407 = vpack.c.b16 %v2323, %v2322
        %v2408 = vpack.c.b16 %v2325, %v2324
        %v2409 = vpack.c.b16 %v2327, %v2326
        %v2410 = vpack.c.b16 %v2329, %v2328
        %v2411 = vpack.c.b16 %v2331, %v2330
        %v2412 = vpack.c.b16 %v2333, %v2332
        %v2413 = vpack.c.b16 %v2335, %v2334
        %v2414 = vpack.c.b16 %v2337, %v2336
        %v2415 = vpack.c.b16 %v2339, %v2338
        %v2416 = vpack.c.b16 %v2341, %v2340
        %v2417 = vpack.c.b16 %v2343, %v2342
        %v2418 = vpack.c.b16 %v2345, %v2344
        %v2419 = vpack.c.b16 %v2347, %v2346
        %v2420 = vpack.c.b16 %v2349, %v2348
        %v2421 = vpack.c.b16 %v2351, %v2350
        %v2422 = vpack.c.b16 %v2353, %v2352
        %v2423 = vpack.c.b16 %v2355, %v2354
        %v2424 = vpack.c.b16 %v2357, %v2356
        %v2425 = vpack.c.b16 %v2359, %v2358
        %v2426 = vpack.c.b16 %v2361, %v2360
        %v2427 = vpack.c.b16 %v2363, %v2362
        %2492 = vmatprep.subr.bf16.mxu0 0
        %2493 = vmatpush1.bf16.msra.mxu0 %v2364
        %2494 = vmatprep.subr.bf16.mxu0 0
        %2495 = vmatpush1.bf16.msra.mxu0 %v2365
        %2496 = vmatprep.subr.bf16.mxu0 0
        %2497 = vmatpush1.bf16.msra.mxu0 %v2366
        %2498 = vmatprep.subr.bf16.mxu0 0
        %2499 = vmatpush1.bf16.msra.mxu0 %v2367
        %2500 = vmatprep.subr.bf16.mxu0 0
        %2501 = vmatpush1.bf16.msra.mxu0 %v2368
        %2502 = vmatprep.subr.bf16.mxu0 0
        %2503 = vmatpush1.bf16.msra.mxu0 %v2369
        %2504 = vmatprep.subr.bf16.mxu0 0
        %2505 = vmatpush1.bf16.msra.mxu0 %v2370
        %2506 = vmatprep.subr.bf16.mxu0 0
        %2507 = vmatpush1.bf16.msra.mxu0 %v2371
        %2508 = vmatprep.subr.bf16.mxu0 0
        %2509 = vmatpush1.bf16.msra.mxu0 %v2372
        %2510 = vmatprep.subr.bf16.mxu0 0
        %2511 = vmatpush1.bf16.msra.mxu0 %v2373
        %2512 = vmatprep.subr.bf16.mxu0 0
        %2513 = vmatpush1.bf16.msra.mxu0 %v2374
        %2514 = vmatprep.subr.bf16.mxu0 0
        %2515 = vmatpush1.bf16.msra.mxu0 %v2375
        %2516 = vmatprep.subr.bf16.mxu0 0
        %2517 = vmatpush1.bf16.msra.mxu0 %v2376
        %2518 = vmatprep.subr.bf16.mxu0 0
        %2519 = vmatpush1.bf16.msra.mxu0 %v2377
        %2520 = vmatprep.subr.bf16.mxu0 0
        %2521 = vmatpush1.bf16.msra.mxu0 %v2378
        %2522 = vmatprep.subr.bf16.mxu0 0
        %2523 = vmatpush1.bf16.msra.mxu0 %v2379
        %2524 = vmatprep.mubr.bf16.mxu0 %v2088
        %2525 = vmatmul.mubr.bf16.gmra.mrb[0].mxu0 %v2074
        %v2526 = vpop.f32.mrb[0].mxu0
        %v2527 = vadd.f32 %v2049, %v2526
        %v2528 = vpop.f32.mrb[0].mxu0
        %v2529 = vpop.f32.mrb[0].mxu0
        %v2530 = vpop.f32.mrb[0].mxu0
        %2531 = vdwg.mxu0
        %2532 = vmatprep.subr.bf16.mxu0 0
        %2533 = vmatpush1.bf16.msra.mxu0 %v2380
        %2534 = vmatprep.subr.bf16.mxu0 0
        %2535 = vmatpush1.bf16.msra.mxu0 %v2381
        %2536 = vmatprep.subr.bf16.mxu0 0
        %2537 = vmatpush1.bf16.msra.mxu0 %v2382
        %2538 = vmatprep.subr.bf16.mxu0 0
        %2539 = vmatpush1.bf16.msra.mxu0 %v2383
        %2540 = vmatprep.subr.bf16.mxu0 0
        %2541 = vmatpush1.bf16.msra.mxu0 %v2384
        %2542 = vmatprep.subr.bf16.mxu0 0
        %2543 = vmatpush1.bf16.msra.mxu0 %v2385
        %2544 = vmatprep.subr.bf16.mxu0 0
        %2545 = vmatpush1.bf16.msra.mxu0 %v2386
        %2546 = vmatprep.subr.bf16.mxu0 0
        %2547 = vmatpush1.bf16.msra.mxu0 %v2387
        %2548 = vmatprep.subr.bf16.mxu0 0
        %2549 = vmatpush1.bf16.msra.mxu0 %v2388
        %2550 = vmatprep.subr.bf16.mxu0 0
        %2551 = vmatpush1.bf16.msra.mxu0 %v2389
        %2552 = vmatprep.subr.bf16.mxu0 0
        %2553 = vmatpush1.bf16.msra.mxu0 %v2390
        %2554 = vmatprep.subr.bf16.mxu0 0
        %2555 = vmatpush1.bf16.msra.mxu0 %v2391
        %2556 = vmatprep.subr.bf16.mxu0 0
        %2557 = vmatpush1.bf16.msra.mxu0 %v2392
        %2558 = vmatprep.subr.bf16.mxu0 0
        %2559 = vmatpush1.bf16.msra.mxu0 %v2393
        %2560 = vmatprep.subr.bf16.mxu0 0
        %2561 = vmatpush1.bf16.msra.mxu0 %v2394
        %2562 = vmatprep.subr.bf16.mxu0 0
        %2563 = vmatpush1.bf16.msra.mxu0 %v2395
        %2564 = vmatprep.mubr.bf16.mxu0 %v2098
        %2565 = vmatmul.mubr.bf16.gmra.mrb[0].mxu0 %v2096
        %v2566 = vpop.f32.mrb[0].mxu0
        %v2567 = vadd.f32 %v2527, %v2566
        %v2568 = vpop.f32.mrb[0].mxu0
        %v2569 = vpop.f32.mrb[0].mxu0
        %v2570 = vpop.f32.mrb[0].mxu0
        %2571 = vdwg.mxu0
        %2572 = vmatprep.subr.bf16.mxu0 0
        %2573 = vmatpush1.bf16.msra.mxu0 %v2396
        %2574 = vmatprep.subr.bf16.mxu0 0
        %2575 = vmatpush1.bf16.msra.mxu0 %v2397
        %2576 = vmatprep.subr.bf16.mxu0 0
        %2577 = vmatpush1.bf16.msra.mxu0 %v2398
        %2578 = vmatprep.subr.bf16.mxu0 0
        %2579 = vmatpush1.bf16.msra.mxu0 %v2399
        %2580 = vmatprep.subr.bf16.mxu0 0
        %2581 = vmatpush1.bf16.msra.mxu0 %v2400
        %2582 = vmatprep.subr.bf16.mxu0 0
        %2583 = vmatpush1.bf16.msra.mxu0 %v2401
        %2584 = vmatprep.subr.bf16.mxu0 0
        %2585 = vmatpush1.bf16.msra.mxu0 %v2402
        %2586 = vmatprep.subr.bf16.mxu0 0
        %2587 = vmatpush1.bf16.msra.mxu0 %v2403
        %2588 = vmatprep.subr.bf16.mxu0 0
        %2589 = vmatpush1.bf16.msra.mxu0 %v2404
        %2590 = vmatprep.subr.bf16.mxu0 0
        %2591 = vmatpush1.bf16.msra.mxu0 %v2405
        %2592 = vmatprep.subr.bf16.mxu0 0
        %2593 = vmatpush1.bf16.msra.mxu0 %v2406
        %2594 = vmatprep.subr.bf16.mxu0 0
        %2595 = vmatpush1.bf16.msra.mxu0 %v2407
        %2596 = vmatprep.subr.bf16.mxu0 0
        %2597 = vmatpush1.bf16.msra.mxu0 %v2408
        %2598 = vmatprep.subr.bf16.mxu0 0
        %2599 = vmatpush1.bf16.msra.mxu0 %v2409
        %2600 = vmatprep.subr.bf16.mxu0 0
        %2601 = vmatpush1.bf16.msra.mxu0 %v2410
        %2602 = vmatprep.subr.bf16.mxu0 0
        %2603 = vmatpush1.bf16.msra.mxu0 %v2411
        %2604 = vmatprep.mubr.bf16.mxu0 %v2095
        %2605 = vmatmul.mubr.bf16.gmra.mrb[0].mxu0 %v2081
        %v2606 = vpop.f32.mrb[0].mxu0
        %v2607 = vadd.f32 %v2567, %v2606
        %v2608 = vpop.f32.mrb[0].mxu0
        %v2609 = vpop.f32.mrb[0].mxu0
        %v2610 = vpop.f32.mrb[0].mxu0
        %2611 = vdwg.mxu0
        %2612 = vmatprep.subr.bf16.mxu0 0
        %2613 = vmatpush1.bf16.msra.mxu0 %v2412
        %2614 = vmatprep.subr.bf16.mxu0 0
        %2615 = vmatpush1.bf16.msra.mxu0 %v2413
        %2616 = vmatprep.subr.bf16.mxu0 0
        %2617 = vmatpush1.bf16.msra.mxu0 %v2414
        %2618 = vmatprep.subr.bf16.mxu0 0
        %2619 = vmatpush1.bf16.msra.mxu0 %v2415
        %2620 = vmatprep.subr.bf16.mxu0 0
        %2621 = vmatpush1.bf16.msra.mxu0 %v2416
        %2622 = vmatprep.subr.bf16.mxu0 0
        %2623 = vmatpush1.bf16.msra.mxu0 %v2417
        %2624 = vmatprep.subr.bf16.mxu0 0
        %2625 = vmatpush1.bf16.msra.mxu0 %v2418
        %2626 = vmatprep.subr.bf16.mxu0 0
        %2627 = vmatpush1.bf16.msra.mxu0 %v2419
        %2628 = vmatprep.subr.bf16.mxu0 0
        %2629 = vmatpush1.bf16.msra.mxu0 %v2420
        %2630 = vmatprep.subr.bf16.mxu0 0
        %2631 = vmatpush1.bf16.msra.mxu0 %v2421
        %2632 = vmatprep.subr.bf16.mxu0 0
        %2633 = vmatpush1.bf16.msra.mxu0 %v2422
        %2634 = vmatprep.subr.bf16.mxu0 0
        %2635 = vmatpush1.bf16.msra.mxu0 %v2423
        %2636 = vmatprep.subr.bf16.mxu0 0
        %2637 = vmatpush1.bf16.msra.mxu0 %v2424
        %2638 = vmatprep.subr.bf16.mxu0 0
        %2639 = vmatpush1.bf16.msra.mxu0 %v2425
        %2640 = vmatprep.subr.bf16.mxu0 0
        %2641 = vmatpush1.bf16.msra.mxu0 %v2426
        %2642 = vmatprep.subr.bf16.mxu0 0
        %2643 = vmatpush1.bf16.msra.mxu0 %v2427
        %2644 = vmatprep.mubr.bf16.mxu0 %v2099
        %2645 = vmatmul.mubr.bf16.gmra.mrb[0].mxu0 %v2097
        %v2646 = vpop.f32.mrb[0].mxu0
        %v2647 = vadd.f32 %v2607, %v2646
        %v2648 = vpop.f32.mrb[0].mxu0
        %v2649 = vpop.f32.mrb[0].mxu0
        %v2650 = vpop.f32.mrb[0].mxu0
        %2651 = vdwg.mxu0
        %v2652 = vmax.f32 %v2647, 0.0
        %v2653 = vpack.c.bf16 %v2652, %v2652
        %v2654 = vld [vmem:[%s7] sm:$0xf]
        %v2655 = vld [vmem:[%s7 + $0x4] sm:$0xf]
        %v2656 = vld [vmem:[%s7 + $0x8] sm:$0xf]
        %v2657 = vld [vmem:[%s7 + $0xc] sm:$0xf]
        %v2658 = vld [vmem:[%s7 + $0x10] sm:$0xf]
        %v2659 = vld [vmem:[%s7 + $0x14] sm:$0xf]
        %v2660 = vld [vmem:[%s7 + $0x18] sm:$0xf]
        %v2661 = vld [vmem:[%s7 + $0x1c] sm:$0xf]
        %v2662 = vld [vmem:[%s7 + $0x20] sm:$0xf]
        %v2663 = vld [vmem:[%s7 + $0x24] sm:$0xf]
        %v2664 = vld [vmem:[%s7 + $0x28] sm:$0xf]
        %v2665 = vld [vmem:[%s7 + $0x2c] sm:$0xf]
        %v2666 = vld [vmem:[%s7 + $0x30] sm:$0xf]
        %v2667 = vld [vmem:[%s7 + $0x34] sm:$0xf]
        %v2668 = vld [vmem:[%s7 + $0x38] sm:$0xf]
        %v2669 = vld [vmem:[%s7 + $0x3c] sm:$0xf]
        %v2670 = vld [vmem:[%s8] sm:$0x1]
        %v2687 = vunpack.c.l.b16 %v2654
        %v2688 = vunpack.c.l.b16 %v2655
        %v2689 = vunpack.c.l.b16 %v2656
        %v2690 = vunpack.c.l.b16 %v2657
        %v2691 = vunpack.c.l.b16 %v2658
        %v2692 = vunpack.c.l.b16 %v2659
        %v2693 = vunpack.c.l.b16 %v2660
        %v2694 = vunpack.c.l.b16 %v2661
        %v2695 = vunpack.c.l.b16 %v2662
        %v2696 = vunpack.c.l.b16 %v2663
        %v2697 = vunpack.c.l.b16 %v2664
        %v2698 = vunpack.c.l.b16 %v2665
        %v2699 = vunpack.c.l.b16 %v2666
        %v2700 = vunpack.c.l.b16 %v2667
        %v2701 = vunpack.c.l.b16 %v2668
        %v2702 = vunpack.c.l.b16 %v2669
        %v2703 = vpack.c.b16 %v2688, %v2687
        %v2704 = vpack.c.b16 %v2690, %v2689
        %v2705 = vpack.c.b16 %v2692, %v2691
        %v2706 = vpack.c.b16 %v2694, %v2693
        %v2707 = vpack.c.b16 %v2696, %v2695
        %v2708 = vpack.c.b16 %v2698, %v2697
        %v2709 = vpack.c.b16 %v2700, %v2699
        %v2710 = vpack.c.b16 %v2702, %v2701
        %2719 = vmatprep.subr.bf16.mxu0 0
        %2720 = vmatpush1.bf16.msra.mxu0 %v2703
        %2721 = vmatprep.subr.bf16.mxu0 0
        %2722 = vmatpush1.bf16.msra.mxu0 %v2704
        %2723 = vmatprep.subr.bf16.mxu0 0
        %2724 = vmatpush1.bf16.msra.mxu0 %v2705
        %2725 = vmatprep.subr.bf16.mxu0 0
        %2726 = vmatpush1.bf16.msra.mxu0 %v2706
        %2727 = vmatprep.subr.bf16.mxu0 0
        %2728 = vmatpush1.bf16.msra.mxu0 %v2707
        %2729 = vmatprep.subr.bf16.mxu0 0
        %2730 = vmatpush1.bf16.msra.mxu0 %v2708
        %2731 = vmatprep.subr.bf16.mxu0 0
        %2732 = vmatpush1.bf16.msra.mxu0 %v2709
        %2733 = vmatprep.subr.bf16.mxu0 0
        %2734 = vmatpush1.bf16.msra.mxu0 %v2710
        %2735 = vmatprep.subr.bf16.mxu0 0
        %2736 = vmatpush1.bf16.msra.mxu0 0
        %2737 = vmatprep.subr.bf16.mxu0 0
        %2738 = vmatpush1.bf16.msra.mxu0 0
        %2739 = vmatprep.subr.bf16.mxu0 0
        %2740 = vmatpush1.bf16.msra.mxu0 0
        %2741 = vmatprep.subr.bf16.mxu0 0
        %2742 = vmatpush1.bf16.msra.mxu0 0
        %2743 = vmatprep.subr.bf16.mxu0 0
        %2744 = vmatpush1.bf16.msra.mxu0 0
        %2745 = vmatprep.subr.bf16.mxu0 0
        %2746 = vmatpush1.bf16.msra.mxu0 0
        %2747 = vmatprep.subr.bf16.mxu0 0
        %2748 = vmatpush1.bf16.msra.mxu0 0
        %2749 = vmatprep.subr.bf16.mxu0 0
        %2750 = vmatpush1.bf16.msra.mxu0 0
        %2751 = vmatprep.mubr.bf16.mxu0 0
        %2752 = vmatmul.mubr.bf16.gmra.mrb[0].mxu0 %v2653
        %v2753 = vpop.f32.mrb[0].mxu0
        %v2754 = vadd.f32 %v2670, %v2753
        %v2755 = vpop.f32.mrb[0].mxu0
        %v2756 = vpop.f32.mrb[0].mxu0
        %v2757 = vpop.f32.mrb[0].mxu0
        %2758 = vdwg.mxu0
        %2759 = vst [vmem:[%s324] sm:$0x1] %v2754
        %s2760 = sand.u32 %s225, 1
        %s2761 = scalar_lea.sflag [#allocation6], %s2760
        %s2762 = sand.u32 %s225, 1
        %s2763 = scalar_lea.vmem [#allocation5], %s2762
        // Predicated region
        $region57: #{basic_cnn_forward.1} parent=55 // pred_check
          %p2764 = pneg %p235
        $region58: #{basic_cnn_forward.1} parent=55 // pred_check_branch
          %2766 = sbr.rel (%p2764) target = $region60
        $region59: #{basic_cnn_forward.1} parent=55 // pred_region
          %s2768 = ssub.s32 16, 16
          %2769 = vsyncadd %s2761, %s2768
          %s2770 = smul.addr %s23, 16
          %s2771 = scalar_lea.hbm %s9, %s2770
          %s2773 = sshll.u32 %s2763, 4
          %s2774 = int_to_ptr.vmem [resolvable:$true] %s2773
          %2776 = dma.vmem_to_hbm [thread:$0]  %s2774, 16, %s2771, %s2761
        $region60: #{basic_cnn_forward.1} parent=55 // pred_fallthru
          _
      $region56: #{basic_cnn_forward.1} parent=5 // pred_fallthru
        _
      %p2777 = scmp.le.s32.totalorder 2, %s18
      // Predicated region
      $region61: #{basic_cnn_forward.1} parent=5 // pred_check
        %p2778 = pneg %p2777
      $region62: #{basic_cnn_forward.1} parent=5 // pred_check_branch
        %2780 = sbr.rel (%p2778) target = $region64
      $region63: #{basic_cnn_forward.1} parent=5 // pred_region
        %s2781 = ssub.s32 %s18, 2
        // Predicated region
        $region65: #{basic_cnn_forward.1} parent=63 // pred_check
          %p2782 = pneg %p241
        $region66: #{basic_cnn_forward.1} parent=63 // pred_check_branch
          %2784 = sbr.rel (%p2782) target = $region68
        $region67: #{basic_cnn_forward.1} parent=63 // pred_region
          %s2785 = sand.u32 %s226, 1
          %s2786 = scalar_lea.sflag [#allocation6], %s2785
          %s2787 = sand.u32 %s226, 1
          %s2788 = scalar_lea.vmem [#allocation5], %s2787
          %2789 = dma.done %s2786, 16
        $region68: #{basic_cnn_forward.1} parent=63 // pred_fallthru
          _
      $region64: #{basic_cnn_forward.1} parent=5 // pred_fallthru
        _
    $region6: #{basic_cnn_forward.1} parent=1 // loop_footer
      %s22 = sadd.s32 1, %s18
    $region7: #{basic_cnn_forward.1} parent=1 // loop_footer_branch
      %17 = sbr.rel target = $region3
    $region8: #{basic_cnn_forward.1} parent=1 // loop_exit
      _
    %2790 = vsyncpa [#allocation6], 1
    %s2791 = scalar_lea.sflag [#allocation6], 1
    %2792 = vsyncpa %s2791, 1

</llo_original>
